<compile_context>
chip_gen: v7x
topology: tpu7x:2x2x1
jax: 0.10.0
libtpu: 0.0.40
codegen_flags: <defaults>
</compile_context>

<pallas_src>
import functools

import jax
import jax.numpy as jnp
from jax.experimental import pallas as pl
from jax.experimental.pallas import tpu as pltpu

_LANES = 128


def _resblock_kernel(xpad_ref, res_ref, w1_ref, b1_ref, w2_ref, b2_ref, o_ref,
                     mid_ref, *, W, Cp, d, Th, S):
    """One (batch, row-strip) grid step of the fused ResBlock."""
    s = pl.program_id(1)
    rows1 = Th + 2 * d            # conv1 output rows needed by this strip (+ halo)
    Wp = W + 2 * d

    # ---------------- conv1: 3 matmuls, K = 3*Cp, value accumulation --------
    # conv1 output global row g = s*Th - d + r, r in [0, rows1); tap (ky, kx)
    # reads xpad[s*Th + r + ky*d, w + kx*d, :]  (xpad has 2d row / d col pad).
    row0 = pl.multiple_of(s * Th, Th)
    acc = None
    for ky in range(3):
        band = xpad_ref[0, pl.ds(row0 + ky * d, rows1), :, :]        # (rows1, Wp, Cp)
        lhs = jnp.concatenate(
            [band[:, kx * d:kx * d + W, :] for kx in range(3)], axis=-1)
        lhs = lhs.reshape(rows1 * W, 3 * Cp)
        contrib = jnp.dot(lhs, w1_ref[ky], preferred_element_type=jnp.float32)
        acc = contrib if acc is None else acc + contrib
    y1 = jnp.maximum(acc + b1_ref[...], 0.0).reshape(rows1, W, Cp)

    # Stage conv1 output (padded width) for conv2.  Halo columns are zeroed
    # every step (cheap) so the scratch is fully rewritten -> safe when the
    # strip axis is sharded across TensorCores.
    mid_ref[:, 0:d, :] = jnp.zeros((rows1, d, Cp), mid_ref.dtype)
    mid_ref[:, d + W:Wp, :] = jnp.zeros((rows1, d, Cp), mid_ref.dtype)
    mid_ref[:, d:d + W, :] = y1.astype(mid_ref.dtype)

    # conv1-output halo rows that fall outside the image are conv2's zero
    # padding -> only the two boundary strips need masking.
    @pl.when(s == 0)
    def _zero_top():
        mid_ref[0:d, :, :] = jnp.zeros((d, Wp, Cp), mid_ref.dtype)

    @pl.when(s == S - 1)
    def _zero_bottom():
        mid_ref[rows1 - d:rows1, :, :] = jnp.zeros((d, Wp, Cp), mid_ref.dtype)

    # ---------------- conv2: 3 matmuls, K = 3*Cp, value accumulation --------
    acc = None
    for ky in range(3):
        band = mid_ref[ky * d:ky * d + Th, :, :]                      # (Th, Wp, Cp)
        lhs = jnp.concatenate(
            [band[:, kx * d:kx * d + W, :] for kx in range(3)], axis=-1)
        lhs = lhs.reshape(Th * W, 3 * Cp)
        contrib = jnp.dot(lhs, w2_ref[ky], preferred_element_type=jnp.float32)
        acc = contrib if acc is None else acc + contrib
    y2 = jnp.maximum(acc + b2_ref[...], 0.0).reshape(Th, W, Cp)

    # Residual add straight from the per-strip f32 input block.
    o_ref[0] = (y2 + res_ref[0]).astype(o_ref.dtype)


def _largest_divisor_at_most(n, target):
    t = max(1, min(int(target), int(n)))
    while n % t:
        t -= 1
    return t


def resblock_pallas(x_nchw, params, dilation=1, *, row_tile=32,
                    compute_dtype=jnp.bfloat16, out_dtype=jnp.float32,
                    eps=1e-5):
    """ResBlock forward.  x_nchw: (B, C, H, W) float32 -> (B, C, H, W)."""
    w1, g1, be1, m1, v1, w2, g2, be2, m2, v2 = params

    # Fold BatchNorm (inference) into the convs: y = conv(x)*s + (beta - s*m).
    s1 = g1 * jax.lax.rsqrt(v1 + eps)
    s2 = g2 * jax.lax.rsqrt(v2 + eps)
    w1f = (w1 * s1[None, None, None, :]).astype(jnp.float32)   # HWIO
    w2f = (w2 * s2[None, None, None, :]).astype(jnp.float32)
    b1f = (be1 - s1 * m1).astype(jnp.float32)
    b2f = (be2 - s2 * m2).astype(jnp.float32)

    x = jnp.transpose(x_nchw, (0, 2, 3, 1)).astype(jnp.float32)  # NCHW -> NHWC
    B, H, W, C = x.shape
    d = int(dilation)

    # Lane-dense channels: pad C up to a multiple of 128.  Zero channels stay
    # zero through conv/BN/ReLU/residual and are sliced off at the end.
    Cp = ((C + _LANES - 1) // _LANES) * _LANES
    if Cp != C:
        pc = Cp - C
        x = jnp.pad(x, ((0, 0), (0, 0), (0, 0), (0, pc)))
        w1f = jnp.pad(w1f, ((0, 0), (0, 0), (0, pc), (0, pc)))
        w2f = jnp.pad(w2f, ((0, 0), (0, 0), (0, pc), (0, pc)))
        b1f = jnp.pad(b1f, (0, pc))
        b2f = jnp.pad(b2f, (0, pc))

    # Spatial pre-pad (2d rows, d cols) + compute-dtype cast done by XLA.
    xpad = jnp.pad(x, ((0, 0), (2 * d, 2 * d), (d, d), (0, 0))).astype(compute_dtype)

    # kx taps concatenated along the contraction dim: (3, 3*Cp, Cp).
    w1c = w1f.reshape(3, 3 * Cp, Cp).astype(compute_dtype)
    w2c = w2f.reshape(3, 3 * Cp, Cp).astype(compute_dtype)
    b1r = b1f[None, :]
    b2r = b2f[None, :]

    Th = _largest_divisor_at_most(H, row_tile)
    S = H // Th
    rows1 = Th + 2 * d
    Wp = W + 2 * d

    kernel = functools.partial(_resblock_kernel, W=W, Cp=Cp, d=d, Th=Th, S=S)

    # ---- VMEM budget (double-buffered inputs/outputs + scratch + temps) ----
    ci = jnp.dtype(compute_dtype).itemsize
    oi = jnp.dtype(out_dtype).itemsize
    buf = 0
    buf += 2 * (H + 4 * d) * Wp * Cp * ci                 # resident padded image
    buf += 2 * Th * W * Cp * 4                            # f32 residual strip
    buf += 2 * 2 * 9 * Cp * Cp * ci                       # BN-folded weights
    buf += 2 * 2 * Cp * 4                                 # biases
    buf += 2 * Th * W * Cp * oi                           # output strip
    buf += rows1 * Wp * Cp * ci                           # mid scratch
    buf += rows1 * W * 3 * Cp * ci + 2 * rows1 * W * Cp * 4   # kernel temporaries
    try:
        cap = int(pltpu.get_tpu_info().vmem_capacity_bytes)
    except Exception:
        cap = 64 * 1024 * 1024
    budget = (cap * 3) // 4
    vmem_limit = int(max(16 * 1024 * 1024, min(budget, 2 * buf + (8 << 20))))

    flops = 2 * 2 * 9 * B * H * W * Cp * Cp
    bytes_accessed = int(xpad.size * ci + x.size * 4
                         + (w1c.size + w2c.size) * ci + B * H * W * Cp * oi)

    out = pl.pallas_call(
        kernel,
        out_shape=jax.ShapeDtypeStruct((B, H, W, Cp), out_dtype),
        grid=(B, S),
        in_specs=[
            pl.BlockSpec((1, H + 4 * d, Wp, Cp), lambda b, s: (b, 0, 0, 0)),  # padded image
            pl.BlockSpec((1, Th, W, Cp), lambda b, s: (b, s, 0, 0)),          # f32 residual strip
            pl.BlockSpec((3, 3 * Cp, Cp), lambda b, s: (0, 0, 0)),            # w1 (BN-folded, kx-concat)
            pl.BlockSpec((1, Cp), lambda b, s: (0, 0)),                       # b1
            pl.BlockSpec((3, 3 * Cp, Cp), lambda b, s: (0, 0, 0)),            # w2
            pl.BlockSpec((1, Cp), lambda b, s: (0, 0)),                       # b2
        ],
        out_specs=pl.BlockSpec((1, Th, W, Cp), lambda b, s: (b, s, 0, 0)),
        scratch_shapes=[
            pltpu.VMEM((rows1, Wp, Cp), compute_dtype),   # padded conv1-output strip
        ],
        compiler_params=pltpu.CompilerParams(
            dimension_semantics=("parallel", "parallel"),
            vmem_limit_bytes=vmem_limit),
        cost_estimate=pl.CostEstimate(flops=flops, transcendentals=0,
                                      bytes_accessed=bytes_accessed),
    )(xpad, x, w1c, b1r, w2c, b2r)

    out = out[..., :C]
    return jnp.transpose(out, (0, 3, 1, 2)).astype(x_nchw.dtype)


def resblock_ref(x_nchw, params, dilation=1, eps=1e-5):
    """Plain-JAX reference (conv + BN(inference) + ReLU, twice, + residual)."""
    w1, g1, be1, m1, v1, w2, g2, be2, m2, v2 = params
    x = jnp.transpose(x_nchw, (0, 2, 3, 1)).astype(jnp.float32)

    def block(z, w, g, be, m, v):
        y = jax.lax.conv_general_dilated(
            z, w, window_strides=(1, 1),
            padding=[(dilation, dilation), (dilation, dilation)],
            rhs_dilation=(dilation, dilation),
            dimension_numbers=("NHWC", "HWIO", "NHWC"),
            precision=jax.lax.Precision.HIGHEST)
        y = (y - m) / jnp.sqrt(v + eps) * g + be
        return jnp.maximum(y, 0.0)

    y = block(x, w1, g1, be1, m1, v1)
    y = block(y, w2, g2, be2, m2, v2)
    return jnp.transpose(y + x, (0, 3, 1, 2))


def make_params(key, c0):
    """Deterministic synthetic parameters for conv3x3 x2 + BN x2."""
    ks = jax.random.split(key, 10)
    w1 = jax.random.normal(ks[0], (3, 3, c0, c0), jnp.float32) * 0.1   # HWIO
    w2 = jax.random.normal(ks[1], (3, 3, c0, c0), jnp.float32) * 0.1
    g1 = 0.5 + jax.random.uniform(ks[2], (c0,), jnp.float32)
    g2 = 0.5 + jax.random.uniform(ks[3], (c0,), jnp.float32)
    be1 = jax.random.normal(ks[4], (c0,), jnp.float32) * 0.1
    be2 = jax.random.normal(ks[5], (c0,), jnp.float32) * 0.1
    m1 = jax.random.normal(ks[6], (c0,), jnp.float32) * 0.1
    m2 = jax.random.normal(ks[7], (c0,), jnp.float32) * 0.1
    v1 = 0.5 + jax.random.uniform(ks[8], (c0,), jnp.float32)
    v2 = 0.5 + jax.random.uniform(ks[9], (c0,), jnp.float32)
    return (w1, g1, be1, m1, v1, w2, g2, be2, m2, v2)


if __name__ == "__main__":
    key = jax.random.PRNGKey(0)
    kx, kp = jax.random.split(key)

    B, C, H, W = 2, 8, 16, 16
    x = jax.random.normal(kx, (B, C, H, W), jnp.float32)   # NCHW, like PyTorch
    params = make_params(kp, C)

    ok = True
    for dil in (1, 2):
        ref = jax.block_until_ready(resblock_ref(x, params, dilation=dil))
        scale = max(float(jnp.max(jnp.abs(ref))), 1.0)
        # row_tile=8 exercises multi-strip halos; row_tile=16 -> single strip.
        for cdt, rt, tol in ((jnp.float32, 8, 1e-3), (jnp.bfloat16, 16, 5e-2)):
            out = resblock_pallas(x, params, dilation=dil, row_tile=rt,
                                  compute_dtype=cdt)
            out = jax.block_until_ready(out)
            err = float(jnp.max(jnp.abs(out - ref)))
            if not (err <= tol * scale):
                ok = False
                print(f"MISMATCH dilation={dil} compute={jnp.dtype(cdt).name} "
                      f"row_tile={rt}: max abs err={err:.3e} (scale={scale:.3e})")

    if ok:
        print("KERNEL_OK")
</pallas_src>

<mosaic_0001>
module attributes {stable_mosaic.version = 11 : i64} {
  func.func @_resblock_kernel(%arg0: i32, %arg1: i32, %arg2: memref<1x20x18x128xf32, #tpu.memory_space<vmem>>, %arg3: memref<1x8x16x128xf32, #tpu.memory_space<vmem>>, %arg4: memref<3x384x128xf32, #tpu.memory_space<vmem>>, %arg5: memref<1x128xf32, #tpu.memory_space<vmem>>, %arg6: memref<3x384x128xf32, #tpu.memory_space<vmem>>, %arg7: memref<1x128xf32, #tpu.memory_space<vmem>>, %arg8: memref<1x8x16x128xf32, #tpu.memory_space<vmem>>, %arg9: memref<10x18x128xf32, #tpu.memory_space<vmem>>) attributes {dimension_semantics = [#tpu.dimension_semantics<parallel>, #tpu.dimension_semantics<parallel>], iteration_bounds = array<i64: 2, 2>, scalar_prefetch = 0 : i64, scratch_operands = 1 : i64, tpu.core_type = #tpu.core_type<tc>, window_params = [{transform_indices = @transform_0, window_bounds = array<i64: 1, 20, 18, 128>}, {transform_indices = @transform_1, window_bounds = array<i64: 1, 8, 16, 128>}, {pipeline_mode = #tpu.pipeline_mode<synchronous>, transform_indices = @transform_2, window_bounds = array<i64: 3, 384, 128>}, {pipeline_mode = #tpu.pipeline_mode<synchronous>, transform_indices = @transform_3, window_bounds = array<i64: 1, 128>}, {pipeline_mode = #tpu.pipeline_mode<synchronous>, transform_indices = @transform_4, window_bounds = array<i64: 3, 384, 128>}, {pipeline_mode = #tpu.pipeline_mode<synchronous>, transform_indices = @transform_5, window_bounds = array<i64: 1, 128>}, {transform_indices = @transform_6, window_bounds = array<i64: 1, 8, 16, 128>}]} {
    %c8_i32 = arith.constant 8 : i32
    %0 = arith.muli %arg1, %c8_i32 : i32
    %1 = tpu.assume_multiple %0, 8 : i32
    %c0_i32 = arith.constant 0 : i32
    %2 = arith.addi %1, %c0_i32 : i32
    %c0 = arith.constant 0 : index
    %3 = arith.index_cast %2 : i32 to index
    %c0_0 = arith.constant 0 : index
    %c0_1 = arith.constant 0 : index
    %4 = vector.load %arg2[%c0, %3, %c0_0, %c0_1] : memref<1x20x18x128xf32, #tpu.memory_space<vmem>>, vector<1x10x18x128xf32>
    %5 = vector.shape_cast %4 : vector<1x10x18x128xf32> to vector<10x18x128xf32>
    %6 = vector.extract_strided_slice %5 {offsets = [0, 0, 0], sizes = [10, 16, 128], strides = [1, 1, 1]} : vector<10x18x128xf32> to vector<10x16x128xf32>
    %7 = vector.extract_strided_slice %5 {offsets = [0, 1, 0], sizes = [10, 16, 128], strides = [1, 1, 1]} : vector<10x18x128xf32> to vector<10x16x128xf32>
    %8 = vector.extract_strided_slice %5 {offsets = [0, 2, 0], sizes = [10, 16, 128], strides = [1, 1, 1]} : vector<10x18x128xf32> to vector<10x16x128xf32>
    %9 = tpu.concatenate %6, %7, %8 in 2 : vector<10x16x128xf32>, vector<10x16x128xf32>, vector<10x16x128xf32> -> vector<10x16x384xf32>
    %10 = vector.shape_cast %9 : vector<10x16x384xf32> to vector<160x384xf32>
    %c0_2 = arith.constant 0 : index
    %c0_3 = arith.constant 0 : index
    %c0_4 = arith.constant 0 : index
    %11 = vector.load %arg4[%c0_2, %c0_3, %c0_4] : memref<3x384x128xf32, #tpu.memory_space<vmem>>, vector<1x384x128xf32>
    %12 = vector.shape_cast %11 : vector<1x384x128xf32> to vector<384x128xf32>
    %cst = arith.constant dense<0.000000e+00> : vector<160x128xf32>
    %13 = tpu.matmul %10, %12, %cst {dimension_numbers = #tpu.dot_dimension_numbers<[1], [0], [0], [1], [0, 0, 1, 1], [], []>} : vector<160x384xf32>, vector<384x128xf32>, vector<160x128xf32> -> vector<160x128xf32>
    %c1_i32 = arith.constant 1 : i32
    %14 = arith.addi %1, %c1_i32 : i32
    %c0_5 = arith.constant 0 : index
    %15 = arith.index_cast %14 : i32 to index
    %c0_6 = arith.constant 0 : index
    %c0_7 = arith.constant 0 : index
    %16 = vector.load %arg2[%c0_5, %15, %c0_6, %c0_7] : memref<1x20x18x128xf32, #tpu.memory_space<vmem>>, vector<1x10x18x128xf32>
    %17 = vector.shape_cast %16 : vector<1x10x18x128xf32> to vector<10x18x128xf32>
    %18 = vector.extract_strided_slice %17 {offsets = [0, 0, 0], sizes = [10, 16, 128], strides = [1, 1, 1]} : vector<10x18x128xf32> to vector<10x16x128xf32>
    %19 = vector.extract_strided_slice %17 {offsets = [0, 1, 0], sizes = [10, 16, 128], strides = [1, 1, 1]} : vector<10x18x128xf32> to vector<10x16x128xf32>
    %20 = vector.extract_strided_slice %17 {offsets = [0, 2, 0], sizes = [10, 16, 128], strides = [1, 1, 1]} : vector<10x18x128xf32> to vector<10x16x128xf32>
    %21 = tpu.concatenate %18, %19, %20 in 2 : vector<10x16x128xf32>, vector<10x16x128xf32>, vector<10x16x128xf32> -> vector<10x16x384xf32>
    %22 = vector.shape_cast %21 : vector<10x16x384xf32> to vector<160x384xf32>
    %c1 = arith.constant 1 : index
    %c0_8 = arith.constant 0 : index
    %c0_9 = arith.constant 0 : index
    %23 = vector.load %arg4[%c1, %c0_8, %c0_9] : memref<3x384x128xf32, #tpu.memory_space<vmem>>, vector<1x384x128xf32>
    %24 = vector.shape_cast %23 : vector<1x384x128xf32> to vector<384x128xf32>
    %cst_10 = arith.constant dense<0.000000e+00> : vector<160x128xf32>
    %25 = tpu.matmul %22, %24, %cst_10 {dimension_numbers = #tpu.dot_dimension_numbers<[1], [0], [0], [1], [0, 0, 1, 1], [], []>} : vector<160x384xf32>, vector<384x128xf32>, vector<160x128xf32> -> vector<160x128xf32>
    %26 = arith.addf %13, %25 : vector<160x128xf32>
    %c2_i32 = arith.constant 2 : i32
    %27 = arith.addi %1, %c2_i32 : i32
    %c0_11 = arith.constant 0 : index
    %28 = arith.index_cast %27 : i32 to index
    %c0_12 = arith.constant 0 : index
    %c0_13 = arith.constant 0 : index
    %29 = vector.load %arg2[%c0_11, %28, %c0_12, %c0_13] : memref<1x20x18x128xf32, #tpu.memory_space<vmem>>, vector<1x10x18x128xf32>
    %30 = vector.shape_cast %29 : vector<1x10x18x128xf32> to vector<10x18x128xf32>
    %31 = vector.extract_strided_slice %30 {offsets = [0, 0, 0], sizes = [10, 16, 128], strides = [1, 1, 1]} : vector<10x18x128xf32> to vector<10x16x128xf32>
    %32 = vector.extract_strided_slice %30 {offsets = [0, 1, 0], sizes = [10, 16, 128], strides = [1, 1, 1]} : vector<10x18x128xf32> to vector<10x16x128xf32>
    %33 = vector.extract_strided_slice %30 {offsets = [0, 2, 0], sizes = [10, 16, 128], strides = [1, 1, 1]} : vector<10x18x128xf32> to vector<10x16x128xf32>
    %34 = tpu.concatenate %31, %32, %33 in 2 : vector<10x16x128xf32>, vector<10x16x128xf32>, vector<10x16x128xf32> -> vector<10x16x384xf32>
    %35 = vector.shape_cast %34 : vector<10x16x384xf32> to vector<160x384xf32>
    %c2 = arith.constant 2 : index
    %c0_14 = arith.constant 0 : index
    %c0_15 = arith.constant 0 : index
    %36 = vector.load %arg4[%c2, %c0_14, %c0_15] : memref<3x384x128xf32, #tpu.memory_space<vmem>>, vector<1x384x128xf32>
    %37 = vector.shape_cast %36 : vector<1x384x128xf32> to vector<384x128xf32>
    %cst_16 = arith.constant dense<0.000000e+00> : vector<160x128xf32>
    %38 = tpu.matmul %35, %37, %cst_16 {dimension_numbers = #tpu.dot_dimension_numbers<[1], [0], [0], [1], [0, 0, 1, 1], [], []>} : vector<160x384xf32>, vector<384x128xf32>, vector<160x128xf32> -> vector<160x128xf32>
    %39 = arith.addf %26, %38 : vector<160x128xf32>
    %c0_17 = arith.constant 0 : index
    %c0_18 = arith.constant 0 : index
    %40 = vector.load %arg5[%c0_17, %c0_18] : memref<1x128xf32, #tpu.memory_space<vmem>>, vector<1x128xf32>
    %41 = vector.broadcast %40 : vector<1x128xf32> to vector<160x128xf32>
    %42 = arith.addf %39, %41 : vector<160x128xf32>
    %cst_19 = arith.constant 0.000000e+00 : f32
    %43 = vector.broadcast %cst_19 : f32 to vector<160x128xf32>
    %44 = arith.maximumf %42, %43 : vector<160x128xf32>
    %45 = vector.shape_cast %44 : vector<160x128xf32> to vector<10x16x128xf32>
    %cst_20 = arith.constant 0.000000e+00 : f32
    %46 = vector.broadcast %cst_20 : f32 to vector<10x1x128xf32>
    %c0_21 = arith.constant 0 : index
    %c0_22 = arith.constant 0 : index
    %c0_23 = arith.constant 0 : index
    %47 = vector.load %arg9[%c0_21, %c0_22, %c0_23] : memref<10x18x128xf32, #tpu.memory_space<vmem>>, vector<10x1x128xf32>
    tpu.vector_store %arg9[%c0_21, %c0_22, %c0_23], %46 {strides = array<i32>} : memref<10x18x128xf32, #tpu.memory_space<vmem>>, vector<10x1x128xf32>,
    %cst_24 = arith.constant 0.000000e+00 : f32
    %48 = vector.broadcast %cst_24 : f32 to vector<10x1x128xf32>
    %c0_25 = arith.constant 0 : index
    %c17 = arith.constant 17 : index
    %c0_26 = arith.constant 0 : index
    %49 = vector.load %arg9[%c0_25, %c17, %c0_26] : memref<10x18x128xf32, #tpu.memory_space<vmem>>, vector<10x1x128xf32>
    tpu.vector_store %arg9[%c0_25, %c17, %c0_26], %48 {strides = array<i32>} : memref<10x18x128xf32, #tpu.memory_space<vmem>>, vector<10x1x128xf32>,
    %c0_27 = arith.constant 0 : index
    %c1_28 = arith.constant 1 : index
    %c0_29 = arith.constant 0 : index
    %50 = vector.load %arg9[%c0_27, %c1_28, %c0_29] : memref<10x18x128xf32, #tpu.memory_space<vmem>>, vector<10x16x128xf32>
    tpu.vector_store %arg9[%c0_27, %c1_28, %c0_29], %45 {strides = array<i32>} : memref<10x18x128xf32, #tpu.memory_space<vmem>>, vector<10x16x128xf32>,
    %c0_i32_30 = arith.constant 0 : i32
    %51 = arith.cmpi eq, %arg1, %c0_i32_30 : i32
    %52 = arith.extui %51 : i1 to i32
    %c0_i32_31 = arith.constant 0 : i32
    %53 = arith.cmpi ne, %52, %c0_i32_31 : i32
    scf.if %53 {
      %cst_66 = arith.constant 0.000000e+00 : f32
      %98 = vector.broadcast %cst_66 : f32 to vector<1x18x128xf32>
      %c0_67 = arith.constant 0 : index
      %c0_68 = arith.constant 0 : index
      %c0_69 = arith.constant 0 : index
      %99 = vector.load %arg9[%c0_67, %c0_68, %c0_69] : memref<10x18x128xf32, #tpu.memory_space<vmem>>, vector<1x18x128xf32>
      tpu.vector_store %arg9[%c0_67, %c0_68, %c0_69], %98 {strides = array<i32>} : memref<10x18x128xf32, #tpu.memory_space<vmem>>, vector<1x18x128xf32>,
    } else {
    }
    %c1_i32_32 = arith.constant 1 : i32
    %54 = arith.cmpi eq, %arg1, %c1_i32_32 : i32
    %55 = arith.extui %54 : i1 to i32
    %c0_i32_33 = arith.constant 0 : i32
    %56 = arith.cmpi ne, %55, %c0_i32_33 : i32
    scf.if %56 {
      %cst_66 = arith.constant 0.000000e+00 : f32
      %98 = vector.broadcast %cst_66 : f32 to vector<1x18x128xf32>
      %c9 = arith.constant 9 : index
      %c0_67 = arith.constant 0 : index
      %c0_68 = arith.constant 0 : index
      %99 = vector.load %arg9[%c9, %c0_67, %c0_68] : memref<10x18x128xf32, #tpu.memory_space<vmem>>, vector<1x18x128xf32>
      tpu.vector_store %arg9[%c9, %c0_67, %c0_68], %98 {strides = array<i32>} : memref<10x18x128xf32, #tpu.memory_space<vmem>>, vector<1x18x128xf32>,
    } else {
    }
    %c0_34 = arith.constant 0 : index
    %c0_35 = arith.constant 0 : index
    %c0_36 = arith.constant 0 : index
    %57 = vector.load %arg9[%c0_34, %c0_35, %c0_36] : memref<10x18x128xf32, #tpu.memory_space<vmem>>, vector<8x18x128xf32>
    %58 = vector.extract_strided_slice %57 {offsets = [0, 0, 0], sizes = [8, 16, 128], strides = [1, 1, 1]} : vector<8x18x128xf32> to vector<8x16x128xf32>
    %59 = vector.extract_strided_slice %57 {offsets = [0, 1, 0], sizes = [8, 16, 128], strides = [1, 1, 1]} : vector<8x18x128xf32> to vector<8x16x128xf32>
    %60 = vector.extract_strided_slice %57 {offsets = [0, 2, 0], sizes = [8, 16, 128], strides = [1, 1, 1]} : vector<8x18x128xf32> to vector<8x16x128xf32>
    %61 = tpu.concatenate %58, %59, %60 in 2 : vector<8x16x128xf32>, vector<8x16x128xf32>, vector<8x16x128xf32> -> vector<8x16x384xf32>
    %62 = vector.shape_cast %61 : vector<8x16x384xf32> to vector<128x384xf32>
    %c0_37 = arith.constant 0 : index
    %c0_38 = arith.constant 0 : index
    %c0_39 = arith.constant 0 : index
    %63 = vector.load %arg6[%c0_37, %c0_38, %c0_39] : memref<3x384x128xf32, #tpu.memory_space<vmem>>, vector<1x384x128xf32>
    %64 = vector.shape_cast %63 : vector<1x384x128xf32> to vector<384x128xf32>
    %cst_40 = arith.constant dense<0.000000e+00> : vector<128x128xf32>
    %65 = tpu.matmul %62, %64, %cst_40 {dimension_numbers = #tpu.dot_dimension_numbers<[1], [0], [0], [1], [0, 0, 1, 1], [], []>} : vector<128x384xf32>, vector<384x128xf32>, vector<128x128xf32> -> vector<128x128xf32>
    %c1_41 = arith.constant 1 : index
    %c0_42 = arith.constant 0 : index
    %c0_43 = arith.constant 0 : index
    %66 = vector.load %arg9[%c1_41, %c0_42, %c0_43] : memref<10x18x128xf32, #tpu.memory_space<vmem>>, vector<8x18x128xf32>
    %67 = vector.extract_strided_slice %66 {offsets = [0, 0, 0], sizes = [8, 16, 128], strides = [1, 1, 1]} : vector<8x18x128xf32> to vector<8x16x128xf32>
    %68 = vector.extract_strided_slice %66 {offsets = [0, 1, 0], sizes = [8, 16, 128], strides = [1, 1, 1]} : vector<8x18x128xf32> to vector<8x16x128xf32>
    %69 = vector.extract_strided_slice %66 {offsets = [0, 2, 0], sizes = [8, 16, 128], strides = [1, 1, 1]} : vector<8x18x128xf32> to vector<8x16x128xf32>
    %70 = tpu.concatenate %67, %68, %69 in 2 : vector<8x16x128xf32>, vector<8x16x128xf32>, vector<8x16x128xf32> -> vector<8x16x384xf32>
    %71 = vector.shape_cast %70 : vector<8x16x384xf32> to vector<128x384xf32>
    %c1_44 = arith.constant 1 : index
    %c0_45 = arith.constant 0 : index
    %c0_46 = arith.constant 0 : index
    %72 = vector.load %arg6[%c1_44, %c0_45, %c0_46] : memref<3x384x128xf32, #tpu.memory_space<vmem>>, vector<1x384x128xf32>
    %73 = vector.shape_cast %72 : vector<1x384x128xf32> to vector<384x128xf32>
    %cst_47 = arith.constant dense<0.000000e+00> : vector<128x128xf32>
    %74 = tpu.matmul %71, %73, %cst_47 {dimension_numbers = #tpu.dot_dimension_numbers<[1], [0], [0], [1], [0, 0, 1, 1], [], []>} : vector<128x384xf32>, vector<384x128xf32>, vector<128x128xf32> -> vector<128x128xf32>
    %75 = arith.addf %65, %74 : vector<128x128xf32>
    %c2_48 = arith.constant 2 : index
    %c0_49 = arith.constant 0 : index
    %c0_50 = arith.constant 0 : index
    %76 = vector.load %arg9[%c2_48, %c0_49, %c0_50] : memref<10x18x128xf32, #tpu.memory_space<vmem>>, vector<8x18x128xf32>
    %77 = vector.extract_strided_slice %76 {offsets = [0, 0, 0], sizes = [8, 16, 128], strides = [1, 1, 1]} : vector<8x18x128xf32> to vector<8x16x128xf32>
    %78 = vector.extract_strided_slice %76 {offsets = [0, 1, 0], sizes = [8, 16, 128], strides = [1, 1, 1]} : vector<8x18x128xf32> to vector<8x16x128xf32>
    %79 = vector.extract_strided_slice %76 {offsets = [0, 2, 0], sizes = [8, 16, 128], strides = [1, 1, 1]} : vector<8x18x128xf32> to vector<8x16x128xf32>
    %80 = tpu.concatenate %77, %78, %79 in 2 : vector<8x16x128xf32>, vector<8x16x128xf32>, vector<8x16x128xf32> -> vector<8x16x384xf32>
    %81 = vector.shape_cast %80 : vector<8x16x384xf32> to vector<128x384xf32>
    %c2_51 = arith.constant 2 : index
    %c0_52 = arith.constant 0 : index
    %c0_53 = arith.constant 0 : index
    %82 = vector.load %arg6[%c2_51, %c0_52, %c0_53] : memref<3x384x128xf32, #tpu.memory_space<vmem>>, vector<1x384x128xf32>
    %83 = vector.shape_cast %82 : vector<1x384x128xf32> to vector<384x128xf32>
    %cst_54 = arith.constant dense<0.000000e+00> : vector<128x128xf32>
    %84 = tpu.matmul %81, %83, %cst_54 {dimension_numbers = #tpu.dot_dimension_numbers<[1], [0], [0], [1], [0, 0, 1, 1], [], []>} : vector<128x384xf32>, vector<384x128xf32>, vector<128x128xf32> -> vector<128x128xf32>
    %85 = arith.addf %75, %84 : vector<128x128xf32>
    %c0_55 = arith.constant 0 : index
    %c0_56 = arith.constant 0 : index
    %86 = vector.load %arg7[%c0_55, %c0_56] : memref<1x128xf32, #tpu.memory_space<vmem>>, vector<1x128xf32>
    %87 = vector.broadcast %86 : vector<1x128xf32> to vector<128x128xf32>
    %88 = arith.addf %85, %87 : vector<128x128xf32>
    %cst_57 = arith.constant 0.000000e+00 : f32
    %89 = vector.broadcast %cst_57 : f32 to vector<128x128xf32>
    %90 = arith.maximumf %88, %89 : vector<128x128xf32>
    %91 = vector.shape_cast %90 : vector<128x128xf32> to vector<8x16x128xf32>
    %c0_58 = arith.constant 0 : index
    %c0_59 = arith.constant 0 : index
    %c0_60 = arith.constant 0 : index
    %c0_61 = arith.constant 0 : index
    %92 = vector.load %arg3[%c0_58, %c0_59, %c0_60, %c0_61] : memref<1x8x16x128xf32, #tpu.memory_space<vmem>>, vector<1x8x16x128xf32>
    %93 = vector.shape_cast %92 : vector<1x8x16x128xf32> to vector<8x16x128xf32>
    %94 = arith.addf %91, %93 : vector<8x16x128xf32>
    %c0_62 = arith.constant 0 : index
    %c0_63 = arith.constant 0 : index
    %c0_64 = arith.constant 0 : index
    %c0_65 = arith.constant 0 : index
    %95 = vector.load %arg8[%c0_62, %c0_63, %c0_64, %c0_65] : memref<1x8x16x128xf32, #tpu.memory_space<vmem>>, vector<1x8x16x128xf32>
    %96 = vector.shape_cast %95 : vector<1x8x16x128xf32> to vector<8x16x128xf32>
    %97 = vector.shape_cast %94 : vector<8x16x128xf32> to vector<1x8x16x128xf32>
    tpu.vector_store %arg8[%c0_62, %c0_63, %c0_64, %c0_65], %97 {strides = array<i32>} : memref<1x8x16x128xf32, #tpu.memory_space<vmem>>, vector<1x8x16x128xf32>,
    return
  }
  func.func @transform_0(%arg0: i32, %arg1: i32) -> (i32, i32, i32, i32) {
    %c0_i32 = arith.constant 0 : i32
    %c0_i32_0 = arith.constant 0 : i32
    %c0_i32_1 = arith.constant 0 : i32
    %c0_i32_2 = arith.constant 0 : i32
    return %arg0, %c0_i32, %c0_i32_0, %c0_i32_1 : i32, i32, i32, i32
  }
  func.func @transform_1(%arg0: i32, %arg1: i32) -> (i32, i32, i32, i32) {
    %c0_i32 = arith.constant 0 : i32
    %c0_i32_0 = arith.constant 0 : i32
    %c0_i32_1 = arith.constant 0 : i32
    return %arg0, %arg1, %c0_i32, %c0_i32_0 : i32, i32, i32, i32
  }
  func.func @transform_2(%arg0: i32, %arg1: i32) -> (i32, i32, i32) {
    %c0_i32 = arith.constant 0 : i32
    %c0_i32_0 = arith.constant 0 : i32
    %c0_i32_1 = arith.constant 0 : i32
    %c0_i32_2 = arith.constant 0 : i32
    return %c0_i32, %c0_i32_0, %c0_i32_1 : i32, i32, i32
  }
  func.func @transform_3(%arg0: i32, %arg1: i32) -> (i32, i32) {
    %c0_i32 = arith.constant 0 : i32
    %c0_i32_0 = arith.constant 0 : i32
    %c0_i32_1 = arith.constant 0 : i32
    return %c0_i32, %c0_i32_0 : i32, i32
  }
  func.func @transform_4(%arg0: i32, %arg1: i32) -> (i32, i32, i32) {
    %c0_i32 = arith.constant 0 : i32
    %c0_i32_0 = arith.constant 0 : i32
    %c0_i32_1 = arith.constant 0 : i32
    %c0_i32_2 = arith.constant 0 : i32
    return %c0_i32, %c0_i32_0, %c0_i32_1 : i32, i32, i32
  }
  func.func @transform_5(%arg0: i32, %arg1: i32) -> (i32, i32) {
    %c0_i32 = arith.constant 0 : i32
    %c0_i32_0 = arith.constant 0 : i32
    %c0_i32_1 = arith.constant 0 : i32
    return %c0_i32, %c0_i32_0 : i32, i32
  }
  func.func @transform_6(%arg0: i32, %arg1: i32) -> (i32, i32, i32, i32) {
    %c0_i32 = arith.constant 0 : i32
    %c0_i32_0 = arith.constant 0 : i32
    %c0_i32_1 = arith.constant 0 : i32
    return %arg0, %arg1, %c0_i32, %c0_i32_0 : i32, i32, i32, i32
  }
}

</mosaic_0001>

<llo_original>
// kernel: tpu_custom_call.1
$region0: #{tpu_custom_call.1}
  #allocation0 [shape = 'u32[]', space=smem, size = 0x4, offset = 0x4, fixed_abs, tag = 'smem constant byte address 0x4 - core index']
  #allocation1 [shape = 'u32[144,128]{1,0:T(1,128)}', space=vmem, size = 0x12000, scoped, tag = 'internal scratch']
  #allocation2 [shape = 'f32[10,18,128]{2,1,0:T(8,128)}', space=vmem, size = 0x1e000, scoped, tag = 'scratch operand']
  %s0 = inlined_call_operand.vmem [shape: f32[2,20,18,128], index: 0, kind: input, shape index: {}]
  %s1 = inlined_call_operand.vmem [shape: f32[2,16,16,128], index: 1, kind: input, shape index: {}]
  %s2 = inlined_call_operand.vmem [shape: f32[3,384,128], index: 2, kind: input, shape index: {}]
  %s3 = inlined_call_operand.vmem [shape: f32[1,128], index: 3, kind: input, shape index: {}]
  %s4 = inlined_call_operand.hbm [shape: f32[3,384,128], index: 4, kind: input, shape index: {}]
  %s5 = inlined_call_operand.vmem [shape: f32[1,128], index: 5, kind: input, shape index: {}]
  %s6 = inlined_call_operand.hbm [shape: f32[2,16,16,128], index: 6, kind: output, shape index: {}]
  %s7 = sld [smem:[#allocation0]]
  $region69: #{tpu_custom_call.1} parent=0
    _
  %s9 = ssub.s32 1, %s7
  %s10 = scalar_select 0, %s9, %s7
  $region1: #{tpu_custom_call.1} parent=0
    #allocation3 [shape = 'u8[589824]{0}', space=vmem, size = 0x90000, scoped, tag = 'input window, operand 4, single buffered']
    #allocation4 [shape = 's32[2]{0}', space=sflag, size = 0x8, scoped, tag = 'scoped memory for tpu_custom_call.1']
    #allocation5 [shape = 's32[2]{0}', space=sflag, size = 0x8, scoped, tag = 'scoped memory for tpu_custom_call.1']
    #allocation6 [shape = 'u8[131072]{0}', space=vmem, size = 0x20000, scoped, tag = 'output window, operand 0']
    %11 = vsyncpa [#allocation4], 0
    %12 = vsyncpa [#allocation5], 0
    %s13 = scalar_lea.sflag [#allocation5], 1
    %14 = vsyncpa %s13, 0
    loop: start=0, step=1, limit=6
    $region2: #{tpu_custom_call.1} parent=1 // loop_pre_header
      _
    $region3: #{tpu_custom_call.1} parent=1 // loop_header
      %s16 = sphi 0, %s20
      %p17 = scmp.ge.s32.totalorder %s16, 6
      %s23 = sphi 0, %s35
      %s24 = sphi 0, %s31
      %s25 = sphi 0, %s23
      %s26 = sphi 0, %s24
      %s27 = sphi 0, %s25
      %s28 = sphi 0, %s26
      %s38 = sphi 0, %s40
      %s41 = sphi 0, %s38
      %s42 = sphi 0, %s41
      %s58 = sphi 0, %s42
      %s66 = sphi 0, %s68
      %s69 = sphi 0, %s66
      %s70 = sphi 0, %s69
      %s86 = sphi 0, %s70
      %s90 = sphi 0, %s90
      %s92 = sphi 0, %s90
      %s93 = sphi 0, %s92
      %s107 = sphi 0, %s93
      %s111 = sphi 0, %s111
      %s113 = sphi 0, %s111
      %s114 = sphi 0, %s113
      %s128 = sphi 0, %s114
      %s132 = sphi 0, %s132
      %s134 = sphi 0, %s132
      %s135 = sphi 0, %s134
      %s149 = sphi 0, %s135
      %s153 = sphi 0, %s153
      %s155 = sphi 0, %s153
      %s156 = sphi 0, %s155
      %s170 = sphi 0, %s156
      %s178 = sphi 0, %s180
      %s181 = sphi 0, %s178
      %s182 = sphi 0, %s181
      %s198 = sphi 0, %s182
    $region4: #{tpu_custom_call.1} parent=1 // loop_header_branch
      %19 = sbr.rel (%p17) target = $region8
    $region5: #{tpu_custom_call.1} parent=1 // loop_body
      %s21 = ssub.s32 %s16, 1
      %s22 = ssub.s32 %s16, 2
      %s29 = sadd.s32 1, %s24
      %p30 = scmp.ge.s32.totalorder %s29, 2
      %s31 = scalar_select %p30, 0, %s29
      %s32 = sadd.s32 1, %s23
      %s33 = scalar_select %p30, %s32, %s23
      %p34 = scmp.ge.s32.totalorder %s33, 2
      %s35 = scalar_select %p34, 0, %s33
      %s36 = ssub.s32 %s23, %s35
      %p37 = scmp.eq.s32.totalorder %s36, 0
      %s39 = sadd.s32 %s38, 1
      %s40 = scalar_select %p37, %s38, %s39
      %p43 = pneg %p37
      %p44 = scmp.eq.s32.totalorder %s16, 3
      %p45 = por %p43, %p44
      %p46 = scmp.ne.s32.totalorder %s38, %s41
      %p47 = scmp.eq.s32.totalorder %s16, 0
      %p48 = por %p46, %p47
      %p49 = scmp.ne.s32.totalorder %s38, %s41
      %p50 = scmp.eq.s32.totalorder %s21, 3
      %p51 = por %p49, %p50
      %p52 = scmp.ne.s32.totalorder %s41, %s42
      %p53 = scmp.eq.s32.totalorder %s21, 0
      %p54 = por %p52, %p53
      %p55 = scmp.ne.s32.totalorder %s41, %s42
      %p56 = scmp.eq.s32.totalorder %s22, 3
      %p57 = por %p55, %p56
      %p59 = scmp.ne.s32.totalorder %s42, %s58
      %p60 = scmp.eq.s32.totalorder %s22, 0
      %p61 = por %p59, %p60
      %s62 = ssub.s32 %s23, %s35
      %s63 = ssub.s32 %s24, %s31
      %s64 = sor.u32 %s62, %s63
      %p65 = scmp.eq.s32.totalorder %s64, 0
      %s67 = sadd.s32 %s66, 1
      %s68 = scalar_select %p65, %s66, %s67
      %p71 = pneg %p65
      %p72 = scmp.eq.s32.totalorder %s16, 3
      %p73 = por %p71, %p72
      %p74 = scmp.ne.s32.totalorder %s66, %s69
      %p75 = scmp.eq.s32.totalorder %s16, 0
      %p76 = por %p74, %p75
      %p77 = scmp.ne.s32.totalorder %s66, %s69
      %p78 = scmp.eq.s32.totalorder %s21, 3
      %p79 = por %p77, %p78
      %p80 = scmp.ne.s32.totalorder %s69, %s70
      %p81 = scmp.eq.s32.totalorder %s21, 0
      %p82 = por %p80, %p81
      %p83 = scmp.ne.s32.totalorder %s69, %s70
      %p84 = scmp.eq.s32.totalorder %s22, 3
      %p85 = por %p83, %p84
      %p87 = scmp.ne.s32.totalorder %s70, %s86
      %p88 = scmp.eq.s32.totalorder %s22, 0
      %p89 = por %p87, %p88
      %s91 = sadd.s32 %s90, 1
      %p94 = scmp.eq.s32.totalorder %s16, 3
      %p95 = scmp.ne.s32.totalorder %s90, %s92
      %p96 = scmp.eq.s32.totalorder %s16, 0
      %p97 = por %p95, %p96
      %p98 = scmp.ne.s32.totalorder %s90, %s92
      %p99 = scmp.eq.s32.totalorder %s21, 3
      %p100 = por %p98, %p99
      %p101 = scmp.ne.s32.totalorder %s92, %s93
      %p102 = scmp.eq.s32.totalorder %s21, 0
      %p103 = por %p101, %p102
      %p104 = scmp.ne.s32.totalorder %s92, %s93
      %p105 = scmp.eq.s32.totalorder %s22, 3
      %p106 = por %p104, %p105
      %p108 = scmp.ne.s32.totalorder %s93, %s107
      %p109 = scmp.eq.s32.totalorder %s22, 0
      %p110 = por %p108, %p109
      %s112 = sadd.s32 %s111, 1
      %p115 = scmp.eq.s32.totalorder %s16, 3
      %p116 = scmp.ne.s32.totalorder %s111, %s113
      %p117 = scmp.eq.s32.totalorder %s16, 0
      %p118 = por %p116, %p117
      %p119 = scmp.ne.s32.totalorder %s111, %s113
      %p120 = scmp.eq.s32.totalorder %s21, 3
      %p121 = por %p119, %p120
      %p122 = scmp.ne.s32.totalorder %s113, %s114
      %p123 = scmp.eq.s32.totalorder %s21, 0
      %p124 = por %p122, %p123
      %p125 = scmp.ne.s32.totalorder %s113, %s114
      %p126 = scmp.eq.s32.totalorder %s22, 3
      %p127 = por %p125, %p126
      %p129 = scmp.ne.s32.totalorder %s114, %s128
      %p130 = scmp.eq.s32.totalorder %s22, 0
      %p131 = por %p129, %p130
      %s133 = sadd.s32 %s132, 1
      %p136 = scmp.eq.s32.totalorder %s16, 3
      %p137 = scmp.ne.s32.totalorder %s132, %s134
      %p138 = scmp.eq.s32.totalorder %s16, 0
      %p139 = por %p137, %p138
      %p140 = scmp.ne.s32.totalorder %s132, %s134
      %p141 = scmp.eq.s32.totalorder %s21, 3
      %p142 = por %p140, %p141
      %p143 = scmp.ne.s32.totalorder %s134, %s135
      %p144 = scmp.eq.s32.totalorder %s21, 0
      %p145 = por %p143, %p144
      %p146 = scmp.ne.s32.totalorder %s134, %s135
      %p147 = scmp.eq.s32.totalorder %s22, 3
      %p148 = por %p146, %p147
      %p150 = scmp.ne.s32.totalorder %s135, %s149
      %p151 = scmp.eq.s32.totalorder %s22, 0
      %p152 = por %p150, %p151
      %s154 = sadd.s32 %s153, 1
      %p157 = scmp.eq.s32.totalorder %s16, 3
      %p158 = scmp.ne.s32.totalorder %s153, %s155
      %p159 = scmp.eq.s32.totalorder %s16, 0
      %p160 = por %p158, %p159
      %p161 = scmp.ne.s32.totalorder %s153, %s155
      %p162 = scmp.eq.s32.totalorder %s21, 3
      %p163 = por %p161, %p162
      %p164 = scmp.ne.s32.totalorder %s155, %s156
      %p165 = scmp.eq.s32.totalorder %s21, 0
      %p166 = por %p164, %p165
      %p167 = scmp.ne.s32.totalorder %s155, %s156
      %p168 = scmp.eq.s32.totalorder %s22, 3
      %p169 = por %p167, %p168
      %p171 = scmp.ne.s32.totalorder %s156, %s170
      %p172 = scmp.eq.s32.totalorder %s22, 0
      %p173 = por %p171, %p172
      %s174 = ssub.s32 %s23, %s35
      %s175 = ssub.s32 %s24, %s31
      %s176 = sor.u32 %s174, %s175
      %p177 = scmp.eq.s32.totalorder %s176, 0
      %s179 = sadd.s32 %s178, 1
      %s180 = scalar_select %p177, %s178, %s179
      %p183 = pneg %p177
      %p184 = scmp.eq.s32.totalorder %s16, 3
      %p185 = por %p183, %p184
      %p186 = scmp.ne.s32.totalorder %s178, %s181
      %p187 = scmp.eq.s32.totalorder %s16, 0
      %p188 = por %p186, %p187
      %p189 = scmp.ne.s32.totalorder %s178, %s181
      %p190 = scmp.eq.s32.totalorder %s21, 3
      %p191 = por %p189, %p190
      %p192 = scmp.ne.s32.totalorder %s181, %s182
      %p193 = scmp.eq.s32.totalorder %s21, 0
      %p194 = por %p192, %p193
      %p195 = scmp.ne.s32.totalorder %s181, %s182
      %p196 = scmp.eq.s32.totalorder %s22, 3
      %p197 = por %p195, %p196
      %p199 = scmp.ne.s32.totalorder %s182, %s198
      %p200 = scmp.eq.s32.totalorder %s22, 0
      %p201 = por %p199, %p200
      %p202 = scmp.le.s32.totalorder 1, %s16
      %p203 = scmp.lt.s32.totalorder %s16, 5
      %p204 = pnand %p202, %p203
      %p205 = pneg %p204
      // Predicated region
      $region9: #{tpu_custom_call.1} parent=5 // pred_check
        _
      $region10: #{tpu_custom_call.1} parent=5 // pred_check_branch
        %207 = sbr.rel (%p204) target = $region12
      $region11: #{tpu_custom_call.1} parent=5 // pred_region
        %s208 = ssub.s32 %s16, 1
        // Predicated region
        $region13: #{tpu_custom_call.1} parent=11 // pred_check
          %p209 = pneg %p103
        $region14: #{tpu_custom_call.1} parent=11 // pred_check_branch
          %211 = sbr.rel (%p209) target = $region16
        $region15: #{tpu_custom_call.1} parent=11 // pred_region
          _
        $region16: #{tpu_custom_call.1} parent=11 // pred_fallthru
          _
        // Predicated region
        $region17: #{tpu_custom_call.1} parent=11 // pred_check
          %p212 = pneg %p124
        $region18: #{tpu_custom_call.1} parent=11 // pred_check_branch
          %214 = sbr.rel (%p212) target = $region20
        $region19: #{tpu_custom_call.1} parent=11 // pred_region
          _
        $region20: #{tpu_custom_call.1} parent=11 // pred_fallthru
          _
        // Predicated region
        $region21: #{tpu_custom_call.1} parent=11 // pred_check
          %p215 = pneg %p145
        $region22: #{tpu_custom_call.1} parent=11 // pred_check_branch
          %217 = sbr.rel (%p215) target = $region24
        $region23: #{tpu_custom_call.1} parent=11 // pred_region
          %s219 = ssub.s32 18432, 18432
          %220 = vsyncadd [#allocation4], %s219
          %s221 = sshll.u32 [#allocation3], 4
          %s222 = int_to_ptr.vmem [resolvable:$true] %s221
          %227 = dma.hbm_to_vmem [thread:$0]  %s4, 18432, %s222, [#allocation4], 128, 128, 8
        $region24: #{tpu_custom_call.1} parent=11 // pred_fallthru
          _
        // Predicated region
        $region25: #{tpu_custom_call.1} parent=11 // pred_check
          %p228 = pneg %p166
        $region26: #{tpu_custom_call.1} parent=11 // pred_check_branch
          %230 = sbr.rel (%p228) target = $region28
        $region27: #{tpu_custom_call.1} parent=11 // pred_region
          _
        $region28: #{tpu_custom_call.1} parent=11 // pred_fallthru
          _
      $region12: #{tpu_custom_call.1} parent=5 // pred_fallthru
        _
      %p231 = scmp.lt.s32.totalorder %s16, 4
      // Predicated region
      $region29: #{tpu_custom_call.1} parent=5 // pred_check
        %p232 = pneg %p231
      $region30: #{tpu_custom_call.1} parent=5 // pred_check_branch
        %234 = sbr.rel (%p232) target = $region32
      $region31: #{tpu_custom_call.1} parent=5 // pred_region
        // Predicated region
        $region33: #{tpu_custom_call.1} parent=31 // pred_check
          %p235 = pneg %p48
        $region34: #{tpu_custom_call.1} parent=31 // pred_check_branch
          %237 = sbr.rel (%p235) target = $region36
        $region35: #{tpu_custom_call.1} parent=31 // pred_region
          %p238 = scmp.lt.s32.totalorder %s23, 1
          %s239 = scalar_select %p238, %s23, 1
          %s240 = smul.addr %s239, 60
          %s241 = smul.addr %s240, 8
          %s242 = scalar_lea.vmem %s0, %s241
        $region36: #{tpu_custom_call.1} parent=31 // pred_fallthru
          _
        // Predicated region
        $region37: #{tpu_custom_call.1} parent=31 // pred_check
          %p243 = pneg %p76
        $region38: #{tpu_custom_call.1} parent=31 // pred_check_branch
          %245 = sbr.rel (%p243) target = $region40
        $region39: #{tpu_custom_call.1} parent=31 // pred_region
          %s246 = smul.u32 8, %s24
          %p247 = scmp.lt.s32.totalorder %s23, 1
          %s248 = scalar_select %p247, %s23, 1
          %p249 = scmp.lt.s32.totalorder %s246, 15
          %s250 = scalar_select %p249, %s246, 15
          %s251 = smul.addr %s250, 2
          %s252 = smul.addr %s248, 32
          %s253 = sadd.s32 %s251, %s252
          %s254 = smul.addr %s253, 8
          %s255 = scalar_lea.vmem %s1, %s254
          %s256 = smul.u32 8, %s24
        $region40: #{tpu_custom_call.1} parent=31 // pred_fallthru
          _
      $region32: #{tpu_custom_call.1} parent=5 // pred_fallthru
        _
      %p257 = scmp.le.s32.totalorder 1, %s16
      %p258 = scmp.lt.s32.totalorder %s16, 5
      %p259 = pnand %p257, %p258
      %p260 = pneg %p259
      // Predicated region
      $region41: #{tpu_custom_call.1} parent=5 // pred_check
        _
      $region42: #{tpu_custom_call.1} parent=5 // pred_check_branch
        %262 = sbr.rel (%p259) target = $region44
      $region43: #{tpu_custom_call.1} parent=5 // pred_region
        %s263 = ssub.s32 %s16, 1
        // Predicated region
        $region45: #{tpu_custom_call.1} parent=43 // pred_check
          %p264 = pneg %p145
        $region46: #{tpu_custom_call.1} parent=43 // pred_check_branch
          %266 = sbr.rel (%p264) target = $region48
        $region47: #{tpu_custom_call.1} parent=43 // pred_region
          %267 = dma.done [#allocation4], 18432
        $region48: #{tpu_custom_call.1} parent=43 // pred_fallthru
          _
        %p268 = scmp.lt.s32.totalorder %s25, 1
        %s269 = scalar_select %p268, %s25, 1
        %s270 = smul.addr %s269, 60
        %s271 = smul.addr %s270, 8
        %s272 = scalar_lea.vmem %s0, %s271
        %p273 = pneg %p54
        %p274 = pneg %p51
        %s275 = smul.u32 8, %s26
        %p276 = scmp.lt.s32.totalorder %s25, 1
        %s277 = scalar_select %p276, %s25, 1
        %p278 = scmp.lt.s32.totalorder %s275, 15
        %s279 = scalar_select %p278, %s275, 15
        %s280 = smul.addr %s279, 2
        %s281 = smul.addr %s277, 32
        %s282 = sadd.s32 %s280, %s281
        %s283 = smul.addr %s282, 8
        %s284 = scalar_lea.vmem %s1, %s283
        %p285 = pneg %p82
        %p286 = pneg %p79
        %p287 = pneg %p103
        %p288 = pneg %p100
        %p289 = pneg %p124
        %p290 = pneg %p121
        %p291 = pneg %p145
        %p292 = pneg %p142
        %p293 = pneg %p166
        %p294 = pneg %p163
        %p295 = pneg %p194
        %p296 = pneg %p191
        %s297 = sand.u32 %s181, 1
        %s298 = scalar_lea.sflag [#allocation5], %s297
        %s299 = sand.u32 %s181, 1
        %s300 = smul.addr %s299, 128
        %s301 = scalar_lea.vmem [#allocation6], %s300
        %p302 = scmp.lt.s32.totalorder %s25, 1
        %s303 = scalar_select %p302, %s25, 1
        %s304 = smul.addr %s303, 60
        %s305 = smul.addr %s304, 8
        %s306 = scalar_lea.vmem %s0, %s305
        %s307 = smul.u32 8, %s26
        %p308 = scmp.lt.s32.totalorder %s25, 1
        %s309 = scalar_select %p308, %s25, 1
        %p310 = scmp.lt.s32.totalorder %s307, 15
        %s311 = scalar_select %p310, %s307, 15
        %s312 = smul.addr %s311, 2
        %s313 = smul.addr %s309, 32
        %s314 = sadd.s32 %s312, %s313
        %s315 = smul.addr %s314, 8
        %s316 = scalar_lea.vmem %s1, %s315
        %s317 = smul.u32 8, %s26
        %s318 = smul.u32 8, %s26
        %s319 = smul.u32 %s26, 8
        %s320 = smul.u32 %s319, 24
        %s321 = scalar_lea.vmem %s306, %s320
        %v322 = vld [vmem:[%s321] sm:$0xff]
        %v323 = vld [vmem:[%s321 + $0x8] sm:$0xff]
        %v324 = vld [vmem:[%s321 + $0x10] sm:$0x3]
        %v325 = vld [vmem:[%s321 + $0x18] sm:$0xff]
        %v326 = vld [vmem:[%s321 + $0x20] sm:$0xff]
        %v327 = vld [vmem:[%s321 + $0x28] sm:$0x3]
        %v328 = vld [vmem:[%s321 + $0x30] sm:$0xff]
        %v329 = vld [vmem:[%s321 + $0x38] sm:$0xff]
        %v330 = vld [vmem:[%s321 + $0x40] sm:$0x3]
        %v331 = vld [vmem:[%s321 + $0x48] sm:$0xff]
        %v332 = vld [vmem:[%s321 + $0x50] sm:$0xff]
        %v333 = vld [vmem:[%s321 + $0x58] sm:$0x3]
        %v334 = vld [vmem:[%s321 + $0x60] sm:$0xff]
        %v335 = vld [vmem:[%s321 + $0x68] sm:$0xff]
        %v336 = vld [vmem:[%s321 + $0x70] sm:$0x3]
        %v337 = vld [vmem:[%s321 + $0x78] sm:$0xff]
        %v338 = vld [vmem:[%s321 + $0x80] sm:$0xff]
        %v339 = vld [vmem:[%s321 + $0x88] sm:$0x3]
        %v340 = vld [vmem:[%s321 + $0x90] sm:$0xff]
        %v341 = vld [vmem:[%s321 + $0x98] sm:$0xff]
        %v342 = vld [vmem:[%s321 + $0xa0] sm:$0x3]
        %v343 = vld [vmem:[%s321 + $0xa8] sm:$0xff]
        %v344 = vld [vmem:[%s321 + $0xb0] sm:$0xff]
        %v345 = vld [vmem:[%s321 + $0xb8] sm:$0x3]
        %v346 = vld [vmem:[%s321 + $0xc0] sm:$0xff]
        %v347 = vld [vmem:[%s321 + $0xc8] sm:$0xff]
        %v348 = vld [vmem:[%s321 + $0xd0] sm:$0x3]
        %v349 = vld [vmem:[%s321 + $0xd8] sm:$0xff]
        %v350 = vld [vmem:[%s321 + $0xe0] sm:$0xff]
        %v351 = vld [vmem:[%s321 + $0xe8] sm:$0x3]
        %vm382 = vcmask 1046528
        %v383 = vrot.slane %v322, 1
        %v384 = vrot.slane %v323, 1
        %v385 = vsel %vm382, %v383, %v384
        %v386 = vrot.slane %v324, 1
        %v387 = vsel %vm382, %v384, %v386
        %v388 = vrot.slane %v325, 1
        %v389 = vrot.slane %v326, 1
        %v390 = vsel %vm382, %v388, %v389
        %v391 = vrot.slane %v327, 1
        %v392 = vsel %vm382, %v389, %v391
        %v393 = vrot.slane %v328, 1
        %v394 = vrot.slane %v329, 1
        %v395 = vsel %vm382, %v393, %v394
        %v396 = vrot.slane %v330, 1
        %v397 = vsel %vm382, %v394, %v396
        %v398 = vrot.slane %v331, 1
        %v399 = vrot.slane %v332, 1
        %v400 = vsel %vm382, %v398, %v399
        %v401 = vrot.slane %v333, 1
        %v402 = vsel %vm382, %v399, %v401
        %v403 = vrot.slane %v334, 1
        %v404 = vrot.slane %v335, 1
        %v405 = vsel %vm382, %v403, %v404
        %v406 = vrot.slane %v336, 1
        %v407 = vsel %vm382, %v404, %v406
        %v408 = vrot.slane %v337, 1
        %v409 = vrot.slane %v338, 1
        %v410 = vsel %vm382, %v408, %v409
        %v411 = vrot.slane %v339, 1
        %v412 = vsel %vm382, %v409, %v411
        %v413 = vrot.slane %v340, 1
        %v414 = vrot.slane %v341, 1
        %v415 = vsel %vm382, %v413, %v414
        %v416 = vrot.slane %v342, 1
        %v417 = vsel %vm382, %v414, %v416
        %v418 = vrot.slane %v343, 1
        %v419 = vrot.slane %v344, 1
        %v420 = vsel %vm382, %v418, %v419
        %v421 = vrot.slane %v345, 1
        %v422 = vsel %vm382, %v419, %v421
        %v423 = vrot.slane %v346, 1
        %v424 = vrot.slane %v347, 1
        %v425 = vsel %vm382, %v423, %v424
        %v426 = vrot.slane %v348, 1
        %v427 = vsel %vm382, %v424, %v426
        %v428 = vrot.slane %v349, 1
        %v429 = vrot.slane %v350, 1
        %v430 = vsel %vm382, %v428, %v429
        %v431 = vrot.slane %v351, 1
        %v432 = vsel %vm382, %v429, %v431
        %vm453 = vcmask 1045504
        %v454 = vrot.slane %v322, 2
        %v455 = vrot.slane %v323, 2
        %v456 = vsel %vm453, %v454, %v455
        %v457 = vrot.slane %v324, 2
        %v458 = vsel %vm453, %v455, %v457
        %v459 = vrot.slane %v325, 2
        %v460 = vrot.slane %v326, 2
        %v461 = vsel %vm453, %v459, %v460
        %v462 = vrot.slane %v327, 2
        %v463 = vsel %vm453, %v460, %v462
        %v464 = vrot.slane %v328, 2
        %v465 = vrot.slane %v329, 2
        %v466 = vsel %vm453, %v464, %v465
        %v467 = vrot.slane %v330, 2
        %v468 = vsel %vm453, %v465, %v467
        %v469 = vrot.slane %v331, 2
        %v470 = vrot.slane %v332, 2
        %v471 = vsel %vm453, %v469, %v470
        %v472 = vrot.slane %v333, 2
        %v473 = vsel %vm453, %v470, %v472
        %v474 = vrot.slane %v334, 2
        %v475 = vrot.slane %v335, 2
        %v476 = vsel %vm453, %v474, %v475
        %v477 = vrot.slane %v336, 2
        %v478 = vsel %vm453, %v475, %v477
        %v479 = vrot.slane %v337, 2
        %v480 = vrot.slane %v338, 2
        %v481 = vsel %vm453, %v479, %v480
        %v482 = vrot.slane %v339, 2
        %v483 = vsel %vm453, %v480, %v482
        %v484 = vrot.slane %v340, 2
        %v485 = vrot.slane %v341, 2
        %v486 = vsel %vm453, %v484, %v485
        %v487 = vrot.slane %v342, 2
        %v488 = vsel %vm453, %v485, %v487
        %v489 = vrot.slane %v343, 2
        %v490 = vrot.slane %v344, 2
        %v491 = vsel %vm453, %v489, %v490
        %v492 = vrot.slane %v345, 2
        %v493 = vsel %vm453, %v490, %v492
        %v494 = vrot.slane %v346, 2
        %v495 = vrot.slane %v347, 2
        %v496 = vsel %vm453, %v494, %v495
        %v497 = vrot.slane %v348, 2
        %v498 = vsel %vm453, %v495, %v497
        %v499 = vrot.slane %v349, 2
        %v500 = vrot.slane %v350, 2
        %v501 = vsel %vm453, %v499, %v500
        %v502 = vrot.slane %v351, 2
        %v503 = vsel %vm453, %v500, %v502
        %v524 = vld [vmem:[%s2] sm:$0xff]
        %v525 = vld [vmem:[%s2 + $0x8] sm:$0xff]
        %v526 = vld [vmem:[%s2 + $0x10] sm:$0xff]
        %v527 = vld [vmem:[%s2 + $0x18] sm:$0xff]
        %v528 = vld [vmem:[%s2 + $0x20] sm:$0xff]
        %v529 = vld [vmem:[%s2 + $0x28] sm:$0xff]
        %v530 = vld [vmem:[%s2 + $0x30] sm:$0xff]
        %v531 = vld [vmem:[%s2 + $0x38] sm:$0xff]
        %v532 = vld [vmem:[%s2 + $0x40] sm:$0xff]
        %v533 = vld [vmem:[%s2 + $0x48] sm:$0xff]
        %v534 = vld [vmem:[%s2 + $0x50] sm:$0xff]
        %v535 = vld [vmem:[%s2 + $0x58] sm:$0xff]
        %v536 = vld [vmem:[%s2 + $0x60] sm:$0xff]
        %v537 = vld [vmem:[%s2 + $0x68] sm:$0xff]
        %v538 = vld [vmem:[%s2 + $0x70] sm:$0xff]
        %v539 = vld [vmem:[%s2 + $0x78] sm:$0xff]
        %v540 = vld [vmem:[%s2 + $0x80] sm:$0xff]
        %v541 = vld [vmem:[%s2 + $0x88] sm:$0xff]
        %v542 = vld [vmem:[%s2 + $0x90] sm:$0xff]
        %v543 = vld [vmem:[%s2 + $0x98] sm:$0xff]
        %v544 = vld [vmem:[%s2 + $0xa0] sm:$0xff]
        %v545 = vld [vmem:[%s2 + $0xa8] sm:$0xff]
        %v546 = vld [vmem:[%s2 + $0xb0] sm:$0xff]
        %v547 = vld [vmem:[%s2 + $0xb8] sm:$0xff]
        %v548 = vld [vmem:[%s2 + $0xc0] sm:$0xff]
        %v549 = vld [vmem:[%s2 + $0xc8] sm:$0xff]
        %v550 = vld [vmem:[%s2 + $0xd0] sm:$0xff]
        %v551 = vld [vmem:[%s2 + $0xd8] sm:$0xff]
        %v552 = vld [vmem:[%s2 + $0xe0] sm:$0xff]
        %v553 = vld [vmem:[%s2 + $0xe8] sm:$0xff]
        %v554 = vld [vmem:[%s2 + $0xf0] sm:$0xff]
        %v555 = vld [vmem:[%s2 + $0xf8] sm:$0xff]
        %v556 = vld [vmem:[%s2 + $0x100] sm:$0xff]
        %v557 = vld [vmem:[%s2 + $0x108] sm:$0xff]
        %v558 = vld [vmem:[%s2 + $0x110] sm:$0xff]
        %v559 = vld [vmem:[%s2 + $0x118] sm:$0xff]
        %v560 = vld [vmem:[%s2 + $0x120] sm:$0xff]
        %v561 = vld [vmem:[%s2 + $0x128] sm:$0xff]
        %v562 = vld [vmem:[%s2 + $0x130] sm:$0xff]
        %v563 = vld [vmem:[%s2 + $0x138] sm:$0xff]
        %v564 = vld [vmem:[%s2 + $0x140] sm:$0xff]
        %v565 = vld [vmem:[%s2 + $0x148] sm:$0xff]
        %v566 = vld [vmem:[%s2 + $0x150] sm:$0xff]
        %v567 = vld [vmem:[%s2 + $0x158] sm:$0xff]
        %v568 = vld [vmem:[%s2 + $0x160] sm:$0xff]
        %v569 = vld [vmem:[%s2 + $0x168] sm:$0xff]
        %v570 = vld [vmem:[%s2 + $0x170] sm:$0xff]
        %v571 = vld [vmem:[%s2 + $0x178] sm:$0xff]
        %s572 = sadd.s32 %s319, 1
        %s573 = smul.u32 %s572, 24
        %s574 = scalar_lea.vmem %s306, %s573
        %v575 = vld [vmem:[%s574] sm:$0xff]
        %v576 = vld [vmem:[%s574 + $0x8] sm:$0xff]
        %v577 = vld [vmem:[%s574 + $0x10] sm:$0x3]
        %v578 = vld [vmem:[%s574 + $0x18] sm:$0xff]
        %v579 = vld [vmem:[%s574 + $0x20] sm:$0xff]
        %v580 = vld [vmem:[%s574 + $0x28] sm:$0x3]
        %v581 = vld [vmem:[%s574 + $0x30] sm:$0xff]
        %v582 = vld [vmem:[%s574 + $0x38] sm:$0xff]
        %v583 = vld [vmem:[%s574 + $0x40] sm:$0x3]
        %v584 = vld [vmem:[%s574 + $0x48] sm:$0xff]
        %v585 = vld [vmem:[%s574 + $0x50] sm:$0xff]
        %v586 = vld [vmem:[%s574 + $0x58] sm:$0x3]
        %v587 = vld [vmem:[%s574 + $0x60] sm:$0xff]
        %v588 = vld [vmem:[%s574 + $0x68] sm:$0xff]
        %v589 = vld [vmem:[%s574 + $0x70] sm:$0x3]
        %v590 = vld [vmem:[%s574 + $0x78] sm:$0xff]
        %v591 = vld [vmem:[%s574 + $0x80] sm:$0xff]
        %v592 = vld [vmem:[%s574 + $0x88] sm:$0x3]
        %v593 = vld [vmem:[%s574 + $0x90] sm:$0xff]
        %v594 = vld [vmem:[%s574 + $0x98] sm:$0xff]
        %v595 = vld [vmem:[%s574 + $0xa0] sm:$0x3]
        %v596 = vld [vmem:[%s574 + $0xa8] sm:$0xff]
        %v597 = vld [vmem:[%s574 + $0xb0] sm:$0xff]
        %v598 = vld [vmem:[%s574 + $0xb8] sm:$0x3]
        %v599 = vld [vmem:[%s574 + $0xc0] sm:$0xff]
        %v600 = vld [vmem:[%s574 + $0xc8] sm:$0xff]
        %v601 = vld [vmem:[%s574 + $0xd0] sm:$0x3]
        %v602 = vld [vmem:[%s574 + $0xd8] sm:$0xff]
        %v603 = vld [vmem:[%s574 + $0xe0] sm:$0xff]
        %v604 = vld [vmem:[%s574 + $0xe8] sm:$0x3]
        %v635 = vrot.slane %v575, 1
        %v636 = vrot.slane %v576, 1
        %v637 = vsel %vm382, %v635, %v636
        %v638 = vrot.slane %v577, 1
        %v639 = vsel %vm382, %v636, %v638
        %v640 = vrot.slane %v578, 1
        %v641 = vrot.slane %v579, 1
        %v642 = vsel %vm382, %v640, %v641
        %v643 = vrot.slane %v580, 1
        %v644 = vsel %vm382, %v641, %v643
        %v645 = vrot.slane %v581, 1
        %v646 = vrot.slane %v582, 1
        %v647 = vsel %vm382, %v645, %v646
        %v648 = vrot.slane %v583, 1
        %v649 = vsel %vm382, %v646, %v648
        %v650 = vrot.slane %v584, 1
        %v651 = vrot.slane %v585, 1
        %v652 = vsel %vm382, %v650, %v651
        %v653 = vrot.slane %v586, 1
        %v654 = vsel %vm382, %v651, %v653
        %v655 = vrot.slane %v587, 1
        %v656 = vrot.slane %v588, 1
        %v657 = vsel %vm382, %v655, %v656
        %v658 = vrot.slane %v589, 1
        %v659 = vsel %vm382, %v656, %v658
        %v660 = vrot.slane %v590, 1
        %v661 = vrot.slane %v591, 1
        %v662 = vsel %vm382, %v660, %v661
        %v663 = vrot.slane %v592, 1
        %v664 = vsel %vm382, %v661, %v663
        %v665 = vrot.slane %v593, 1
        %v666 = vrot.slane %v594, 1
        %v667 = vsel %vm382, %v665, %v666
        %v668 = vrot.slane %v595, 1
        %v669 = vsel %vm382, %v666, %v668
        %v670 = vrot.slane %v596, 1
        %v671 = vrot.slane %v597, 1
        %v672 = vsel %vm382, %v670, %v671
        %v673 = vrot.slane %v598, 1
        %v674 = vsel %vm382, %v671, %v673
        %v675 = vrot.slane %v599, 1
        %v676 = vrot.slane %v600, 1
        %v677 = vsel %vm382, %v675, %v676
        %v678 = vrot.slane %v601, 1
        %v679 = vsel %vm382, %v676, %v678
        %v680 = vrot.slane %v602, 1
        %v681 = vrot.slane %v603, 1
        %v682 = vsel %vm382, %v680, %v681
        %v683 = vrot.slane %v604, 1
        %v684 = vsel %vm382, %v681, %v683
        %v705 = vrot.slane %v575, 2
        %v706 = vrot.slane %v576, 2
        %v707 = vsel %vm453, %v705, %v706
        %v708 = vrot.slane %v577, 2
        %v709 = vsel %vm453, %v706, %v708
        %v710 = vrot.slane %v578, 2
        %v711 = vrot.slane %v579, 2
        %v712 = vsel %vm453, %v710, %v711
        %v713 = vrot.slane %v580, 2
        %v714 = vsel %vm453, %v711, %v713
        %v715 = vrot.slane %v581, 2
        %v716 = vrot.slane %v582, 2
        %v717 = vsel %vm453, %v715, %v716
        %v718 = vrot.slane %v583, 2
        %v719 = vsel %vm453, %v716, %v718
        %v720 = vrot.slane %v584, 2
        %v721 = vrot.slane %v585, 2
        %v722 = vsel %vm453, %v720, %v721
        %v723 = vrot.slane %v586, 2
        %v724 = vsel %vm453, %v721, %v723
        %v725 = vrot.slane %v587, 2
        %v726 = vrot.slane %v588, 2
        %v727 = vsel %vm453, %v725, %v726
        %v728 = vrot.slane %v589, 2
        %v729 = vsel %vm453, %v726, %v728
        %v730 = vrot.slane %v590, 2
        %v731 = vrot.slane %v591, 2
        %v732 = vsel %vm453, %v730, %v731
        %v733 = vrot.slane %v592, 2
        %v734 = vsel %vm453, %v731, %v733
        %v735 = vrot.slane %v593, 2
        %v736 = vrot.slane %v594, 2
        %v737 = vsel %vm453, %v735, %v736
        %v738 = vrot.slane %v595, 2
        %v739 = vsel %vm453, %v736, %v738
        %v740 = vrot.slane %v596, 2
        %v741 = vrot.slane %v597, 2
        %v742 = vsel %vm453, %v740, %v741
        %v743 = vrot.slane %v598, 2
        %v744 = vsel %vm453, %v741, %v743
        %v745 = vrot.slane %v599, 2
        %v746 = vrot.slane %v600, 2
        %v747 = vsel %vm453, %v745, %v746
        %v748 = vrot.slane %v601, 2
        %v749 = vsel %vm453, %v746, %v748
        %v750 = vrot.slane %v602, 2
        %v751 = vrot.slane %v603, 2
        %v752 = vsel %vm453, %v750, %v751
        %v753 = vrot.slane %v604, 2
        %v754 = vsel %vm453, %v751, %v753
        %s775 = scalar_lea.vmem %s2, 384
        %v776 = vld [vmem:[%s775] sm:$0xff]
        %v777 = vld [vmem:[%s775 + $0x8] sm:$0xff]
        %v778 = vld [vmem:[%s775 + $0x10] sm:$0xff]
        %v779 = vld [vmem:[%s775 + $0x18] sm:$0xff]
        %v780 = vld [vmem:[%s775 + $0x20] sm:$0xff]
        %v781 = vld [vmem:[%s775 + $0x28] sm:$0xff]
        %v782 = vld [vmem:[%s775 + $0x30] sm:$0xff]
        %v783 = vld [vmem:[%s775 + $0x38] sm:$0xff]
        %v784 = vld [vmem:[%s775 + $0x40] sm:$0xff]
        %v785 = vld [vmem:[%s775 + $0x48] sm:$0xff]
        %v786 = vld [vmem:[%s775 + $0x50] sm:$0xff]
        %v787 = vld [vmem:[%s775 + $0x58] sm:$0xff]
        %v788 = vld [vmem:[%s775 + $0x60] sm:$0xff]
        %v789 = vld [vmem:[%s775 + $0x68] sm:$0xff]
        %v790 = vld [vmem:[%s775 + $0x70] sm:$0xff]
        %v791 = vld [vmem:[%s775 + $0x78] sm:$0xff]
        %v792 = vld [vmem:[%s775 + $0x80] sm:$0xff]
        %v793 = vld [vmem:[%s775 + $0x88] sm:$0xff]
        %v794 = vld [vmem:[%s775 + $0x90] sm:$0xff]
        %v795 = vld [vmem:[%s775 + $0x98] sm:$0xff]
        %v796 = vld [vmem:[%s775 + $0xa0] sm:$0xff]
        %v797 = vld [vmem:[%s775 + $0xa8] sm:$0xff]
        %v798 = vld [vmem:[%s775 + $0xb0] sm:$0xff]
        %v799 = vld [vmem:[%s775 + $0xb8] sm:$0xff]
        %v800 = vld [vmem:[%s775 + $0xc0] sm:$0xff]
        %v801 = vld [vmem:[%s775 + $0xc8] sm:$0xff]
        %v802 = vld [vmem:[%s775 + $0xd0] sm:$0xff]
        %v803 = vld [vmem:[%s775 + $0xd8] sm:$0xff]
        %v804 = vld [vmem:[%s775 + $0xe0] sm:$0xff]
        %v805 = vld [vmem:[%s775 + $0xe8] sm:$0xff]
        %v806 = vld [vmem:[%s775 + $0xf0] sm:$0xff]
        %v807 = vld [vmem:[%s775 + $0xf8] sm:$0xff]
        %v808 = vld [vmem:[%s775 + $0x100] sm:$0xff]
        %v809 = vld [vmem:[%s775 + $0x108] sm:$0xff]
        %v810 = vld [vmem:[%s775 + $0x110] sm:$0xff]
        %v811 = vld [vmem:[%s775 + $0x118] sm:$0xff]
        %v812 = vld [vmem:[%s775 + $0x120] sm:$0xff]
        %v813 = vld [vmem:[%s775 + $0x128] sm:$0xff]
        %v814 = vld [vmem:[%s775 + $0x130] sm:$0xff]
        %v815 = vld [vmem:[%s775 + $0x138] sm:$0xff]
        %v816 = vld [vmem:[%s775 + $0x140] sm:$0xff]
        %v817 = vld [vmem:[%s775 + $0x148] sm:$0xff]
        %v818 = vld [vmem:[%s775 + $0x150] sm:$0xff]
        %v819 = vld [vmem:[%s775 + $0x158] sm:$0xff]
        %v820 = vld [vmem:[%s775 + $0x160] sm:$0xff]
        %v821 = vld [vmem:[%s775 + $0x168] sm:$0xff]
        %v822 = vld [vmem:[%s775 + $0x170] sm:$0xff]
        %v823 = vld [vmem:[%s775 + $0x178] sm:$0xff]
        %824 = vmatprep.subr.mxu0 0.0
        %825 = vmatpush1.msra.mxu0 %v776
        %826 = vmatprep.subr.mxu0 0.0
        %827 = vmatpush1.msra.mxu0 %v777
        %828 = vmatprep.subr.mxu0 0.0
        %829 = vmatpush1.msra.mxu0 %v778
        %830 = vmatprep.subr.mxu0 0.0
        %831 = vmatpush1.msra.mxu0 %v779
        %832 = vmatprep.subr.mxu0 0.0
        %833 = vmatpush1.msra.mxu0 %v780
        %834 = vmatprep.subr.mxu0 0.0
        %835 = vmatpush1.msra.mxu0 %v781
        %836 = vmatprep.subr.mxu0 0.0
        %837 = vmatpush1.msra.mxu0 %v782
        %838 = vmatprep.subr.mxu0 0.0
        %839 = vmatpush1.msra.mxu0 %v783
        %840 = vmatprep.subr.mxu0 0.0
        %841 = vmatpush1.msra.mxu0 %v784
        %842 = vmatprep.subr.mxu0 0.0
        %843 = vmatpush1.msra.mxu0 %v785
        %844 = vmatprep.subr.mxu0 0.0
        %845 = vmatpush1.msra.mxu0 %v786
        %846 = vmatprep.subr.mxu0 0.0
        %847 = vmatpush1.msra.mxu0 %v787
        %848 = vmatprep.subr.mxu0 0.0
        %849 = vmatpush1.msra.mxu0 %v788
        %850 = vmatprep.subr.mxu0 0.0
        %851 = vmatpush1.msra.mxu0 %v789
        %852 = vmatprep.subr.mxu0 0.0
        %853 = vmatpush1.msra.mxu0 %v790
        %854 = vmatprep.subr.mxu0 0.0
        %855 = vmatpush1.msra.mxu0 %v791
        %856 = vmatprep.subr.mxu0 0.0
        %857 = vmatpush1.msra.mxu0 %v792
        %858 = vmatprep.subr.mxu0 0.0
        %859 = vmatpush1.msra.mxu0 %v793
        %860 = vmatprep.subr.mxu0 0.0
        %861 = vmatpush1.msra.mxu0 %v794
        %862 = vmatprep.subr.mxu0 0.0
        %863 = vmatpush1.msra.mxu0 %v795
        %864 = vmatprep.subr.mxu0 0.0
        %865 = vmatpush1.msra.mxu0 %v796
        %866 = vmatprep.subr.mxu0 0.0
        %867 = vmatpush1.msra.mxu0 %v797
        %868 = vmatprep.subr.mxu0 0.0
        %869 = vmatpush1.msra.mxu0 %v798
        %870 = vmatprep.subr.mxu0 0.0
        %871 = vmatpush1.msra.mxu0 %v799
        %872 = vmatprep.subr.mxu0 0.0
        %873 = vmatpush1.msra.mxu0 %v800
        %874 = vmatprep.subr.mxu0 0.0
        %875 = vmatpush1.msra.mxu0 %v801
        %876 = vmatprep.subr.mxu0 0.0
        %877 = vmatpush1.msra.mxu0 %v802
        %878 = vmatprep.subr.mxu0 0.0
        %879 = vmatpush1.msra.mxu0 %v803
        %880 = vmatprep.subr.mxu0 0.0
        %881 = vmatpush1.msra.mxu0 %v804
        %882 = vmatprep.subr.mxu0 0.0
        %883 = vmatpush1.msra.mxu0 %v805
        %884 = vmatprep.subr.mxu0 0.0
        %885 = vmatpush1.msra.mxu0 %v806
        %886 = vmatprep.subr.mxu0 0.0
        %887 = vmatpush1.msra.mxu0 %v807
        %888 = vmatprep.mubr.f32.mxu0 %v637
        %889 = vmatmul.mubr.f32.gmra.mrb[0].mxu0 %v575
        %v890 = vpop.f32.mrb[0].mxu0
        %v891 = vadd.f32 0.0, %v890
        %v892 = vpop.f32.mrb[0].mxu0
        %893 = vmatprep.mubr.f32.mxu0 %v639
        %894 = vmatmul.mubr.f32.gmra.mrb[0].mxu0 %v576
        %v895 = vpop.f32.mrb[0].mxu0
        %v896 = vadd.f32 0.0, %v895
        %v897 = vpop.f32.mrb[0].mxu0
        %898 = vmatprep.mubr.f32.mxu0 %v642
        %899 = vmatmul.mubr.f32.gmra.mrb[0].mxu0 %v578
        %v900 = vpop.f32.mrb[0].mxu0
        %v901 = vadd.f32 0.0, %v900
        %v902 = vpop.f32.mrb[0].mxu0
        %903 = vmatprep.mubr.f32.mxu0 %v644
        %904 = vmatmul.mubr.f32.gmra.mrb[0].mxu0 %v579
        %v905 = vpop.f32.mrb[0].mxu0
        %v906 = vadd.f32 0.0, %v905
        %v907 = vpop.f32.mrb[0].mxu0
        %908 = vmatprep.mubr.f32.mxu0 %v647
        %909 = vmatmul.mubr.f32.gmra.mrb[0].mxu0 %v581
        %v910 = vpop.f32.mrb[0].mxu0
        %v911 = vadd.f32 0.0, %v910
        %v912 = vpop.f32.mrb[0].mxu0
        %913 = vmatprep.mubr.f32.mxu0 %v649
        %914 = vmatmul.mubr.f32.gmra.mrb[0].mxu0 %v582
        %v915 = vpop.f32.mrb[0].mxu0
        %v916 = vadd.f32 0.0, %v915
        %v917 = vpop.f32.mrb[0].mxu0
        %918 = vmatprep.mubr.f32.mxu0 %v652
        %919 = vmatmul.mubr.f32.gmra.mrb[0].mxu0 %v584
        %v920 = vpop.f32.mrb[0].mxu0
        %v921 = vadd.f32 0.0, %v920
        %v922 = vpop.f32.mrb[0].mxu0
        %923 = vmatprep.mubr.f32.mxu0 %v654
        %924 = vmatmul.mubr.f32.gmra.mrb[0].mxu0 %v585
        %v925 = vpop.f32.mrb[0].mxu0
        %v926 = vadd.f32 0.0, %v925
        %v927 = vpop.f32.mrb[0].mxu0
        %928 = vmatprep.mubr.f32.mxu0 %v657
        %929 = vmatmul.mubr.f32.gmra.mrb[0].mxu0 %v587
        %v930 = vpop.f32.mrb[0].mxu0
        %v931 = vadd.f32 0.0, %v930
        %v932 = vpop.f32.mrb[0].mxu0
        %933 = vmatprep.mubr.f32.mxu0 %v659
        %934 = vmatmul.mubr.f32.gmra.mrb[0].mxu0 %v588
        %v935 = vpop.f32.mrb[0].mxu0
        %v936 = vadd.f32 0.0, %v935
        %v937 = vpop.f32.mrb[0].mxu0
        %938 = vmatprep.mubr.f32.mxu0 %v662
        %939 = vmatmul.mubr.f32.gmra.mrb[0].mxu0 %v590
        %v940 = vpop.f32.mrb[0].mxu0
        %v941 = vadd.f32 0.0, %v940
        %v942 = vpop.f32.mrb[0].mxu0
        %943 = vmatprep.mubr.f32.mxu0 %v664
        %944 = vmatmul.mubr.f32.gmra.mrb[0].mxu0 %v591
        %v945 = vpop.f32.mrb[0].mxu0
        %v946 = vadd.f32 0.0, %v945
        %v947 = vpop.f32.mrb[0].mxu0
        %948 = vmatprep.mubr.f32.mxu0 %v667
        %949 = vmatmul.mubr.f32.gmra.mrb[0].mxu0 %v593
        %v950 = vpop.f32.mrb[0].mxu0
        %v951 = vadd.f32 0.0, %v950
        %v952 = vpop.f32.mrb[0].mxu0
        %953 = vmatprep.mubr.f32.mxu0 %v669
        %954 = vmatmul.mubr.f32.gmra.mrb[0].mxu0 %v594
        %v955 = vpop.f32.mrb[0].mxu0
        %v956 = vadd.f32 0.0, %v955
        %v957 = vpop.f32.mrb[0].mxu0
        %958 = vmatprep.mubr.f32.mxu0 %v672
        %959 = vmatmul.mubr.f32.gmra.mrb[0].mxu0 %v596
        %v960 = vpop.f32.mrb[0].mxu0
        %v961 = vadd.f32 0.0, %v960
        %v962 = vpop.f32.mrb[0].mxu0
        %963 = vmatprep.mubr.f32.mxu0 %v674
        %964 = vmatmul.mubr.f32.gmra.mrb[0].mxu0 %v597
        %v965 = vpop.f32.mrb[0].mxu0
        %v966 = vadd.f32 0.0, %v965
        %v967 = vpop.f32.mrb[0].mxu0
        %968 = vmatprep.mubr.f32.mxu0 %v677
        %969 = vmatmul.mubr.f32.gmra.mrb[0].mxu0 %v599
        %v970 = vpop.f32.mrb[0].mxu0
        %v971 = vadd.f32 0.0, %v970
        %v972 = vpop.f32.mrb[0].mxu0
        %973 = vmatprep.mubr.f32.mxu0 %v679
        %974 = vmatmul.mubr.f32.gmra.mrb[0].mxu0 %v600
        %v975 = vpop.f32.mrb[0].mxu0
        %v976 = vadd.f32 0.0, %v975
        %v977 = vpop.f32.mrb[0].mxu0
        %978 = vmatprep.mubr.f32.mxu0 %v682
        %979 = vmatmul.mubr.f32.gmra.mrb[0].mxu0 %v602
        %v980 = vpop.f32.mrb[0].mxu0
        %v981 = vadd.f32 0.0, %v980
        %v982 = vpop.f32.mrb[0].mxu0
        %983 = vmatprep.mubr.f32.mxu0 %v684
        %984 = vmatmul.mubr.f32.gmra.mrb[0].mxu0 %v603
        %v985 = vpop.f32.mrb[0].mxu0
        %v986 = vadd.f32 0.0, %v985
        %v987 = vpop.f32.mrb[0].mxu0
        %988 = vdwg.mxu0
        %989 = vmatprep.subr.mxu0 0.0
        %990 = vmatpush1.msra.mxu0 %v808
        %991 = vmatprep.subr.mxu0 0.0
        %992 = vmatpush1.msra.mxu0 %v809
        %993 = vmatprep.subr.mxu0 0.0
        %994 = vmatpush1.msra.mxu0 %v810
        %995 = vmatprep.subr.mxu0 0.0
        %996 = vmatpush1.msra.mxu0 %v811
        %997 = vmatprep.subr.mxu0 0.0
        %998 = vmatpush1.msra.mxu0 %v812
        %999 = vmatprep.subr.mxu0 0.0
        %1000 = vmatpush1.msra.mxu0 %v813
        %1001 = vmatprep.subr.mxu0 0.0
        %1002 = vmatpush1.msra.mxu0 %v814
        %1003 = vmatprep.subr.mxu0 0.0
        %1004 = vmatpush1.msra.mxu0 %v815
        %1005 = vmatprep.subr.mxu0 0.0
        %1006 = vmatpush1.msra.mxu0 %v816
        %1007 = vmatprep.subr.mxu0 0.0
        %1008 = vmatpush1.msra.mxu0 %v817
        %1009 = vmatprep.subr.mxu0 0.0
        %1010 = vmatpush1.msra.mxu0 %v818
        %1011 = vmatprep.subr.mxu0 0.0
        %1012 = vmatpush1.msra.mxu0 %v819
        %1013 = vmatprep.subr.mxu0 0.0
        %1014 = vmatpush1.msra.mxu0 %v820
        %1015 = vmatprep.subr.mxu0 0.0
        %1016 = vmatpush1.msra.mxu0 %v821
        %1017 = vmatprep.subr.mxu0 0.0
        %1018 = vmatpush1.msra.mxu0 %v822
        %1019 = vmatprep.subr.mxu0 0.0
        %1020 = vmatpush1.msra.mxu0 %v823
        %1021 = vmatprep.subr.mxu0 0.0
        %1022 = vmatpush1.msra.mxu0 0.0
        %1023 = vmatprep.subr.mxu0 0.0
        %1024 = vmatpush1.msra.mxu0 0.0
        %1025 = vmatprep.subr.mxu0 0.0
        %1026 = vmatpush1.msra.mxu0 0.0
        %1027 = vmatprep.subr.mxu0 0.0
        %1028 = vmatpush1.msra.mxu0 0.0
        %1029 = vmatprep.subr.mxu0 0.0
        %1030 = vmatpush1.msra.mxu0 0.0
        %1031 = vmatprep.subr.mxu0 0.0
        %1032 = vmatpush1.msra.mxu0 0.0
        %1033 = vmatprep.subr.mxu0 0.0
        %1034 = vmatpush1.msra.mxu0 0.0
        %1035 = vmatprep.subr.mxu0 0.0
        %1036 = vmatpush1.msra.mxu0 0.0
        %1037 = vmatprep.subr.mxu0 0.0
        %1038 = vmatpush1.msra.mxu0 0.0
        %1039 = vmatprep.subr.mxu0 0.0
        %1040 = vmatpush1.msra.mxu0 0.0
        %1041 = vmatprep.subr.mxu0 0.0
        %1042 = vmatpush1.msra.mxu0 0.0
        %1043 = vmatprep.subr.mxu0 0.0
        %1044 = vmatpush1.msra.mxu0 0.0
        %1045 = vmatprep.subr.mxu0 0.0
        %1046 = vmatpush1.msra.mxu0 0.0
        %1047 = vmatprep.subr.mxu0 0.0
        %1048 = vmatpush1.msra.mxu0 0.0
        %1049 = vmatprep.subr.mxu0 0.0
        %1050 = vmatpush1.msra.mxu0 0.0
        %1051 = vmatprep.subr.mxu0 0.0
        %1052 = vmatpush1.msra.mxu0 0.0
        %1053 = vmatprep.mubr.f32.mxu0 0.0
        %1054 = vmatmul.mubr.f32.gmra.mrb[0].mxu0 %v707
        %v1055 = vpop.f32.mrb[0].mxu0
        %v1056 = vadd.f32 %v891, %v1055
        %v1057 = vpop.f32.mrb[0].mxu0
        %1058 = vmatprep.mubr.f32.mxu0 0.0
        %1059 = vmatmul.mubr.f32.gmra.mrb[0].mxu0 %v709
        %v1060 = vpop.f32.mrb[0].mxu0
        %v1061 = vadd.f32 %v896, %v1060
        %v1062 = vpop.f32.mrb[0].mxu0
        %1063 = vmatprep.mubr.f32.mxu0 0.0
        %1064 = vmatmul.mubr.f32.gmra.mrb[0].mxu0 %v712
        %v1065 = vpop.f32.mrb[0].mxu0
        %v1066 = vadd.f32 %v901, %v1065
        %v1067 = vpop.f32.mrb[0].mxu0
        %1068 = vmatprep.mubr.f32.mxu0 0.0
        %1069 = vmatmul.mubr.f32.gmra.mrb[0].mxu0 %v714
        %v1070 = vpop.f32.mrb[0].mxu0
        %v1071 = vadd.f32 %v906, %v1070
        %v1072 = vpop.f32.mrb[0].mxu0
        %1073 = vmatprep.mubr.f32.mxu0 0.0
        %1074 = vmatmul.mubr.f32.gmra.mrb[0].mxu0 %v717
        %v1075 = vpop.f32.mrb[0].mxu0
        %v1076 = vadd.f32 %v911, %v1075
        %v1077 = vpop.f32.mrb[0].mxu0
        %1078 = vmatprep.mubr.f32.mxu0 0.0
        %1079 = vmatmul.mubr.f32.gmra.mrb[0].mxu0 %v719
        %v1080 = vpop.f32.mrb[0].mxu0
        %v1081 = vadd.f32 %v916, %v1080
        %v1082 = vpop.f32.mrb[0].mxu0
        %1083 = vmatprep.mubr.f32.mxu0 0.0
        %1084 = vmatmul.mubr.f32.gmra.mrb[0].mxu0 %v722
        %v1085 = vpop.f32.mrb[0].mxu0
        %v1086 = vadd.f32 %v921, %v1085
        %v1087 = vpop.f32.mrb[0].mxu0
        %1088 = vmatprep.mubr.f32.mxu0 0.0
        %1089 = vmatmul.mubr.f32.gmra.mrb[0].mxu0 %v724
        %v1090 = vpop.f32.mrb[0].mxu0
        %v1091 = vadd.f32 %v926, %v1090
        %v1092 = vpop.f32.mrb[0].mxu0
        %1093 = vmatprep.mubr.f32.mxu0 0.0
        %1094 = vmatmul.mubr.f32.gmra.mrb[0].mxu0 %v727
        %v1095 = vpop.f32.mrb[0].mxu0
        %v1096 = vadd.f32 %v931, %v1095
        %v1097 = vpop.f32.mrb[0].mxu0
        %1098 = vmatprep.mubr.f32.mxu0 0.0
        %1099 = vmatmul.mubr.f32.gmra.mrb[0].mxu0 %v729
        %v1100 = vpop.f32.mrb[0].mxu0
        %v1101 = vadd.f32 %v936, %v1100
        %v1102 = vpop.f32.mrb[0].mxu0
        %1103 = vmatprep.mubr.f32.mxu0 0.0
        %1104 = vmatmul.mubr.f32.gmra.mrb[0].mxu0 %v732
        %v1105 = vpop.f32.mrb[0].mxu0
        %v1106 = vadd.f32 %v941, %v1105
        %v1107 = vpop.f32.mrb[0].mxu0
        %1108 = vmatprep.mubr.f32.mxu0 0.0
        %1109 = vmatmul.mubr.f32.gmra.mrb[0].mxu0 %v734
        %v1110 = vpop.f32.mrb[0].mxu0
        %v1111 = vadd.f32 %v946, %v1110
        %v1112 = vpop.f32.mrb[0].mxu0
        %1113 = vmatprep.mubr.f32.mxu0 0.0
        %1114 = vmatmul.mubr.f32.gmra.mrb[0].mxu0 %v737
        %v1115 = vpop.f32.mrb[0].mxu0
        %v1116 = vadd.f32 %v951, %v1115
        %v1117 = vpop.f32.mrb[0].mxu0
        %1118 = vmatprep.mubr.f32.mxu0 0.0
        %1119 = vmatmul.mubr.f32.gmra.mrb[0].mxu0 %v739
        %v1120 = vpop.f32.mrb[0].mxu0
        %v1121 = vadd.f32 %v956, %v1120
        %v1122 = vpop.f32.mrb[0].mxu0
        %1123 = vmatprep.mubr.f32.mxu0 0.0
        %1124 = vmatmul.mubr.f32.gmra.mrb[0].mxu0 %v742
        %v1125 = vpop.f32.mrb[0].mxu0
        %v1126 = vadd.f32 %v961, %v1125
        %v1127 = vpop.f32.mrb[0].mxu0
        %1128 = vmatprep.mubr.f32.mxu0 0.0
        %1129 = vmatmul.mubr.f32.gmra.mrb[0].mxu0 %v744
        %v1130 = vpop.f32.mrb[0].mxu0
        %v1131 = vadd.f32 %v966, %v1130
        %v1132 = vpop.f32.mrb[0].mxu0
        %1133 = vmatprep.mubr.f32.mxu0 0.0
        %1134 = vmatmul.mubr.f32.gmra.mrb[0].mxu0 %v747
        %v1135 = vpop.f32.mrb[0].mxu0
        %v1136 = vadd.f32 %v971, %v1135
        %v1137 = vpop.f32.mrb[0].mxu0
        %1138 = vmatprep.mubr.f32.mxu0 0.0
        %1139 = vmatmul.mubr.f32.gmra.mrb[0].mxu0 %v749
        %v1140 = vpop.f32.mrb[0].mxu0
        %v1141 = vadd.f32 %v976, %v1140
        %v1142 = vpop.f32.mrb[0].mxu0
        %1143 = vmatprep.mubr.f32.mxu0 0.0
        %1144 = vmatmul.mubr.f32.gmra.mrb[0].mxu0 %v752
        %v1145 = vpop.f32.mrb[0].mxu0
        %v1146 = vadd.f32 %v981, %v1145
        %v1147 = vpop.f32.mrb[0].mxu0
        %1148 = vmatprep.mubr.f32.mxu0 0.0
        %1149 = vmatmul.mubr.f32.gmra.mrb[0].mxu0 %v754
        %v1150 = vpop.f32.mrb[0].mxu0
        %v1151 = vadd.f32 %v986, %v1150
        %v1152 = vpop.f32.mrb[0].mxu0
        %1153 = vdwg.mxu0
        %1154 = vmatprep.subr.mxu0 0.0
        %1155 = vmatpush1.msra.mxu0 %v524
        %1156 = vmatprep.subr.mxu0 0.0
        %1157 = vmatpush1.msra.mxu0 %v525
        %1158 = vmatprep.subr.mxu0 0.0
        %1159 = vmatpush1.msra.mxu0 %v526
        %1160 = vmatprep.subr.mxu0 0.0
        %1161 = vmatpush1.msra.mxu0 %v527
        %1162 = vmatprep.subr.mxu0 0.0
        %1163 = vmatpush1.msra.mxu0 %v528
        %1164 = vmatprep.subr.mxu0 0.0
        %1165 = vmatpush1.msra.mxu0 %v529
        %1166 = vmatprep.subr.mxu0 0.0
        %1167 = vmatpush1.msra.mxu0 %v530
        %1168 = vmatprep.subr.mxu0 0.0
        %1169 = vmatpush1.msra.mxu0 %v531
        %1170 = vmatprep.subr.mxu0 0.0
        %1171 = vmatpush1.msra.mxu0 %v532
        %1172 = vmatprep.subr.mxu0 0.0
        %1173 = vmatpush1.msra.mxu0 %v533
        %1174 = vmatprep.subr.mxu0 0.0
        %1175 = vmatpush1.msra.mxu0 %v534
        %1176 = vmatprep.subr.mxu0 0.0
        %1177 = vmatpush1.msra.mxu0 %v535
        %1178 = vmatprep.subr.mxu0 0.0
        %1179 = vmatpush1.msra.mxu0 %v536
        %1180 = vmatprep.subr.mxu0 0.0
        %1181 = vmatpush1.msra.mxu0 %v537
        %1182 = vmatprep.subr.mxu0 0.0
        %1183 = vmatpush1.msra.mxu0 %v538
        %1184 = vmatprep.subr.mxu0 0.0
        %1185 = vmatpush1.msra.mxu0 %v539
        %1186 = vmatprep.subr.mxu0 0.0
        %1187 = vmatpush1.msra.mxu0 %v540
        %1188 = vmatprep.subr.mxu0 0.0
        %1189 = vmatpush1.msra.mxu0 %v541
        %1190 = vmatprep.subr.mxu0 0.0
        %1191 = vmatpush1.msra.mxu0 %v542
        %1192 = vmatprep.subr.mxu0 0.0
        %1193 = vmatpush1.msra.mxu0 %v543
        %1194 = vmatprep.subr.mxu0 0.0
        %1195 = vmatpush1.msra.mxu0 %v544
        %1196 = vmatprep.subr.mxu0 0.0
        %1197 = vmatpush1.msra.mxu0 %v545
        %1198 = vmatprep.subr.mxu0 0.0
        %1199 = vmatpush1.msra.mxu0 %v546
        %1200 = vmatprep.subr.mxu0 0.0
        %1201 = vmatpush1.msra.mxu0 %v547
        %1202 = vmatprep.subr.mxu0 0.0
        %1203 = vmatpush1.msra.mxu0 %v548
        %1204 = vmatprep.subr.mxu0 0.0
        %1205 = vmatpush1.msra.mxu0 %v549
        %1206 = vmatprep.subr.mxu0 0.0
        %1207 = vmatpush1.msra.mxu0 %v550
        %1208 = vmatprep.subr.mxu0 0.0
        %1209 = vmatpush1.msra.mxu0 %v551
        %1210 = vmatprep.subr.mxu0 0.0
        %1211 = vmatpush1.msra.mxu0 %v552
        %1212 = vmatprep.subr.mxu0 0.0
        %1213 = vmatpush1.msra.mxu0 %v553
        %1214 = vmatprep.subr.mxu0 0.0
        %1215 = vmatpush1.msra.mxu0 %v554
        %1216 = vmatprep.subr.mxu0 0.0
        %1217 = vmatpush1.msra.mxu0 %v555
        %1218 = vmatprep.mubr.f32.mxu0 %v385
        %1219 = vmatmul.mubr.f32.gmra.mrb[0].mxu0 %v322
        %v1220 = vpop.f32.mrb[0].mxu0
        %v1221 = vadd.f32 %v1056, %v1220
        %v1222 = vpop.f32.mrb[0].mxu0
        %1223 = vmatprep.mubr.f32.mxu0 %v387
        %1224 = vmatmul.mubr.f32.gmra.mrb[0].mxu0 %v323
        %v1225 = vpop.f32.mrb[0].mxu0
        %v1226 = vadd.f32 %v1061, %v1225
        %v1227 = vpop.f32.mrb[0].mxu0
        %1228 = vmatprep.mubr.f32.mxu0 %v390
        %1229 = vmatmul.mubr.f32.gmra.mrb[0].mxu0 %v325
        %v1230 = vpop.f32.mrb[0].mxu0
        %v1231 = vadd.f32 %v1066, %v1230
        %v1232 = vpop.f32.mrb[0].mxu0
        %1233 = vmatprep.mubr.f32.mxu0 %v392
        %1234 = vmatmul.mubr.f32.gmra.mrb[0].mxu0 %v326
        %v1235 = vpop.f32.mrb[0].mxu0
        %v1236 = vadd.f32 %v1071, %v1235
        %v1237 = vpop.f32.mrb[0].mxu0
        %1238 = vmatprep.mubr.f32.mxu0 %v395
        %1239 = vmatmul.mubr.f32.gmra.mrb[0].mxu0 %v328
        %v1240 = vpop.f32.mrb[0].mxu0
        %v1241 = vadd.f32 %v1076, %v1240
        %v1242 = vpop.f32.mrb[0].mxu0
        %1243 = vmatprep.mubr.f32.mxu0 %v397
        %1244 = vmatmul.mubr.f32.gmra.mrb[0].mxu0 %v329
        %v1245 = vpop.f32.mrb[0].mxu0
        %v1246 = vadd.f32 %v1081, %v1245
        %v1247 = vpop.f32.mrb[0].mxu0
        %1248 = vmatprep.mubr.f32.mxu0 %v400
        %1249 = vmatmul.mubr.f32.gmra.mrb[0].mxu0 %v331
        %v1250 = vpop.f32.mrb[0].mxu0
        %v1251 = vadd.f32 %v1086, %v1250
        %v1252 = vpop.f32.mrb[0].mxu0
        %1253 = vmatprep.mubr.f32.mxu0 %v402
        %1254 = vmatmul.mubr.f32.gmra.mrb[0].mxu0 %v332
        %v1255 = vpop.f32.mrb[0].mxu0
        %v1256 = vadd.f32 %v1091, %v1255
        %v1257 = vpop.f32.mrb[0].mxu0
        %1258 = vmatprep.mubr.f32.mxu0 %v405
        %1259 = vmatmul.mubr.f32.gmra.mrb[0].mxu0 %v334
        %v1260 = vpop.f32.mrb[0].mxu0
        %v1261 = vadd.f32 %v1096, %v1260
        %v1262 = vpop.f32.mrb[0].mxu0
        %1263 = vmatprep.mubr.f32.mxu0 %v407
        %1264 = vmatmul.mubr.f32.gmra.mrb[0].mxu0 %v335
        %v1265 = vpop.f32.mrb[0].mxu0
        %v1266 = vadd.f32 %v1101, %v1265
        %v1267 = vpop.f32.mrb[0].mxu0
        %1268 = vmatprep.mubr.f32.mxu0 %v410
        %1269 = vmatmul.mubr.f32.gmra.mrb[0].mxu0 %v337
        %v1270 = vpop.f32.mrb[0].mxu0
        %v1271 = vadd.f32 %v1106, %v1270
        %v1272 = vpop.f32.mrb[0].mxu0
        %1273 = vmatprep.mubr.f32.mxu0 %v412
        %1274 = vmatmul.mubr.f32.gmra.mrb[0].mxu0 %v338
        %v1275 = vpop.f32.mrb[0].mxu0
        %v1276 = vadd.f32 %v1111, %v1275
        %v1277 = vpop.f32.mrb[0].mxu0
        %1278 = vmatprep.mubr.f32.mxu0 %v415
        %1279 = vmatmul.mubr.f32.gmra.mrb[0].mxu0 %v340
        %v1280 = vpop.f32.mrb[0].mxu0
        %v1281 = vadd.f32 %v1116, %v1280
        %v1282 = vpop.f32.mrb[0].mxu0
        %1283 = vmatprep.mubr.f32.mxu0 %v417
        %1284 = vmatmul.mubr.f32.gmra.mrb[0].mxu0 %v341
        %v1285 = vpop.f32.mrb[0].mxu0
        %v1286 = vadd.f32 %v1121, %v1285
        %v1287 = vpop.f32.mrb[0].mxu0
        %1288 = vmatprep.mubr.f32.mxu0 %v420
        %1289 = vmatmul.mubr.f32.gmra.mrb[0].mxu0 %v343
        %v1290 = vpop.f32.mrb[0].mxu0
        %v1291 = vadd.f32 %v1126, %v1290
        %v1292 = vpop.f32.mrb[0].mxu0
        %1293 = vmatprep.mubr.f32.mxu0 %v422
        %1294 = vmatmul.mubr.f32.gmra.mrb[0].mxu0 %v344
        %v1295 = vpop.f32.mrb[0].mxu0
        %v1296 = vadd.f32 %v1131, %v1295
        %v1297 = vpop.f32.mrb[0].mxu0
        %1298 = vmatprep.mubr.f32.mxu0 %v425
        %1299 = vmatmul.mubr.f32.gmra.mrb[0].mxu0 %v346
        %v1300 = vpop.f32.mrb[0].mxu0
        %v1301 = vadd.f32 %v1136, %v1300
        %v1302 = vpop.f32.mrb[0].mxu0
        %1303 = vmatprep.mubr.f32.mxu0 %v427
        %1304 = vmatmul.mubr.f32.gmra.mrb[0].mxu0 %v347
        %v1305 = vpop.f32.mrb[0].mxu0
        %v1306 = vadd.f32 %v1141, %v1305
        %v1307 = vpop.f32.mrb[0].mxu0
        %1308 = vmatprep.mubr.f32.mxu0 %v430
        %1309 = vmatmul.mubr.f32.gmra.mrb[0].mxu0 %v349
        %v1310 = vpop.f32.mrb[0].mxu0
        %v1311 = vadd.f32 %v1146, %v1310
        %v1312 = vpop.f32.mrb[0].mxu0
        %1313 = vmatprep.mubr.f32.mxu0 %v432
        %1314 = vmatmul.mubr.f32.gmra.mrb[0].mxu0 %v350
        %v1315 = vpop.f32.mrb[0].mxu0
        %v1316 = vadd.f32 %v1151, %v1315
        %v1317 = vpop.f32.mrb[0].mxu0
        %1318 = vdwg.mxu0
        %1319 = vmatprep.subr.mxu0 0.0
        %1320 = vmatpush1.msra.mxu0 %v556
        %1321 = vmatprep.subr.mxu0 0.0
        %1322 = vmatpush1.msra.mxu0 %v557
        %1323 = vmatprep.subr.mxu0 0.0
        %1324 = vmatpush1.msra.mxu0 %v558
        %1325 = vmatprep.subr.mxu0 0.0
        %1326 = vmatpush1.msra.mxu0 %v559
        %1327 = vmatprep.subr.mxu0 0.0
        %1328 = vmatpush1.msra.mxu0 %v560
        %1329 = vmatprep.subr.mxu0 0.0
        %1330 = vmatpush1.msra.mxu0 %v561
        %1331 = vmatprep.subr.mxu0 0.0
        %1332 = vmatpush1.msra.mxu0 %v562
        %1333 = vmatprep.subr.mxu0 0.0
        %1334 = vmatpush1.msra.mxu0 %v563
        %1335 = vmatprep.subr.mxu0 0.0
        %1336 = vmatpush1.msra.mxu0 %v564
        %1337 = vmatprep.subr.mxu0 0.0
        %1338 = vmatpush1.msra.mxu0 %v565
        %1339 = vmatprep.subr.mxu0 0.0
        %1340 = vmatpush1.msra.mxu0 %v566
        %1341 = vmatprep.subr.mxu0 0.0
        %1342 = vmatpush1.msra.mxu0 %v567
        %1343 = vmatprep.subr.mxu0 0.0
        %1344 = vmatpush1.msra.mxu0 %v568
        %1345 = vmatprep.subr.mxu0 0.0
        %1346 = vmatpush1.msra.mxu0 %v569
        %1347 = vmatprep.subr.mxu0 0.0
        %1348 = vmatpush1.msra.mxu0 %v570
        %1349 = vmatprep.subr.mxu0 0.0
        %1350 = vmatpush1.msra.mxu0 %v571
        %1351 = vmatprep.subr.mxu0 0.0
        %1352 = vmatpush1.msra.mxu0 0.0
        %1353 = vmatprep.subr.mxu0 0.0
        %1354 = vmatpush1.msra.mxu0 0.0
        %1355 = vmatprep.subr.mxu0 0.0
        %1356 = vmatpush1.msra.mxu0 0.0
        %1357 = vmatprep.subr.mxu0 0.0
        %1358 = vmatpush1.msra.mxu0 0.0
        %1359 = vmatprep.subr.mxu0 0.0
        %1360 = vmatpush1.msra.mxu0 0.0
        %1361 = vmatprep.subr.mxu0 0.0
        %1362 = vmatpush1.msra.mxu0 0.0
        %1363 = vmatprep.subr.mxu0 0.0
        %1364 = vmatpush1.msra.mxu0 0.0
        %1365 = vmatprep.subr.mxu0 0.0
        %1366 = vmatpush1.msra.mxu0 0.0
        %1367 = vmatprep.subr.mxu0 0.0
        %1368 = vmatpush1.msra.mxu0 0.0
        %1369 = vmatprep.subr.mxu0 0.0
        %1370 = vmatpush1.msra.mxu0 0.0
        %1371 = vmatprep.subr.mxu0 0.0
        %1372 = vmatpush1.msra.mxu0 0.0
        %1373 = vmatprep.subr.mxu0 0.0
        %1374 = vmatpush1.msra.mxu0 0.0
        %1375 = vmatprep.subr.mxu0 0.0
        %1376 = vmatpush1.msra.mxu0 0.0
        %1377 = vmatprep.subr.mxu0 0.0
        %1378 = vmatpush1.msra.mxu0 0.0
        %1379 = vmatprep.subr.mxu0 0.0
        %1380 = vmatpush1.msra.mxu0 0.0
        %1381 = vmatprep.subr.mxu0 0.0
        %1382 = vmatpush1.msra.mxu0 0.0
        %1383 = vmatprep.mubr.f32.mxu0 0.0
        %1384 = vmatmul.mubr.f32.gmra.mrb[0].mxu0 %v456
        %v1385 = vpop.f32.mrb[0].mxu0
        %v1386 = vadd.f32 %v1221, %v1385
        %v1387 = vpop.f32.mrb[0].mxu0
        %1388 = vmatprep.mubr.f32.mxu0 0.0
        %1389 = vmatmul.mubr.f32.gmra.mrb[0].mxu0 %v458
        %v1390 = vpop.f32.mrb[0].mxu0
        %v1391 = vadd.f32 %v1226, %v1390
        %v1392 = vpop.f32.mrb[0].mxu0
        %1393 = vmatprep.mubr.f32.mxu0 0.0
        %1394 = vmatmul.mubr.f32.gmra.mrb[0].mxu0 %v461
        %v1395 = vpop.f32.mrb[0].mxu0
        %v1396 = vadd.f32 %v1231, %v1395
        %v1397 = vpop.f32.mrb[0].mxu0
        %1398 = vmatprep.mubr.f32.mxu0 0.0
        %1399 = vmatmul.mubr.f32.gmra.mrb[0].mxu0 %v463
        %v1400 = vpop.f32.mrb[0].mxu0
        %v1401 = vadd.f32 %v1236, %v1400
        %v1402 = vpop.f32.mrb[0].mxu0
        %1403 = vmatprep.mubr.f32.mxu0 0.0
        %1404 = vmatmul.mubr.f32.gmra.mrb[0].mxu0 %v466
        %v1405 = vpop.f32.mrb[0].mxu0
        %v1406 = vadd.f32 %v1241, %v1405
        %v1407 = vpop.f32.mrb[0].mxu0
        %1408 = vmatprep.mubr.f32.mxu0 0.0
        %1409 = vmatmul.mubr.f32.gmra.mrb[0].mxu0 %v468
        %v1410 = vpop.f32.mrb[0].mxu0
        %v1411 = vadd.f32 %v1246, %v1410
        %v1412 = vpop.f32.mrb[0].mxu0
        %1413 = vmatprep.mubr.f32.mxu0 0.0
        %1414 = vmatmul.mubr.f32.gmra.mrb[0].mxu0 %v471
        %v1415 = vpop.f32.mrb[0].mxu0
        %v1416 = vadd.f32 %v1251, %v1415
        %v1417 = vpop.f32.mrb[0].mxu0
        %1418 = vmatprep.mubr.f32.mxu0 0.0
        %1419 = vmatmul.mubr.f32.gmra.mrb[0].mxu0 %v473
        %v1420 = vpop.f32.mrb[0].mxu0
        %v1421 = vadd.f32 %v1256, %v1420
        %v1422 = vpop.f32.mrb[0].mxu0
        %1423 = vmatprep.mubr.f32.mxu0 0.0
        %1424 = vmatmul.mubr.f32.gmra.mrb[0].mxu0 %v476
        %v1425 = vpop.f32.mrb[0].mxu0
        %v1426 = vadd.f32 %v1261, %v1425
        %v1427 = vpop.f32.mrb[0].mxu0
        %1428 = vmatprep.mubr.f32.mxu0 0.0
        %1429 = vmatmul.mubr.f32.gmra.mrb[0].mxu0 %v478
        %v1430 = vpop.f32.mrb[0].mxu0
        %v1431 = vadd.f32 %v1266, %v1430
        %v1432 = vpop.f32.mrb[0].mxu0
        %1433 = vmatprep.mubr.f32.mxu0 0.0
        %1434 = vmatmul.mubr.f32.gmra.mrb[0].mxu0 %v481
        %v1435 = vpop.f32.mrb[0].mxu0
        %v1436 = vadd.f32 %v1271, %v1435
        %v1437 = vpop.f32.mrb[0].mxu0
        %1438 = vmatprep.mubr.f32.mxu0 0.0
        %1439 = vmatmul.mubr.f32.gmra.mrb[0].mxu0 %v483
        %v1440 = vpop.f32.mrb[0].mxu0
        %v1441 = vadd.f32 %v1276, %v1440
        %v1442 = vpop.f32.mrb[0].mxu0
        %1443 = vmatprep.mubr.f32.mxu0 0.0
        %1444 = vmatmul.mubr.f32.gmra.mrb[0].mxu0 %v486
        %v1445 = vpop.f32.mrb[0].mxu0
        %v1446 = vadd.f32 %v1281, %v1445
        %v1447 = vpop.f32.mrb[0].mxu0
        %1448 = vmatprep.mubr.f32.mxu0 0.0
        %1449 = vmatmul.mubr.f32.gmra.mrb[0].mxu0 %v488
        %v1450 = vpop.f32.mrb[0].mxu0
        %v1451 = vadd.f32 %v1286, %v1450
        %v1452 = vpop.f32.mrb[0].mxu0
        %1453 = vmatprep.mubr.f32.mxu0 0.0
        %1454 = vmatmul.mubr.f32.gmra.mrb[0].mxu0 %v491
        %v1455 = vpop.f32.mrb[0].mxu0
        %v1456 = vadd.f32 %v1291, %v1455
        %v1457 = vpop.f32.mrb[0].mxu0
        %1458 = vmatprep.mubr.f32.mxu0 0.0
        %1459 = vmatmul.mubr.f32.gmra.mrb[0].mxu0 %v493
        %v1460 = vpop.f32.mrb[0].mxu0
        %v1461 = vadd.f32 %v1296, %v1460
        %v1462 = vpop.f32.mrb[0].mxu0
        %1463 = vmatprep.mubr.f32.mxu0 0.0
        %1464 = vmatmul.mubr.f32.gmra.mrb[0].mxu0 %v496
        %v1465 = vpop.f32.mrb[0].mxu0
        %v1466 = vadd.f32 %v1301, %v1465
        %v1467 = vpop.f32.mrb[0].mxu0
        %1468 = vmatprep.mubr.f32.mxu0 0.0
        %1469 = vmatmul.mubr.f32.gmra.mrb[0].mxu0 %v498
        %v1470 = vpop.f32.mrb[0].mxu0
        %v1471 = vadd.f32 %v1306, %v1470
        %v1472 = vpop.f32.mrb[0].mxu0
        %1473 = vmatprep.mubr.f32.mxu0 0.0
        %1474 = vmatmul.mubr.f32.gmra.mrb[0].mxu0 %v501
        %v1475 = vpop.f32.mrb[0].mxu0
        %v1476 = vadd.f32 %v1311, %v1475
        %v1477 = vpop.f32.mrb[0].mxu0
        %1478 = vmatprep.mubr.f32.mxu0 0.0
        %1479 = vmatmul.mubr.f32.gmra.mrb[0].mxu0 %v503
        %v1480 = vpop.f32.mrb[0].mxu0
        %v1481 = vadd.f32 %v1316, %v1480
        %v1482 = vpop.f32.mrb[0].mxu0
        %1483 = vdwg.mxu0
        %s1484 = sadd.s32 %s319, 2
        %s1485 = smul.u32 %s1484, 24
        %s1486 = scalar_lea.vmem %s306, %s1485
        %v1487 = vld [vmem:[%s1486] sm:$0xff]
        %v1488 = vld [vmem:[%s1486 + $0x8] sm:$0xff]
        %v1489 = vld [vmem:[%s1486 + $0x10] sm:$0x3]
        %v1490 = vld [vmem:[%s1486 + $0x18] sm:$0xff]
        %v1491 = vld [vmem:[%s1486 + $0x20] sm:$0xff]
        %v1492 = vld [vmem:[%s1486 + $0x28] sm:$0x3]
        %v1493 = vld [vmem:[%s1486 + $0x30] sm:$0xff]
        %v1494 = vld [vmem:[%s1486 + $0x38] sm:$0xff]
        %v1495 = vld [vmem:[%s1486 + $0x40] sm:$0x3]
        %v1496 = vld [vmem:[%s1486 + $0x48] sm:$0xff]
        %v1497 = vld [vmem:[%s1486 + $0x50] sm:$0xff]
        %v1498 = vld [vmem:[%s1486 + $0x58] sm:$0x3]
        %v1499 = vld [vmem:[%s1486 + $0x60] sm:$0xff]
        %v1500 = vld [vmem:[%s1486 + $0x68] sm:$0xff]
        %v1501 = vld [vmem:[%s1486 + $0x70] sm:$0x3]
        %v1502 = vld [vmem:[%s1486 + $0x78] sm:$0xff]
        %v1503 = vld [vmem:[%s1486 + $0x80] sm:$0xff]
        %v1504 = vld [vmem:[%s1486 + $0x88] sm:$0x3]
        %v1505 = vld [vmem:[%s1486 + $0x90] sm:$0xff]
        %v1506 = vld [vmem:[%s1486 + $0x98] sm:$0xff]
        %v1507 = vld [vmem:[%s1486 + $0xa0] sm:$0x3]
        %v1508 = vld [vmem:[%s1486 + $0xa8] sm:$0xff]
        %v1509 = vld [vmem:[%s1486 + $0xb0] sm:$0xff]
        %v1510 = vld [vmem:[%s1486 + $0xb8] sm:$0x3]
        %v1511 = vld [vmem:[%s1486 + $0xc0] sm:$0xff]
        %v1512 = vld [vmem:[%s1486 + $0xc8] sm:$0xff]
        %v1513 = vld [vmem:[%s1486 + $0xd0] sm:$0x3]
        %v1514 = vld [vmem:[%s1486 + $0xd8] sm:$0xff]
        %v1515 = vld [vmem:[%s1486 + $0xe0] sm:$0xff]
        %v1516 = vld [vmem:[%s1486 + $0xe8] sm:$0x3]
        %v1547 = vrot.slane %v1487, 1
        %v1548 = vrot.slane %v1488, 1
        %v1549 = vsel %vm382, %v1547, %v1548
        %v1550 = vrot.slane %v1489, 1
        %v1551 = vsel %vm382, %v1548, %v1550
        %v1552 = vrot.slane %v1490, 1
        %v1553 = vrot.slane %v1491, 1
        %v1554 = vsel %vm382, %v1552, %v1553
        %v1555 = vrot.slane %v1492, 1
        %v1556 = vsel %vm382, %v1553, %v1555
        %v1557 = vrot.slane %v1493, 1
        %v1558 = vrot.slane %v1494, 1
        %v1559 = vsel %vm382, %v1557, %v1558
        %v1560 = vrot.slane %v1495, 1
        %v1561 = vsel %vm382, %v1558, %v1560
        %v1562 = vrot.slane %v1496, 1
        %v1563 = vrot.slane %v1497, 1
        %v1564 = vsel %vm382, %v1562, %v1563
        %v1565 = vrot.slane %v1498, 1
        %v1566 = vsel %vm382, %v1563, %v1565
        %v1567 = vrot.slane %v1499, 1
        %v1568 = vrot.slane %v1500, 1
        %v1569 = vsel %vm382, %v1567, %v1568
        %v1570 = vrot.slane %v1501, 1
        %v1571 = vsel %vm382, %v1568, %v1570
        %v1572 = vrot.slane %v1502, 1
        %v1573 = vrot.slane %v1503, 1
        %v1574 = vsel %vm382, %v1572, %v1573
        %v1575 = vrot.slane %v1504, 1
        %v1576 = vsel %vm382, %v1573, %v1575
        %v1577 = vrot.slane %v1505, 1
        %v1578 = vrot.slane %v1506, 1
        %v1579 = vsel %vm382, %v1577, %v1578
        %v1580 = vrot.slane %v1507, 1
        %v1581 = vsel %vm382, %v1578, %v1580
        %v1582 = vrot.slane %v1508, 1
        %v1583 = vrot.slane %v1509, 1
        %v1584 = vsel %vm382, %v1582, %v1583
        %v1585 = vrot.slane %v1510, 1
        %v1586 = vsel %vm382, %v1583, %v1585
        %v1587 = vrot.slane %v1511, 1
        %v1588 = vrot.slane %v1512, 1
        %v1589 = vsel %vm382, %v1587, %v1588
        %v1590 = vrot.slane %v1513, 1
        %v1591 = vsel %vm382, %v1588, %v1590
        %v1592 = vrot.slane %v1514, 1
        %v1593 = vrot.slane %v1515, 1
        %v1594 = vsel %vm382, %v1592, %v1593
        %v1595 = vrot.slane %v1516, 1
        %v1596 = vsel %vm382, %v1593, %v1595
        %v1617 = vrot.slane %v1487, 2
        %v1618 = vrot.slane %v1488, 2
        %v1619 = vsel %vm453, %v1617, %v1618
        %v1620 = vrot.slane %v1489, 2
        %v1621 = vsel %vm453, %v1618, %v1620
        %v1622 = vrot.slane %v1490, 2
        %v1623 = vrot.slane %v1491, 2
        %v1624 = vsel %vm453, %v1622, %v1623
        %v1625 = vrot.slane %v1492, 2
        %v1626 = vsel %vm453, %v1623, %v1625
        %v1627 = vrot.slane %v1493, 2
        %v1628 = vrot.slane %v1494, 2
        %v1629 = vsel %vm453, %v1627, %v1628
        %v1630 = vrot.slane %v1495, 2
        %v1631 = vsel %vm453, %v1628, %v1630
        %v1632 = vrot.slane %v1496, 2
        %v1633 = vrot.slane %v1497, 2
        %v1634 = vsel %vm453, %v1632, %v1633
        %v1635 = vrot.slane %v1498, 2
        %v1636 = vsel %vm453, %v1633, %v1635
        %v1637 = vrot.slane %v1499, 2
        %v1638 = vrot.slane %v1500, 2
        %v1639 = vsel %vm453, %v1637, %v1638
        %v1640 = vrot.slane %v1501, 2
        %v1641 = vsel %vm453, %v1638, %v1640
        %v1642 = vrot.slane %v1502, 2
        %v1643 = vrot.slane %v1503, 2
        %v1644 = vsel %vm453, %v1642, %v1643
        %v1645 = vrot.slane %v1504, 2
        %v1646 = vsel %vm453, %v1643, %v1645
        %v1647 = vrot.slane %v1505, 2
        %v1648 = vrot.slane %v1506, 2
        %v1649 = vsel %vm453, %v1647, %v1648
        %v1650 = vrot.slane %v1507, 2
        %v1651 = vsel %vm453, %v1648, %v1650
        %v1652 = vrot.slane %v1508, 2
        %v1653 = vrot.slane %v1509, 2
        %v1654 = vsel %vm453, %v1652, %v1653
        %v1655 = vrot.slane %v1510, 2
        %v1656 = vsel %vm453, %v1653, %v1655
        %v1657 = vrot.slane %v1511, 2
        %v1658 = vrot.slane %v1512, 2
        %v1659 = vsel %vm453, %v1657, %v1658
        %v1660 = vrot.slane %v1513, 2
        %v1661 = vsel %vm453, %v1658, %v1660
        %v1662 = vrot.slane %v1514, 2
        %v1663 = vrot.slane %v1515, 2
        %v1664 = vsel %vm453, %v1662, %v1663
        %v1665 = vrot.slane %v1516, 2
        %v1666 = vsel %vm453, %v1663, %v1665
        %s1687 = scalar_lea.vmem %s2, 768
        %v1688 = vld [vmem:[%s1687] sm:$0xff]
        %v1689 = vld [vmem:[%s1687 + $0x8] sm:$0xff]
        %v1690 = vld [vmem:[%s1687 + $0x10] sm:$0xff]
        %v1691 = vld [vmem:[%s1687 + $0x18] sm:$0xff]
        %v1692 = vld [vmem:[%s1687 + $0x20] sm:$0xff]
        %v1693 = vld [vmem:[%s1687 + $0x28] sm:$0xff]
        %v1694 = vld [vmem:[%s1687 + $0x30] sm:$0xff]
        %v1695 = vld [vmem:[%s1687 + $0x38] sm:$0xff]
        %v1696 = vld [vmem:[%s1687 + $0x40] sm:$0xff]
        %v1697 = vld [vmem:[%s1687 + $0x48] sm:$0xff]
        %v1698 = vld [vmem:[%s1687 + $0x50] sm:$0xff]
        %v1699 = vld [vmem:[%s1687 + $0x58] sm:$0xff]
        %v1700 = vld [vmem:[%s1687 + $0x60] sm:$0xff]
        %v1701 = vld [vmem:[%s1687 + $0x68] sm:$0xff]
        %v1702 = vld [vmem:[%s1687 + $0x70] sm:$0xff]
        %v1703 = vld [vmem:[%s1687 + $0x78] sm:$0xff]
        %v1704 = vld [vmem:[%s1687 + $0x80] sm:$0xff]
        %v1705 = vld [vmem:[%s1687 + $0x88] sm:$0xff]
        %v1706 = vld [vmem:[%s1687 + $0x90] sm:$0xff]
        %v1707 = vld [vmem:[%s1687 + $0x98] sm:$0xff]
        %v1708 = vld [vmem:[%s1687 + $0xa0] sm:$0xff]
        %v1709 = vld [vmem:[%s1687 + $0xa8] sm:$0xff]
        %v1710 = vld [vmem:[%s1687 + $0xb0] sm:$0xff]
        %v1711 = vld [vmem:[%s1687 + $0xb8] sm:$0xff]
        %v1712 = vld [vmem:[%s1687 + $0xc0] sm:$0xff]
        %v1713 = vld [vmem:[%s1687 + $0xc8] sm:$0xff]
        %v1714 = vld [vmem:[%s1687 + $0xd0] sm:$0xff]
        %v1715 = vld [vmem:[%s1687 + $0xd8] sm:$0xff]
        %v1716 = vld [vmem:[%s1687 + $0xe0] sm:$0xff]
        %v1717 = vld [vmem:[%s1687 + $0xe8] sm:$0xff]
        %v1718 = vld [vmem:[%s1687 + $0xf0] sm:$0xff]
        %v1719 = vld [vmem:[%s1687 + $0xf8] sm:$0xff]
        %v1720 = vld [vmem:[%s1687 + $0x100] sm:$0xff]
        %v1721 = vld [vmem:[%s1687 + $0x108] sm:$0xff]
        %v1722 = vld [vmem:[%s1687 + $0x110] sm:$0xff]
        %v1723 = vld [vmem:[%s1687 + $0x118] sm:$0xff]
        %v1724 = vld [vmem:[%s1687 + $0x120] sm:$0xff]
        %v1725 = vld [vmem:[%s1687 + $0x128] sm:$0xff]
        %v1726 = vld [vmem:[%s1687 + $0x130] sm:$0xff]
        %v1727 = vld [vmem:[%s1687 + $0x138] sm:$0xff]
        %v1728 = vld [vmem:[%s1687 + $0x140] sm:$0xff]
        %v1729 = vld [vmem:[%s1687 + $0x148] sm:$0xff]
        %v1730 = vld [vmem:[%s1687 + $0x150] sm:$0xff]
        %v1731 = vld [vmem:[%s1687 + $0x158] sm:$0xff]
        %v1732 = vld [vmem:[%s1687 + $0x160] sm:$0xff]
        %v1733 = vld [vmem:[%s1687 + $0x168] sm:$0xff]
        %v1734 = vld [vmem:[%s1687 + $0x170] sm:$0xff]
        %v1735 = vld [vmem:[%s1687 + $0x178] sm:$0xff]
        %1736 = vmatprep.subr.mxu0 0.0
        %1737 = vmatpush1.msra.mxu0 %v1688
        %1738 = vmatprep.subr.mxu0 0.0
        %1739 = vmatpush1.msra.mxu0 %v1689
        %1740 = vmatprep.subr.mxu0 0.0
        %1741 = vmatpush1.msra.mxu0 %v1690
        %1742 = vmatprep.subr.mxu0 0.0
        %1743 = vmatpush1.msra.mxu0 %v1691
        %1744 = vmatprep.subr.mxu0 0.0
        %1745 = vmatpush1.msra.mxu0 %v1692
        %1746 = vmatprep.subr.mxu0 0.0
        %1747 = vmatpush1.msra.mxu0 %v1693
        %1748 = vmatprep.subr.mxu0 0.0
        %1749 = vmatpush1.msra.mxu0 %v1694
        %1750 = vmatprep.subr.mxu0 0.0
        %1751 = vmatpush1.msra.mxu0 %v1695
        %1752 = vmatprep.subr.mxu0 0.0
        %1753 = vmatpush1.msra.mxu0 %v1696
        %1754 = vmatprep.subr.mxu0 0.0
        %1755 = vmatpush1.msra.mxu0 %v1697
        %1756 = vmatprep.subr.mxu0 0.0
        %1757 = vmatpush1.msra.mxu0 %v1698
        %1758 = vmatprep.subr.mxu0 0.0
        %1759 = vmatpush1.msra.mxu0 %v1699
        %1760 = vmatprep.subr.mxu0 0.0
        %1761 = vmatpush1.msra.mxu0 %v1700
        %1762 = vmatprep.subr.mxu0 0.0
        %1763 = vmatpush1.msra.mxu0 %v1701
        %1764 = vmatprep.subr.mxu0 0.0
        %1765 = vmatpush1.msra.mxu0 %v1702
        %1766 = vmatprep.subr.mxu0 0.0
        %1767 = vmatpush1.msra.mxu0 %v1703
        %1768 = vmatprep.subr.mxu0 0.0
        %1769 = vmatpush1.msra.mxu0 %v1704
        %1770 = vmatprep.subr.mxu0 0.0
        %1771 = vmatpush1.msra.mxu0 %v1705
        %1772 = vmatprep.subr.mxu0 0.0
        %1773 = vmatpush1.msra.mxu0 %v1706
        %1774 = vmatprep.subr.mxu0 0.0
        %1775 = vmatpush1.msra.mxu0 %v1707
        %1776 = vmatprep.subr.mxu0 0.0
        %1777 = vmatpush1.msra.mxu0 %v1708
        %1778 = vmatprep.subr.mxu0 0.0
        %1779 = vmatpush1.msra.mxu0 %v1709
        %1780 = vmatprep.subr.mxu0 0.0
        %1781 = vmatpush1.msra.mxu0 %v1710
        %1782 = vmatprep.subr.mxu0 0.0
        %1783 = vmatpush1.msra.mxu0 %v1711
        %1784 = vmatprep.subr.mxu0 0.0
        %1785 = vmatpush1.msra.mxu0 %v1712
        %1786 = vmatprep.subr.mxu0 0.0
        %1787 = vmatpush1.msra.mxu0 %v1713
        %1788 = vmatprep.subr.mxu0 0.0
        %1789 = vmatpush1.msra.mxu0 %v1714
        %1790 = vmatprep.subr.mxu0 0.0
        %1791 = vmatpush1.msra.mxu0 %v1715
        %1792 = vmatprep.subr.mxu0 0.0
        %1793 = vmatpush1.msra.mxu0 %v1716
        %1794 = vmatprep.subr.mxu0 0.0
        %1795 = vmatpush1.msra.mxu0 %v1717
        %1796 = vmatprep.subr.mxu0 0.0
        %1797 = vmatpush1.msra.mxu0 %v1718
        %1798 = vmatprep.subr.mxu0 0.0
        %1799 = vmatpush1.msra.mxu0 %v1719
        %1800 = vmatprep.mubr.f32.mxu0 %v1549
        %1801 = vmatmul.mubr.f32.gmra.mrb[0].mxu0 %v1487
        %v1802 = vpop.f32.mrb[0].mxu0
        %v1803 = vadd.f32 0.0, %v1802
        %v1804 = vpop.f32.mrb[0].mxu0
        %1805 = vmatprep.mubr.f32.mxu0 %v1551
        %1806 = vmatmul.mubr.f32.gmra.mrb[0].mxu0 %v1488
        %v1807 = vpop.f32.mrb[0].mxu0
        %v1808 = vadd.f32 0.0, %v1807
        %v1809 = vpop.f32.mrb[0].mxu0
        %1810 = vmatprep.mubr.f32.mxu0 %v1554
        %1811 = vmatmul.mubr.f32.gmra.mrb[0].mxu0 %v1490
        %v1812 = vpop.f32.mrb[0].mxu0
        %v1813 = vadd.f32 0.0, %v1812
        %v1814 = vpop.f32.mrb[0].mxu0
        %1815 = vmatprep.mubr.f32.mxu0 %v1556
        %1816 = vmatmul.mubr.f32.gmra.mrb[0].mxu0 %v1491
        %v1817 = vpop.f32.mrb[0].mxu0
        %v1818 = vadd.f32 0.0, %v1817
        %v1819 = vpop.f32.mrb[0].mxu0
        %1820 = vmatprep.mubr.f32.mxu0 %v1559
        %1821 = vmatmul.mubr.f32.gmra.mrb[0].mxu0 %v1493
        %v1822 = vpop.f32.mrb[0].mxu0
        %v1823 = vadd.f32 0.0, %v1822
        %v1824 = vpop.f32.mrb[0].mxu0
        %1825 = vmatprep.mubr.f32.mxu0 %v1561
        %1826 = vmatmul.mubr.f32.gmra.mrb[0].mxu0 %v1494
        %v1827 = vpop.f32.mrb[0].mxu0
        %v1828 = vadd.f32 0.0, %v1827
        %v1829 = vpop.f32.mrb[0].mxu0
        %1830 = vmatprep.mubr.f32.mxu0 %v1564
        %1831 = vmatmul.mubr.f32.gmra.mrb[0].mxu0 %v1496
        %v1832 = vpop.f32.mrb[0].mxu0
        %v1833 = vadd.f32 0.0, %v1832
        %v1834 = vpop.f32.mrb[0].mxu0
        %1835 = vmatprep.mubr.f32.mxu0 %v1566
        %1836 = vmatmul.mubr.f32.gmra.mrb[0].mxu0 %v1497
        %v1837 = vpop.f32.mrb[0].mxu0
        %v1838 = vadd.f32 0.0, %v1837
        %v1839 = vpop.f32.mrb[0].mxu0
        %1840 = vmatprep.mubr.f32.mxu0 %v1569
        %1841 = vmatmul.mubr.f32.gmra.mrb[0].mxu0 %v1499
        %v1842 = vpop.f32.mrb[0].mxu0
        %v1843 = vadd.f32 0.0, %v1842
        %v1844 = vpop.f32.mrb[0].mxu0
        %1845 = vmatprep.mubr.f32.mxu0 %v1571
        %1846 = vmatmul.mubr.f32.gmra.mrb[0].mxu0 %v1500
        %v1847 = vpop.f32.mrb[0].mxu0
        %v1848 = vadd.f32 0.0, %v1847
        %v1849 = vpop.f32.mrb[0].mxu0
        %1850 = vmatprep.mubr.f32.mxu0 %v1574
        %1851 = vmatmul.mubr.f32.gmra.mrb[0].mxu0 %v1502
        %v1852 = vpop.f32.mrb[0].mxu0
        %v1853 = vadd.f32 0.0, %v1852
        %v1854 = vpop.f32.mrb[0].mxu0
        %1855 = vmatprep.mubr.f32.mxu0 %v1576
        %1856 = vmatmul.mubr.f32.gmra.mrb[0].mxu0 %v1503
        %v1857 = vpop.f32.mrb[0].mxu0
        %v1858 = vadd.f32 0.0, %v1857
        %v1859 = vpop.f32.mrb[0].mxu0
        %1860 = vmatprep.mubr.f32.mxu0 %v1579
        %1861 = vmatmul.mubr.f32.gmra.mrb[0].mxu0 %v1505
        %v1862 = vpop.f32.mrb[0].mxu0
        %v1863 = vadd.f32 0.0, %v1862
        %v1864 = vpop.f32.mrb[0].mxu0
        %1865 = vmatprep.mubr.f32.mxu0 %v1581
        %1866 = vmatmul.mubr.f32.gmra.mrb[0].mxu0 %v1506
        %v1867 = vpop.f32.mrb[0].mxu0
        %v1868 = vadd.f32 0.0, %v1867
        %v1869 = vpop.f32.mrb[0].mxu0
        %1870 = vmatprep.mubr.f32.mxu0 %v1584
        %1871 = vmatmul.mubr.f32.gmra.mrb[0].mxu0 %v1508
        %v1872 = vpop.f32.mrb[0].mxu0
        %v1873 = vadd.f32 0.0, %v1872
        %v1874 = vpop.f32.mrb[0].mxu0
        %1875 = vmatprep.mubr.f32.mxu0 %v1586
        %1876 = vmatmul.mubr.f32.gmra.mrb[0].mxu0 %v1509
        %v1877 = vpop.f32.mrb[0].mxu0
        %v1878 = vadd.f32 0.0, %v1877
        %v1879 = vpop.f32.mrb[0].mxu0
        %1880 = vmatprep.mubr.f32.mxu0 %v1589
        %1881 = vmatmul.mubr.f32.gmra.mrb[0].mxu0 %v1511
        %v1882 = vpop.f32.mrb[0].mxu0
        %v1883 = vadd.f32 0.0, %v1882
        %v1884 = vpop.f32.mrb[0].mxu0
        %1885 = vmatprep.mubr.f32.mxu0 %v1591
        %1886 = vmatmul.mubr.f32.gmra.mrb[0].mxu0 %v1512
        %v1887 = vpop.f32.mrb[0].mxu0
        %v1888 = vadd.f32 0.0, %v1887
        %v1889 = vpop.f32.mrb[0].mxu0
        %1890 = vmatprep.mubr.f32.mxu0 %v1594
        %1891 = vmatmul.mubr.f32.gmra.mrb[0].mxu0 %v1514
        %v1892 = vpop.f32.mrb[0].mxu0
        %v1893 = vadd.f32 0.0, %v1892
        %v1894 = vpop.f32.mrb[0].mxu0
        %1895 = vmatprep.mubr.f32.mxu0 %v1596
        %1896 = vmatmul.mubr.f32.gmra.mrb[0].mxu0 %v1515
        %v1897 = vpop.f32.mrb[0].mxu0
        %v1898 = vadd.f32 0.0, %v1897
        %v1899 = vpop.f32.mrb[0].mxu0
        %1900 = vdwg.mxu0
        %1901 = vmatprep.subr.mxu0 0.0
        %1902 = vmatpush1.msra.mxu0 %v1720
        %1903 = vmatprep.subr.mxu0 0.0
        %1904 = vmatpush1.msra.mxu0 %v1721
        %1905 = vmatprep.subr.mxu0 0.0
        %1906 = vmatpush1.msra.mxu0 %v1722
        %1907 = vmatprep.subr.mxu0 0.0
        %1908 = vmatpush1.msra.mxu0 %v1723
        %1909 = vmatprep.subr.mxu0 0.0
        %1910 = vmatpush1.msra.mxu0 %v1724
        %1911 = vmatprep.subr.mxu0 0.0
        %1912 = vmatpush1.msra.mxu0 %v1725
        %1913 = vmatprep.subr.mxu0 0.0
        %1914 = vmatpush1.msra.mxu0 %v1726
        %1915 = vmatprep.subr.mxu0 0.0
        %1916 = vmatpush1.msra.mxu0 %v1727
        %1917 = vmatprep.subr.mxu0 0.0
        %1918 = vmatpush1.msra.mxu0 %v1728
        %1919 = vmatprep.subr.mxu0 0.0
        %1920 = vmatpush1.msra.mxu0 %v1729
        %1921 = vmatprep.subr.mxu0 0.0
        %1922 = vmatpush1.msra.mxu0 %v1730
        %1923 = vmatprep.subr.mxu0 0.0
        %1924 = vmatpush1.msra.mxu0 %v1731
        %1925 = vmatprep.subr.mxu0 0.0
        %1926 = vmatpush1.msra.mxu0 %v1732
        %1927 = vmatprep.subr.mxu0 0.0
        %1928 = vmatpush1.msra.mxu0 %v1733
        %1929 = vmatprep.subr.mxu0 0.0
        %1930 = vmatpush1.msra.mxu0 %v1734
        %1931 = vmatprep.subr.mxu0 0.0
        %1932 = vmatpush1.msra.mxu0 %v1735
        %1933 = vmatprep.subr.mxu0 0.0
        %1934 = vmatpush1.msra.mxu0 0.0
        %1935 = vmatprep.subr.mxu0 0.0
        %1936 = vmatpush1.msra.mxu0 0.0
        %1937 = vmatprep.subr.mxu0 0.0
        %1938 = vmatpush1.msra.mxu0 0.0
        %1939 = vmatprep.subr.mxu0 0.0
        %1940 = vmatpush1.msra.mxu0 0.0
        %1941 = vmatprep.subr.mxu0 0.0
        %1942 = vmatpush1.msra.mxu0 0.0
        %1943 = vmatprep.subr.mxu0 0.0
        %1944 = vmatpush1.msra.mxu0 0.0
        %1945 = vmatprep.subr.mxu0 0.0
        %1946 = vmatpush1.msra.mxu0 0.0
        %1947 = vmatprep.subr.mxu0 0.0
        %1948 = vmatpush1.msra.mxu0 0.0
        %1949 = vmatprep.subr.mxu0 0.0
        %1950 = vmatpush1.msra.mxu0 0.0
        %1951 = vmatprep.subr.mxu0 0.0
        %1952 = vmatpush1.msra.mxu0 0.0
        %1953 = vmatprep.subr.mxu0 0.0
        %1954 = vmatpush1.msra.mxu0 0.0
        %1955 = vmatprep.subr.mxu0 0.0
        %1956 = vmatpush1.msra.mxu0 0.0
        %1957 = vmatprep.subr.mxu0 0.0
        %1958 = vmatpush1.msra.mxu0 0.0
        %1959 = vmatprep.subr.mxu0 0.0
        %1960 = vmatpush1.msra.mxu0 0.0
        %1961 = vmatprep.subr.mxu0 0.0
        %1962 = vmatpush1.msra.mxu0 0.0
        %1963 = vmatprep.subr.mxu0 0.0
        %1964 = vmatpush1.msra.mxu0 0.0
        %1965 = vmatprep.mubr.f32.mxu0 0.0
        %1966 = vmatmul.mubr.f32.gmra.mrb[0].mxu0 %v1619
        %v1967 = vpop.f32.mrb[0].mxu0
        %v1968 = vadd.f32 %v1803, %v1967
        %v1969 = vpop.f32.mrb[0].mxu0
        %1970 = vmatprep.mubr.f32.mxu0 0.0
        %1971 = vmatmul.mubr.f32.gmra.mrb[0].mxu0 %v1621
        %v1972 = vpop.f32.mrb[0].mxu0
        %v1973 = vadd.f32 %v1808, %v1972
        %v1974 = vpop.f32.mrb[0].mxu0
        %1975 = vmatprep.mubr.f32.mxu0 0.0
        %1976 = vmatmul.mubr.f32.gmra.mrb[0].mxu0 %v1624
        %v1977 = vpop.f32.mrb[0].mxu0
        %v1978 = vadd.f32 %v1813, %v1977
        %v1979 = vpop.f32.mrb[0].mxu0
        %1980 = vmatprep.mubr.f32.mxu0 0.0
        %1981 = vmatmul.mubr.f32.gmra.mrb[0].mxu0 %v1626
        %v1982 = vpop.f32.mrb[0].mxu0
        %v1983 = vadd.f32 %v1818, %v1982
        %v1984 = vpop.f32.mrb[0].mxu0
        %1985 = vmatprep.mubr.f32.mxu0 0.0
        %1986 = vmatmul.mubr.f32.gmra.mrb[0].mxu0 %v1629
        %v1987 = vpop.f32.mrb[0].mxu0
        %v1988 = vadd.f32 %v1823, %v1987
        %v1989 = vpop.f32.mrb[0].mxu0
        %1990 = vmatprep.mubr.f32.mxu0 0.0
        %1991 = vmatmul.mubr.f32.gmra.mrb[0].mxu0 %v1631
        %v1992 = vpop.f32.mrb[0].mxu0
        %v1993 = vadd.f32 %v1828, %v1992
        %v1994 = vpop.f32.mrb[0].mxu0
        %1995 = vmatprep.mubr.f32.mxu0 0.0
        %1996 = vmatmul.mubr.f32.gmra.mrb[0].mxu0 %v1634
        %v1997 = vpop.f32.mrb[0].mxu0
        %v1998 = vadd.f32 %v1833, %v1997
        %v1999 = vpop.f32.mrb[0].mxu0
        %2000 = vmatprep.mubr.f32.mxu0 0.0
        %2001 = vmatmul.mubr.f32.gmra.mrb[0].mxu0 %v1636
        %v2002 = vpop.f32.mrb[0].mxu0
        %v2003 = vadd.f32 %v1838, %v2002
        %v2004 = vpop.f32.mrb[0].mxu0
        %2005 = vmatprep.mubr.f32.mxu0 0.0
        %2006 = vmatmul.mubr.f32.gmra.mrb[0].mxu0 %v1639
        %v2007 = vpop.f32.mrb[0].mxu0
        %v2008 = vadd.f32 %v1843, %v2007
        %v2009 = vpop.f32.mrb[0].mxu0
        %2010 = vmatprep.mubr.f32.mxu0 0.0
        %2011 = vmatmul.mubr.f32.gmra.mrb[0].mxu0 %v1641
        %v2012 = vpop.f32.mrb[0].mxu0
        %v2013 = vadd.f32 %v1848, %v2012
        %v2014 = vpop.f32.mrb[0].mxu0
        %2015 = vmatprep.mubr.f32.mxu0 0.0
        %2016 = vmatmul.mubr.f32.gmra.mrb[0].mxu0 %v1644
        %v2017 = vpop.f32.mrb[0].mxu0
        %v2018 = vadd.f32 %v1853, %v2017
        %v2019 = vpop.f32.mrb[0].mxu0
        %2020 = vmatprep.mubr.f32.mxu0 0.0
        %2021 = vmatmul.mubr.f32.gmra.mrb[0].mxu0 %v1646
        %v2022 = vpop.f32.mrb[0].mxu0
        %v2023 = vadd.f32 %v1858, %v2022
        %v2024 = vpop.f32.mrb[0].mxu0
        %2025 = vmatprep.mubr.f32.mxu0 0.0
        %2026 = vmatmul.mubr.f32.gmra.mrb[0].mxu0 %v1649
        %v2027 = vpop.f32.mrb[0].mxu0
        %v2028 = vadd.f32 %v1863, %v2027
        %v2029 = vpop.f32.mrb[0].mxu0
        %2030 = vmatprep.mubr.f32.mxu0 0.0
        %2031 = vmatmul.mubr.f32.gmra.mrb[0].mxu0 %v1651
        %v2032 = vpop.f32.mrb[0].mxu0
        %v2033 = vadd.f32 %v1868, %v2032
        %v2034 = vpop.f32.mrb[0].mxu0
        %2035 = vmatprep.mubr.f32.mxu0 0.0
        %2036 = vmatmul.mubr.f32.gmra.mrb[0].mxu0 %v1654
        %v2037 = vpop.f32.mrb[0].mxu0
        %v2038 = vadd.f32 %v1873, %v2037
        %v2039 = vpop.f32.mrb[0].mxu0
        %2040 = vmatprep.mubr.f32.mxu0 0.0
        %2041 = vmatmul.mubr.f32.gmra.mrb[0].mxu0 %v1656
        %v2042 = vpop.f32.mrb[0].mxu0
        %v2043 = vadd.f32 %v1878, %v2042
        %v2044 = vpop.f32.mrb[0].mxu0
        %2045 = vmatprep.mubr.f32.mxu0 0.0
        %2046 = vmatmul.mubr.f32.gmra.mrb[0].mxu0 %v1659
        %v2047 = vpop.f32.mrb[0].mxu0
        %v2048 = vadd.f32 %v1883, %v2047
        %v2049 = vpop.f32.mrb[0].mxu0
        %2050 = vmatprep.mubr.f32.mxu0 0.0
        %2051 = vmatmul.mubr.f32.gmra.mrb[0].mxu0 %v1661
        %v2052 = vpop.f32.mrb[0].mxu0
        %v2053 = vadd.f32 %v1888, %v2052
        %v2054 = vpop.f32.mrb[0].mxu0
        %2055 = vmatprep.mubr.f32.mxu0 0.0
        %2056 = vmatmul.mubr.f32.gmra.mrb[0].mxu0 %v1664
        %v2057 = vpop.f32.mrb[0].mxu0
        %v2058 = vadd.f32 %v1893, %v2057
        %v2059 = vpop.f32.mrb[0].mxu0
        %2060 = vmatprep.mubr.f32.mxu0 0.0
        %2061 = vmatmul.mubr.f32.gmra.mrb[0].mxu0 %v1666
        %v2062 = vpop.f32.mrb[0].mxu0
        %v2063 = vadd.f32 %v1898, %v2062
        %v2064 = vpop.f32.mrb[0].mxu0
        %2065 = vdwg.mxu0
        %v2066 = vadd.f32 %v1386, %v1968
        %v2067 = vadd.f32 %v1391, %v1973
        %v2068 = vadd.f32 %v1396, %v1978
        %v2069 = vadd.f32 %v1401, %v1983
        %v2070 = vadd.f32 %v1406, %v1988
        %v2071 = vadd.f32 %v1411, %v1993
        %v2072 = vadd.f32 %v1416, %v1998
        %v2073 = vadd.f32 %v1421, %v2003
        %v2074 = vadd.f32 %v1426, %v2008
        %v2075 = vadd.f32 %v1431, %v2013
        %v2076 = vadd.f32 %v1436, %v2018
        %v2077 = vadd.f32 %v1441, %v2023
        %v2078 = vadd.f32 %v1446, %v2028
        %v2079 = vadd.f32 %v1451, %v2033
        %v2080 = vadd.f32 %v1456, %v2038
        %v2081 = vadd.f32 %v1461, %v2043
        %v2082 = vadd.f32 %v1466, %v2048
        %v2083 = vadd.f32 %v1471, %v2053
        %v2084 = vadd.f32 %v1476, %v2058
        %v2085 = vadd.f32 %v1481, %v2063
        %v2086 = vld [vmem:[%s3] sm:$0x1]
        %v2088 = vlaneseq
        %v2089 = vshrl.u32 %v2088, 7
        %v2090 = vsub.s32 0, %v2089
        %v2091 = vrot.slane %v2086, %v2090
        %v2093 = vadd.f32 %v2066, %v2091
        %v2094 = vadd.f32 %v2067, %v2091
        %v2095 = vadd.f32 %v2068, %v2091
        %v2096 = vadd.f32 %v2069, %v2091
        %v2097 = vadd.f32 %v2070, %v2091
        %v2098 = vadd.f32 %v2071, %v2091
        %v2099 = vadd.f32 %v2072, %v2091
        %v2100 = vadd.f32 %v2073, %v2091
        %v2101 = vadd.f32 %v2074, %v2091
        %v2102 = vadd.f32 %v2075, %v2091
        %v2103 = vadd.f32 %v2076, %v2091
        %v2104 = vadd.f32 %v2077, %v2091
        %v2105 = vadd.f32 %v2078, %v2091
        %v2106 = vadd.f32 %v2079, %v2091
        %v2107 = vadd.f32 %v2080, %v2091
        %v2108 = vadd.f32 %v2081, %v2091
        %v2109 = vadd.f32 %v2082, %v2091
        %v2110 = vadd.f32 %v2083, %v2091
        %v2111 = vadd.f32 %v2084, %v2091
        %v2112 = vadd.f32 %v2085, %v2091
        %v2113 = vmax.f32 %v2093, 0.0
        %v2114 = vmax.f32 %v2094, 0.0
        %v2115 = vmax.f32 %v2095, 0.0
        %v2116 = vmax.f32 %v2096, 0.0
        %v2117 = vmax.f32 %v2097, 0.0
        %v2118 = vmax.f32 %v2098, 0.0
        %v2119 = vmax.f32 %v2099, 0.0
        %v2120 = vmax.f32 %v2100, 0.0
        %v2121 = vmax.f32 %v2101, 0.0
        %v2122 = vmax.f32 %v2102, 0.0
        %v2123 = vmax.f32 %v2103, 0.0
        %v2124 = vmax.f32 %v2104, 0.0
        %v2125 = vmax.f32 %v2105, 0.0
        %v2126 = vmax.f32 %v2106, 0.0
        %v2127 = vmax.f32 %v2107, 0.0
        %v2128 = vmax.f32 %v2108, 0.0
        %v2129 = vmax.f32 %v2109, 0.0
        %v2130 = vmax.f32 %v2110, 0.0
        %v2131 = vmax.f32 %v2111, 0.0
        %v2132 = vmax.f32 %v2112, 0.0
        %2133 = vst [vmem:[#allocation2] sm:$0x1] 0.0
        %2134 = vst [vmem:[#allocation2 + $0x18] sm:$0x1] 0.0
        %2135 = vst [vmem:[#allocation2 + $0x30] sm:$0x1] 0.0
        %2136 = vst [vmem:[#allocation2 + $0x48] sm:$0x1] 0.0
        %2137 = vst [vmem:[#allocation2 + $0x60] sm:$0x1] 0.0
        %2138 = vst [vmem:[#allocation2 + $0x78] sm:$0x1] 0.0
        %2139 = vst [vmem:[#allocation2 + $0x90] sm:$0x1] 0.0
        %2140 = vst [vmem:[#allocation2 + $0xa8] sm:$0x1] 0.0
        %2141 = vst [vmem:[#allocation2 + $0xc0] sm:$0x1] 0.0
        %2142 = vst [vmem:[#allocation2 + $0xd8] sm:$0x1] 0.0
        %2143 = vst [vmem:[#allocation2 + $0x11] sm:$0x1] 0.0
        %2144 = vst [vmem:[#allocation2 + $0x29] sm:$0x1] 0.0
        %2145 = vst [vmem:[#allocation2 + $0x41] sm:$0x1] 0.0
        %2146 = vst [vmem:[#allocation2 + $0x59] sm:$0x1] 0.0
        %2147 = vst [vmem:[#allocation2 + $0x71] sm:$0x1] 0.0
        %2148 = vst [vmem:[#allocation2 + $0x89] sm:$0x1] 0.0
        %2149 = vst [vmem:[#allocation2 + $0xa1] sm:$0x1] 0.0
        %2150 = vst [vmem:[#allocation2 + $0xb9] sm:$0x1] 0.0
        %2151 = vst [vmem:[#allocation2 + $0xd1] sm:$0x1] 0.0
        %2152 = vst [vmem:[#allocation2 + $0xe9] sm:$0x1] 0.0
        %2153 = vst [vmem:[#allocation2 + $0x1] sm:$0xff] %v2113
        %2154 = vst [vmem:[#allocation2 + $0x9] sm:$0xff] %v2114
        %2155 = vst [vmem:[#allocation2 + $0x19] sm:$0xff] %v2115
        %2156 = vst [vmem:[#allocation2 + $0x21] sm:$0xff] %v2116
        %2157 = vst [vmem:[#allocation2 + $0x31] sm:$0xff] %v2117
        %2158 = vst [vmem:[#allocation2 + $0x39] sm:$0xff] %v2118
        %2159 = vst [vmem:[#allocation2 + $0x49] sm:$0xff] %v2119
        %2160 = vst [vmem:[#allocation2 + $0x51] sm:$0xff] %v2120
        %2161 = vst [vmem:[#allocation2 + $0x61] sm:$0xff] %v2121
        %2162 = vst [vmem:[#allocation2 + $0x69] sm:$0xff] %v2122
        %2163 = vst [vmem:[#allocation2 + $0x79] sm:$0xff] %v2123
        %2164 = vst [vmem:[#allocation2 + $0x81] sm:$0xff] %v2124
        %2165 = vst [vmem:[#allocation2 + $0x91] sm:$0xff] %v2125
        %2166 = vst [vmem:[#allocation2 + $0x99] sm:$0xff] %v2126
        %2167 = vst [vmem:[#allocation2 + $0xa9] sm:$0xff] %v2127
        %2168 = vst [vmem:[#allocation2 + $0xb1] sm:$0xff] %v2128
        %2169 = vst [vmem:[#allocation2 + $0xc1] sm:$0xff] %v2129
        %2170 = vst [vmem:[#allocation2 + $0xc9] sm:$0xff] %v2130
        %2171 = vst [vmem:[#allocation2 + $0xd9] sm:$0xff] %v2131
        %2172 = vst [vmem:[#allocation2 + $0xe1] sm:$0xff] %v2132
        %p2173 = scmp.eq.s32.totalorder %s26, 0
        // Predicated region
        $region49: #{tpu_custom_call.1} parent=43 // pred_check
          %p2174 = pneg %p2173
        $region50: #{tpu_custom_call.1} parent=43 // pred_check_branch
          %2176 = sbr.rel (%p2174) target = $region52
        $region51: #{tpu_custom_call.1} parent=43 // pred_region
          %2177 = vst [vmem:[#allocation2] sm:$0xff] 0.0
          %2178 = vst [vmem:[#allocation2 + $0x8] sm:$0xff] 0.0
          %2179 = vst [vmem:[#allocation2 + $0x10] sm:$0x3] 0.0
        $region52: #{tpu_custom_call.1} parent=43 // pred_fallthru
          _
        %p2180 = scmp.eq.s32.totalorder %s26, 1
        // Predicated region
        $region53: #{tpu_custom_call.1} parent=43 // pred_check
          %p2181 = pneg %p2180
        $region54: #{tpu_custom_call.1} parent=43 // pred_check_branch
          %2183 = sbr.rel (%p2181) target = $region56
        $region55: #{tpu_custom_call.1} parent=43 // pred_region
          %s2184 = scalar_lea.vmem [#allocation2], 216
          %2185 = vst [vmem:[%s2184] sm:$0xff] 0.0
          %2186 = vst [vmem:[%s2184 + $0x8] sm:$0xff] 0.0
          %2187 = vst [vmem:[%s2184 + $0x10] sm:$0x3] 0.0
        $region56: #{tpu_custom_call.1} parent=43 // pred_fallthru
          _
        %v2188 = vld [vmem:[#allocation2] sm:$0xff]
        %v2189 = vld [vmem:[#allocation2 + $0x8] sm:$0xff]
        %v2190 = vld [vmem:[#allocation2 + $0x10] sm:$0x3]
        %v2191 = vld [vmem:[#allocation2 + $0x18] sm:$0xff]
        %v2192 = vld [vmem:[#allocation2 + $0x20] sm:$0xff]
        %v2193 = vld [vmem:[#allocation2 + $0x28] sm:$0x3]
        %v2194 = vld [vmem:[#allocation2 + $0x30] sm:$0xff]
        %v2195 = vld [vmem:[#allocation2 + $0x38] sm:$0xff]
        %v2196 = vld [vmem:[#allocation2 + $0x40] sm:$0x3]
        %v2197 = vld [vmem:[#allocation2 + $0x48] sm:$0xff]
        %v2198 = vld [vmem:[#allocation2 + $0x50] sm:$0xff]
        %v2199 = vld [vmem:[#allocation2 + $0x58] sm:$0x3]
        %v2200 = vld [vmem:[#allocation2 + $0x60] sm:$0xff]
        %v2201 = vld [vmem:[#allocation2 + $0x68] sm:$0xff]
        %v2202 = vld [vmem:[#allocation2 + $0x70] sm:$0x3]
        %v2203 = vld [vmem:[#allocation2 + $0x78] sm:$0xff]
        %v2204 = vld [vmem:[#allocation2 + $0x80] sm:$0xff]
        %v2205 = vld [vmem:[#allocation2 + $0x88] sm:$0x3]
        %v2206 = vld [vmem:[#allocation2 + $0x90] sm:$0xff]
        %v2207 = vld [vmem:[#allocation2 + $0x98] sm:$0xff]
        %v2208 = vld [vmem:[#allocation2 + $0xa0] sm:$0x3]
        %v2209 = vld [vmem:[#allocation2 + $0xa8] sm:$0xff]
        %v2210 = vld [vmem:[#allocation2 + $0xb0] sm:$0xff]
        %v2211 = vld [vmem:[#allocation2 + $0xb8] sm:$0x3]
        %v2236 = vrot.slane %v2188, 1
        %v2237 = vrot.slane %v2189, 1
        %v2238 = vsel %vm382, %v2236, %v2237
        %v2239 = vrot.slane %v2190, 1
        %v2240 = vsel %vm382, %v2237, %v2239
        %v2241 = vrot.slane %v2191, 1
        %v2242 = vrot.slane %v2192, 1
        %v2243 = vsel %vm382, %v2241, %v2242
        %v2244 = vrot.slane %v2193, 1
        %v2245 = vsel %vm382, %v2242, %v2244
        %v2246 = vrot.slane %v2194, 1
        %v2247 = vrot.slane %v2195, 1
        %v2248 = vsel %vm382, %v2246, %v2247
        %v2249 = vrot.slane %v2196, 1
        %v2250 = vsel %vm382, %v2247, %v2249
        %v2251 = vrot.slane %v2197, 1
        %v2252 = vrot.slane %v2198, 1
        %v2253 = vsel %vm382, %v2251, %v2252
        %v2254 = vrot.slane %v2199, 1
        %v2255 = vsel %vm382, %v2252, %v2254
        %v2256 = vrot.slane %v2200, 1
        %v2257 = vrot.slane %v2201, 1
        %v2258 = vsel %vm382, %v2256, %v2257
        %v2259 = vrot.slane %v2202, 1
        %v2260 = vsel %vm382, %v2257, %v2259
        %v2261 = vrot.slane %v2203, 1
        %v2262 = vrot.slane %v2204, 1
        %v2263 = vsel %vm382, %v2261, %v2262
        %v2264 = vrot.slane %v2205, 1
        %v2265 = vsel %vm382, %v2262, %v2264
        %v2266 = vrot.slane %v2206, 1
        %v2267 = vrot.slane %v2207, 1
        %v2268 = vsel %vm382, %v2266, %v2267
        %v2269 = vrot.slane %v2208, 1
        %v2270 = vsel %vm382, %v2267, %v2269
        %v2271 = vrot.slane %v2209, 1
        %v2272 = vrot.slane %v2210, 1
        %v2273 = vsel %vm382, %v2271, %v2272
        %v2274 = vrot.slane %v2211, 1
        %v2275 = vsel %vm382, %v2272, %v2274
        %v2292 = vrot.slane %v2188, 2
        %v2293 = vrot.slane %v2189, 2
        %v2294 = vsel %vm453, %v2292, %v2293
        %v2295 = vrot.slane %v2190, 2
        %v2296 = vsel %vm453, %v2293, %v2295
        %v2297 = vrot.slane %v2191, 2
        %v2298 = vrot.slane %v2192, 2
        %v2299 = vsel %vm453, %v2297, %v2298
        %v2300 = vrot.slane %v2193, 2
        %v2301 = vsel %vm453, %v2298, %v2300
        %v2302 = vrot.slane %v2194, 2
        %v2303 = vrot.slane %v2195, 2
        %v2304 = vsel %vm453, %v2302, %v2303
        %v2305 = vrot.slane %v2196, 2
        %v2306 = vsel %vm453, %v2303, %v2305
        %v2307 = vrot.slane %v2197, 2
        %v2308 = vrot.slane %v2198, 2
        %v2309 = vsel %vm453, %v2307, %v2308
        %v2310 = vrot.slane %v2199, 2
        %v2311 = vsel %vm453, %v2308, %v2310
        %v2312 = vrot.slane %v2200, 2
        %v2313 = vrot.slane %v2201, 2
        %v2314 = vsel %vm453, %v2312, %v2313
        %v2315 = vrot.slane %v2202, 2
        %v2316 = vsel %vm453, %v2313, %v2315
        %v2317 = vrot.slane %v2203, 2
        %v2318 = vrot.slane %v2204, 2
        %v2319 = vsel %vm453, %v2317, %v2318
        %v2320 = vrot.slane %v2205, 2
        %v2321 = vsel %vm453, %v2318, %v2320
        %v2322 = vrot.slane %v2206, 2
        %v2323 = vrot.slane %v2207, 2
        %v2324 = vsel %vm453, %v2322, %v2323
        %v2325 = vrot.slane %v2208, 2
        %v2326 = vsel %vm453, %v2323, %v2325
        %v2327 = vrot.slane %v2209, 2
        %v2328 = vrot.slane %v2210, 2
        %v2329 = vsel %vm453, %v2327, %v2328
        %v2330 = vrot.slane %v2211, 2
        %v2331 = vsel %vm453, %v2328, %v2330
        %v2348 = vld [vmem:[#allocation3] sm:$0xff]
        %v2349 = vld [vmem:[#allocation3 + $0x8] sm:$0xff]
        %v2350 = vld [vmem:[#allocation3 + $0x10] sm:$0xff]
        %v2351 = vld [vmem:[#allocation3 + $0x18] sm:$0xff]
        %v2352 = vld [vmem:[#allocation3 + $0x20] sm:$0xff]
        %v2353 = vld [vmem:[#allocation3 + $0x28] sm:$0xff]
        %v2354 = vld [vmem:[#allocation3 + $0x30] sm:$0xff]
        %v2355 = vld [vmem:[#allocation3 + $0x38] sm:$0xff]
        %v2356 = vld [vmem:[#allocation3 + $0x40] sm:$0xff]
        %v2357 = vld [vmem:[#allocation3 + $0x48] sm:$0xff]
        %v2358 = vld [vmem:[#allocation3 + $0x50] sm:$0xff]
        %v2359 = vld [vmem:[#allocation3 + $0x58] sm:$0xff]
        %v2360 = vld [vmem:[#allocation3 + $0x60] sm:$0xff]
        %v2361 = vld [vmem:[#allocation3 + $0x68] sm:$0xff]
        %v2362 = vld [vmem:[#allocation3 + $0x70] sm:$0xff]
        %v2363 = vld [vmem:[#allocation3 + $0x78] sm:$0xff]
        %v2364 = vld [vmem:[#allocation3 + $0x80] sm:$0xff]
        %v2365 = vld [vmem:[#allocation3 + $0x88] sm:$0xff]
        %v2366 = vld [vmem:[#allocation3 + $0x90] sm:$0xff]
        %v2367 = vld [vmem:[#allocation3 + $0x98] sm:$0xff]
        %v2368 = vld [vmem:[#allocation3 + $0xa0] sm:$0xff]
        %v2369 = vld [vmem:[#allocation3 + $0xa8] sm:$0xff]
        %v2370 = vld [vmem:[#allocation3 + $0xb0] sm:$0xff]
        %v2371 = vld [vmem:[#allocation3 + $0xb8] sm:$0xff]
        %v2372 = vld [vmem:[#allocation3 + $0xc0] sm:$0xff]
        %v2373 = vld [vmem:[#allocation3 + $0xc8] sm:$0xff]
        %v2374 = vld [vmem:[#allocation3 + $0xd0] sm:$0xff]
        %v2375 = vld [vmem:[#allocation3 + $0xd8] sm:$0xff]
        %v2376 = vld [vmem:[#allocation3 + $0xe0] sm:$0xff]
        %v2377 = vld [vmem:[#allocation3 + $0xe8] sm:$0xff]
        %v2378 = vld [vmem:[#allocation3 + $0xf0] sm:$0xff]
        %v2379 = vld [vmem:[#allocation3 + $0xf8] sm:$0xff]
        %v2380 = vld [vmem:[#allocation3 + $0x100] sm:$0xff]
        %v2381 = vld [vmem:[#allocation3 + $0x108] sm:$0xff]
        %v2382 = vld [vmem:[#allocation3 + $0x110] sm:$0xff]
        %v2383 = vld [vmem:[#allocation3 + $0x118] sm:$0xff]
        %v2384 = vld [vmem:[#allocation3 + $0x120] sm:$0xff]
        %v2385 = vld [vmem:[#allocation3 + $0x128] sm:$0xff]
        %v2386 = vld [vmem:[#allocation3 + $0x130] sm:$0xff]
        %v2387 = vld [vmem:[#allocation3 + $0x138] sm:$0xff]
        %v2388 = vld [vmem:[#allocation3 + $0x140] sm:$0xff]
        %v2389 = vld [vmem:[#allocation3 + $0x148] sm:$0xff]
        %v2390 = vld [vmem:[#allocation3 + $0x150] sm:$0xff]
        %v2391 = vld [vmem:[#allocation3 + $0x158] sm:$0xff]
        %v2392 = vld [vmem:[#allocation3 + $0x160] sm:$0xff]
        %v2393 = vld [vmem:[#allocation3 + $0x168] sm:$0xff]
        %v2394 = vld [vmem:[#allocation3 + $0x170] sm:$0xff]
        %v2395 = vld [vmem:[#allocation3 + $0x178] sm:$0xff]
        %s2396 = scalar_lea.vmem [#allocation2], 24
        %v2397 = vld [vmem:[%s2396] sm:$0xff]
        %v2398 = vld [vmem:[%s2396 + $0x8] sm:$0xff]
        %v2399 = vld [vmem:[%s2396 + $0x10] sm:$0x3]
        %v2400 = vld [vmem:[%s2396 + $0x18] sm:$0xff]
        %v2401 = vld [vmem:[%s2396 + $0x20] sm:$0xff]
        %v2402 = vld [vmem:[%s2396 + $0x28] sm:$0x3]
        %v2403 = vld [vmem:[%s2396 + $0x30] sm:$0xff]
        %v2404 = vld [vmem:[%s2396 + $0x38] sm:$0xff]
        %v2405 = vld [vmem:[%s2396 + $0x40] sm:$0x3]
        %v2406 = vld [vmem:[%s2396 + $0x48] sm:$0xff]
        %v2407 = vld [vmem:[%s2396 + $0x50] sm:$0xff]
        %v2408 = vld [vmem:[%s2396 + $0x58] sm:$0x3]
        %v2409 = vld [vmem:[%s2396 + $0x60] sm:$0xff]
        %v2410 = vld [vmem:[%s2396 + $0x68] sm:$0xff]
        %v2411 = vld [vmem:[%s2396 + $0x70] sm:$0x3]
        %v2412 = vld [vmem:[%s2396 + $0x78] sm:$0xff]
        %v2413 = vld [vmem:[%s2396 + $0x80] sm:$0xff]
        %v2414 = vld [vmem:[%s2396 + $0x88] sm:$0x3]
        %v2415 = vld [vmem:[%s2396 + $0x90] sm:$0xff]
        %v2416 = vld [vmem:[%s2396 + $0x98] sm:$0xff]
        %v2417 = vld [vmem:[%s2396 + $0xa0] sm:$0x3]
        %v2418 = vld [vmem:[%s2396 + $0xa8] sm:$0xff]
        %v2419 = vld [vmem:[%s2396 + $0xb0] sm:$0xff]
        %v2420 = vld [vmem:[%s2396 + $0xb8] sm:$0x3]
        %v2445 = vrot.slane %v2397, 1
        %v2446 = vrot.slane %v2398, 1
        %v2447 = vsel %vm382, %v2445, %v2446
        %v2448 = vrot.slane %v2399, 1
        %v2449 = vsel %vm382, %v2446, %v2448
        %v2450 = vrot.slane %v2400, 1
        %v2451 = vrot.slane %v2401, 1
        %v2452 = vsel %vm382, %v2450, %v2451
        %v2453 = vrot.slane %v2402, 1
        %v2454 = vsel %vm382, %v2451, %v2453
        %v2455 = vrot.slane %v2403, 1
        %v2456 = vrot.slane %v2404, 1
        %v2457 = vsel %vm382, %v2455, %v2456
        %v2458 = vrot.slane %v2405, 1
        %v2459 = vsel %vm382, %v2456, %v2458
        %v2460 = vrot.slane %v2406, 1
        %v2461 = vrot.slane %v2407, 1
        %v2462 = vsel %vm382, %v2460, %v2461
        %v2463 = vrot.slane %v2408, 1
        %v2464 = vsel %vm382, %v2461, %v2463
        %v2465 = vrot.slane %v2409, 1
        %v2466 = vrot.slane %v2410, 1
        %v2467 = vsel %vm382, %v2465, %v2466
        %v2468 = vrot.slane %v2411, 1
        %v2469 = vsel %vm382, %v2466, %v2468
        %v2470 = vrot.slane %v2412, 1
        %v2471 = vrot.slane %v2413, 1
        %v2472 = vsel %vm382, %v2470, %v2471
        %v2473 = vrot.slane %v2414, 1
        %v2474 = vsel %vm382, %v2471, %v2473
        %v2475 = vrot.slane %v2415, 1
        %v2476 = vrot.slane %v2416, 1
        %v2477 = vsel %vm382, %v2475, %v2476
        %v2478 = vrot.slane %v2417, 1
        %v2479 = vsel %vm382, %v2476, %v2478
        %v2480 = vrot.slane %v2418, 1
        %v2481 = vrot.slane %v2419, 1
        %v2482 = vsel %vm382, %v2480, %v2481
        %v2483 = vrot.slane %v2420, 1
        %v2484 = vsel %vm382, %v2481, %v2483
        %v2501 = vrot.slane %v2397, 2
        %v2502 = vrot.slane %v2398, 2
        %v2503 = vsel %vm453, %v2501, %v2502
        %v2504 = vrot.slane %v2399, 2
        %v2505 = vsel %vm453, %v2502, %v2504
        %v2506 = vrot.slane %v2400, 2
        %v2507 = vrot.slane %v2401, 2
        %v2508 = vsel %vm453, %v2506, %v2507
        %v2509 = vrot.slane %v2402, 2
        %v2510 = vsel %vm453, %v2507, %v2509
        %v2511 = vrot.slane %v2403, 2
        %v2512 = vrot.slane %v2404, 2
        %v2513 = vsel %vm453, %v2511, %v2512
        %v2514 = vrot.slane %v2405, 2
        %v2515 = vsel %vm453, %v2512, %v2514
        %v2516 = vrot.slane %v2406, 2
        %v2517 = vrot.slane %v2407, 2
        %v2518 = vsel %vm453, %v2516, %v2517
        %v2519 = vrot.slane %v2408, 2
        %v2520 = vsel %vm453, %v2517, %v2519
        %v2521 = vrot.slane %v2409, 2
        %v2522 = vrot.slane %v2410, 2
        %v2523 = vsel %vm453, %v2521, %v2522
        %v2524 = vrot.slane %v2411, 2
        %v2525 = vsel %vm453, %v2522, %v2524
        %v2526 = vrot.slane %v2412, 2
        %v2527 = vrot.slane %v2413, 2
        %v2528 = vsel %vm453, %v2526, %v2527
        %v2529 = vrot.slane %v2414, 2
        %v2530 = vsel %vm453, %v2527, %v2529
        %v2531 = vrot.slane %v2415, 2
        %v2532 = vrot.slane %v2416, 2
        %v2533 = vsel %vm453, %v2531, %v2532
        %v2534 = vrot.slane %v2417, 2
        %v2535 = vsel %vm453, %v2532, %v2534
        %v2536 = vrot.slane %v2418, 2
        %v2537 = vrot.slane %v2419, 2
        %v2538 = vsel %vm453, %v2536, %v2537
        %v2539 = vrot.slane %v2420, 2
        %v2540 = vsel %vm453, %v2537, %v2539
        %s2557 = scalar_lea.vmem [#allocation3], 384
        %v2558 = vld [vmem:[%s2557] sm:$0xff]
        %v2559 = vld [vmem:[%s2557 + $0x8] sm:$0xff]
        %v2560 = vld [vmem:[%s2557 + $0x10] sm:$0xff]
        %v2561 = vld [vmem:[%s2557 + $0x18] sm:$0xff]
        %v2562 = vld [vmem:[%s2557 + $0x20] sm:$0xff]
        %v2563 = vld [vmem:[%s2557 + $0x28] sm:$0xff]
        %v2564 = vld [vmem:[%s2557 + $0x30] sm:$0xff]
        %v2565 = vld [vmem:[%s2557 + $0x38] sm:$0xff]
        %v2566 = vld [vmem:[%s2557 + $0x40] sm:$0xff]
        %v2567 = vld [vmem:[%s2557 + $0x48] sm:$0xff]
        %v2568 = vld [vmem:[%s2557 + $0x50] sm:$0xff]
        %v2569 = vld [vmem:[%s2557 + $0x58] sm:$0xff]
        %v2570 = vld [vmem:[%s2557 + $0x60] sm:$0xff]
        %v2571 = vld [vmem:[%s2557 + $0x68] sm:$0xff]
        %v2572 = vld [vmem:[%s2557 + $0x70] sm:$0xff]
        %v2573 = vld [vmem:[%s2557 + $0x78] sm:$0xff]
        %v2574 = vld [vmem:[%s2557 + $0x80] sm:$0xff]
        %v2575 = vld [vmem:[%s2557 + $0x88] sm:$0xff]
        %v2576 = vld [vmem:[%s2557 + $0x90] sm:$0xff]
        %v2577 = vld [vmem:[%s2557 + $0x98] sm:$0xff]
        %v2578 = vld [vmem:[%s2557 + $0xa0] sm:$0xff]
        %v2579 = vld [vmem:[%s2557 + $0xa8] sm:$0xff]
        %v2580 = vld [vmem:[%s2557 + $0xb0] sm:$0xff]
        %v2581 = vld [vmem:[%s2557 + $0xb8] sm:$0xff]
        %v2582 = vld [vmem:[%s2557 + $0xc0] sm:$0xff]
        %v2583 = vld [vmem:[%s2557 + $0xc8] sm:$0xff]
        %v2584 = vld [vmem:[%s2557 + $0xd0] sm:$0xff]
        %v2585 = vld [vmem:[%s2557 + $0xd8] sm:$0xff]
        %v2586 = vld [vmem:[%s2557 + $0xe0] sm:$0xff]
        %v2587 = vld [vmem:[%s2557 + $0xe8] sm:$0xff]
        %v2588 = vld [vmem:[%s2557 + $0xf0] sm:$0xff]
        %v2589 = vld [vmem:[%s2557 + $0xf8] sm:$0xff]
        %v2590 = vld [vmem:[%s2557 + $0x100] sm:$0xff]
        %v2591 = vld [vmem:[%s2557 + $0x108] sm:$0xff]
        %v2592 = vld [vmem:[%s2557 + $0x110] sm:$0xff]
        %v2593 = vld [vmem:[%s2557 + $0x118] sm:$0xff]
        %v2594 = vld [vmem:[%s2557 + $0x120] sm:$0xff]
        %v2595 = vld [vmem:[%s2557 + $0x128] sm:$0xff]
        %v2596 = vld [vmem:[%s2557 + $0x130] sm:$0xff]
        %v2597 = vld [vmem:[%s2557 + $0x138] sm:$0xff]
        %v2598 = vld [vmem:[%s2557 + $0x140] sm:$0xff]
        %v2599 = vld [vmem:[%s2557 + $0x148] sm:$0xff]
        %v2600 = vld [vmem:[%s2557 + $0x150] sm:$0xff]
        %v2601 = vld [vmem:[%s2557 + $0x158] sm:$0xff]
        %v2602 = vld [vmem:[%s2557 + $0x160] sm:$0xff]
        %v2603 = vld [vmem:[%s2557 + $0x168] sm:$0xff]
        %v2604 = vld [vmem:[%s2557 + $0x170] sm:$0xff]
        %v2605 = vld [vmem:[%s2557 + $0x178] sm:$0xff]
        %2606 = vmatprep.subr.mxu0 0.0
        %2607 = vmatpush1.msra.mxu0 %v2558
        %2608 = vmatprep.subr.mxu0 0.0
        %2609 = vmatpush1.msra.mxu0 %v2559
        %2610 = vmatprep.subr.mxu0 0.0
        %2611 = vmatpush1.msra.mxu0 %v2560
        %2612 = vmatprep.subr.mxu0 0.0
        %2613 = vmatpush1.msra.mxu0 %v2561
        %2614 = vmatprep.subr.mxu0 0.0
        %2615 = vmatpush1.msra.mxu0 %v2562
        %2616 = vmatprep.subr.mxu0 0.0
        %2617 = vmatpush1.msra.mxu0 %v2563
        %2618 = vmatprep.subr.mxu0 0.0
        %2619 = vmatpush1.msra.mxu0 %v2564
        %2620 = vmatprep.subr.mxu0 0.0
        %2621 = vmatpush1.msra.mxu0 %v2565
        %2622 = vmatprep.subr.mxu0 0.0
        %2623 = vmatpush1.msra.mxu0 %v2566
        %2624 = vmatprep.subr.mxu0 0.0
        %2625 = vmatpush1.msra.mxu0 %v2567
        %2626 = vmatprep.subr.mxu0 0.0
        %2627 = vmatpush1.msra.mxu0 %v2568
        %2628 = vmatprep.subr.mxu0 0.0
        %2629 = vmatpush1.msra.mxu0 %v2569
        %2630 = vmatprep.subr.mxu0 0.0
        %2631 = vmatpush1.msra.mxu0 %v2570
        %2632 = vmatprep.subr.mxu0 0.0
        %2633 = vmatpush1.msra.mxu0 %v2571
        %2634 = vmatprep.subr.mxu0 0.0
        %2635 = vmatpush1.msra.mxu0 %v2572
        %2636 = vmatprep.subr.mxu0 0.0
        %2637 = vmatpush1.msra.mxu0 %v2573
        %2638 = vmatprep.subr.mxu0 0.0
        %2639 = vmatpush1.msra.mxu0 %v2574
        %2640 = vmatprep.subr.mxu0 0.0
        %2641 = vmatpush1.msra.mxu0 %v2575
        %2642 = vmatprep.subr.mxu0 0.0
        %2643 = vmatpush1.msra.mxu0 %v2576
        %2644 = vmatprep.subr.mxu0 0.0
        %2645 = vmatpush1.msra.mxu0 %v2577
        %2646 = vmatprep.subr.mxu0 0.0
        %2647 = vmatpush1.msra.mxu0 %v2578
        %2648 = vmatprep.subr.mxu0 0.0
        %2649 = vmatpush1.msra.mxu0 %v2579
        %2650 = vmatprep.subr.mxu0 0.0
        %2651 = vmatpush1.msra.mxu0 %v2580
        %2652 = vmatprep.subr.mxu0 0.0
        %2653 = vmatpush1.msra.mxu0 %v2581
        %2654 = vmatprep.subr.mxu0 0.0
        %2655 = vmatpush1.msra.mxu0 %v2582
        %2656 = vmatprep.subr.mxu0 0.0
        %2657 = vmatpush1.msra.mxu0 %v2583
        %2658 = vmatprep.subr.mxu0 0.0
        %2659 = vmatpush1.msra.mxu0 %v2584
        %2660 = vmatprep.subr.mxu0 0.0
        %2661 = vmatpush1.msra.mxu0 %v2585
        %2662 = vmatprep.subr.mxu0 0.0
        %2663 = vmatpush1.msra.mxu0 %v2586
        %2664 = vmatprep.subr.mxu0 0.0
        %2665 = vmatpush1.msra.mxu0 %v2587
        %2666 = vmatprep.subr.mxu0 0.0
        %2667 = vmatpush1.msra.mxu0 %v2588
        %2668 = vmatprep.subr.mxu0 0.0
        %2669 = vmatpush1.msra.mxu0 %v2589
        %2670 = vmatprep.mubr.f32.mxu0 %v2447
        %2671 = vmatmul.mubr.f32.gmra.mrb[0].mxu0 %v2397
        %v2672 = vpop.f32.mrb[0].mxu0
        %v2673 = vadd.f32 0.0, %v2672
        %v2674 = vpop.f32.mrb[0].mxu0
        %2675 = vmatprep.mubr.f32.mxu0 %v2449
        %2676 = vmatmul.mubr.f32.gmra.mrb[0].mxu0 %v2398
        %v2677 = vpop.f32.mrb[0].mxu0
        %v2678 = vadd.f32 0.0, %v2677
        %v2679 = vpop.f32.mrb[0].mxu0
        %2680 = vmatprep.mubr.f32.mxu0 %v2452
        %2681 = vmatmul.mubr.f32.gmra.mrb[0].mxu0 %v2400
        %v2682 = vpop.f32.mrb[0].mxu0
        %v2683 = vadd.f32 0.0, %v2682
        %v2684 = vpop.f32.mrb[0].mxu0
        %2685 = vmatprep.mubr.f32.mxu0 %v2454
        %2686 = vmatmul.mubr.f32.gmra.mrb[0].mxu0 %v2401
        %v2687 = vpop.f32.mrb[0].mxu0
        %v2688 = vadd.f32 0.0, %v2687
        %v2689 = vpop.f32.mrb[0].mxu0
        %2690 = vmatprep.mubr.f32.mxu0 %v2457
        %2691 = vmatmul.mubr.f32.gmra.mrb[0].mxu0 %v2403
        %v2692 = vpop.f32.mrb[0].mxu0
        %v2693 = vadd.f32 0.0, %v2692
        %v2694 = vpop.f32.mrb[0].mxu0
        %2695 = vmatprep.mubr.f32.mxu0 %v2459
        %2696 = vmatmul.mubr.f32.gmra.mrb[0].mxu0 %v2404
        %v2697 = vpop.f32.mrb[0].mxu0
        %v2698 = vadd.f32 0.0, %v2697
        %v2699 = vpop.f32.mrb[0].mxu0
        %2700 = vmatprep.mubr.f32.mxu0 %v2462
        %2701 = vmatmul.mubr.f32.gmra.mrb[0].mxu0 %v2406
        %v2702 = vpop.f32.mrb[0].mxu0
        %v2703 = vadd.f32 0.0, %v2702
        %v2704 = vpop.f32.mrb[0].mxu0
        %2705 = vmatprep.mubr.f32.mxu0 %v2464
        %2706 = vmatmul.mubr.f32.gmra.mrb[0].mxu0 %v2407
        %v2707 = vpop.f32.mrb[0].mxu0
        %v2708 = vadd.f32 0.0, %v2707
        %v2709 = vpop.f32.mrb[0].mxu0
        %2710 = vmatprep.mubr.f32.mxu0 %v2467
        %2711 = vmatmul.mubr.f32.gmra.mrb[0].mxu0 %v2409
        %v2712 = vpop.f32.mrb[0].mxu0
        %v2713 = vadd.f32 0.0, %v2712
        %v2714 = vpop.f32.mrb[0].mxu0
        %2715 = vmatprep.mubr.f32.mxu0 %v2469
        %2716 = vmatmul.mubr.f32.gmra.mrb[0].mxu0 %v2410
        %v2717 = vpop.f32.mrb[0].mxu0
        %v2718 = vadd.f32 0.0, %v2717
        %v2719 = vpop.f32.mrb[0].mxu0
        %2720 = vmatprep.mubr.f32.mxu0 %v2472
        %2721 = vmatmul.mubr.f32.gmra.mrb[0].mxu0 %v2412
        %v2722 = vpop.f32.mrb[0].mxu0
        %v2723 = vadd.f32 0.0, %v2722
        %v2724 = vpop.f32.mrb[0].mxu0
        %2725 = vmatprep.mubr.f32.mxu0 %v2474
        %2726 = vmatmul.mubr.f32.gmra.mrb[0].mxu0 %v2413
        %v2727 = vpop.f32.mrb[0].mxu0
        %v2728 = vadd.f32 0.0, %v2727
        %v2729 = vpop.f32.mrb[0].mxu0
        %2730 = vmatprep.mubr.f32.mxu0 %v2477
        %2731 = vmatmul.mubr.f32.gmra.mrb[0].mxu0 %v2415
        %v2732 = vpop.f32.mrb[0].mxu0
        %v2733 = vadd.f32 0.0, %v2732
        %v2734 = vpop.f32.mrb[0].mxu0
        %2735 = vmatprep.mubr.f32.mxu0 %v2479
        %2736 = vmatmul.mubr.f32.gmra.mrb[0].mxu0 %v2416
        %v2737 = vpop.f32.mrb[0].mxu0
        %v2738 = vadd.f32 0.0, %v2737
        %v2739 = vpop.f32.mrb[0].mxu0
        %2740 = vmatprep.mubr.f32.mxu0 %v2482
        %2741 = vmatmul.mubr.f32.gmra.mrb[0].mxu0 %v2418
        %v2742 = vpop.f32.mrb[0].mxu0
        %v2743 = vadd.f32 0.0, %v2742
        %v2744 = vpop.f32.mrb[0].mxu0
        %2745 = vmatprep.mubr.f32.mxu0 %v2484
        %2746 = vmatmul.mubr.f32.gmra.mrb[0].mxu0 %v2419
        %v2747 = vpop.f32.mrb[0].mxu0
        %v2748 = vadd.f32 0.0, %v2747
        %v2749 = vpop.f32.mrb[0].mxu0
        %2750 = vdwg.mxu0
        %2751 = vmatprep.subr.mxu0 0.0
        %2752 = vmatpush1.msra.mxu0 %v2590
        %2753 = vmatprep.subr.mxu0 0.0
        %2754 = vmatpush1.msra.mxu0 %v2591
        %2755 = vmatprep.subr.mxu0 0.0
        %2756 = vmatpush1.msra.mxu0 %v2592
        %2757 = vmatprep.subr.mxu0 0.0
        %2758 = vmatpush1.msra.mxu0 %v2593
        %2759 = vmatprep.subr.mxu0 0.0
        %2760 = vmatpush1.msra.mxu0 %v2594
        %2761 = vmatprep.subr.mxu0 0.0
        %2762 = vmatpush1.msra.mxu0 %v2595
        %2763 = vmatprep.subr.mxu0 0.0
        %2764 = vmatpush1.msra.mxu0 %v2596
        %2765 = vmatprep.subr.mxu0 0.0
        %2766 = vmatpush1.msra.mxu0 %v2597
        %2767 = vmatprep.subr.mxu0 0.0
        %2768 = vmatpush1.msra.mxu0 %v2598
        %2769 = vmatprep.subr.mxu0 0.0
        %2770 = vmatpush1.msra.mxu0 %v2599
        %2771 = vmatprep.subr.mxu0 0.0
        %2772 = vmatpush1.msra.mxu0 %v2600
        %2773 = vmatprep.subr.mxu0 0.0
        %2774 = vmatpush1.msra.mxu0 %v2601
        %2775 = vmatprep.subr.mxu0 0.0
        %2776 = vmatpush1.msra.mxu0 %v2602
        %2777 = vmatprep.subr.mxu0 0.0
        %2778 = vmatpush1.msra.mxu0 %v2603
        %2779 = vmatprep.subr.mxu0 0.0
        %2780 = vmatpush1.msra.mxu0 %v2604
        %2781 = vmatprep.subr.mxu0 0.0
        %2782 = vmatpush1.msra.mxu0 %v2605
        %2783 = vmatprep.subr.mxu0 0.0
        %2784 = vmatpush1.msra.mxu0 0.0
        %2785 = vmatprep.subr.mxu0 0.0
        %2786 = vmatpush1.msra.mxu0 0.0
        %2787 = vmatprep.subr.mxu0 0.0
        %2788 = vmatpush1.msra.mxu0 0.0
        %2789 = vmatprep.subr.mxu0 0.0
        %2790 = vmatpush1.msra.mxu0 0.0
        %2791 = vmatprep.subr.mxu0 0.0
        %2792 = vmatpush1.msra.mxu0 0.0
        %2793 = vmatprep.subr.mxu0 0.0
        %2794 = vmatpush1.msra.mxu0 0.0
        %2795 = vmatprep.subr.mxu0 0.0
        %2796 = vmatpush1.msra.mxu0 0.0
        %2797 = vmatprep.subr.mxu0 0.0
        %2798 = vmatpush1.msra.mxu0 0.0
        %2799 = vmatprep.subr.mxu0 0.0
        %2800 = vmatpush1.msra.mxu0 0.0
        %2801 = vmatprep.subr.mxu0 0.0
        %2802 = vmatpush1.msra.mxu0 0.0
        %2803 = vmatprep.subr.mxu0 0.0
        %2804 = vmatpush1.msra.mxu0 0.0
        %2805 = vmatprep.subr.mxu0 0.0
        %2806 = vmatpush1.msra.mxu0 0.0
        %2807 = vmatprep.subr.mxu0 0.0
        %2808 = vmatpush1.msra.mxu0 0.0
        %2809 = vmatprep.subr.mxu0 0.0
        %2810 = vmatpush1.msra.mxu0 0.0
        %2811 = vmatprep.subr.mxu0 0.0
        %2812 = vmatpush1.msra.mxu0 0.0
        %2813 = vmatprep.subr.mxu0 0.0
        %2814 = vmatpush1.msra.mxu0 0.0
        %2815 = vmatprep.mubr.f32.mxu0 0.0
        %2816 = vmatmul.mubr.f32.gmra.mrb[0].mxu0 %v2503
        %v2817 = vpop.f32.mrb[0].mxu0
        %v2818 = vadd.f32 %v2673, %v2817
        %v2819 = vpop.f32.mrb[0].mxu0
        %2820 = vmatprep.mubr.f32.mxu0 0.0
        %2821 = vmatmul.mubr.f32.gmra.mrb[0].mxu0 %v2505
        %v2822 = vpop.f32.mrb[0].mxu0
        %v2823 = vadd.f32 %v2678, %v2822
        %v2824 = vpop.f32.mrb[0].mxu0
        %2825 = vmatprep.mubr.f32.mxu0 0.0
        %2826 = vmatmul.mubr.f32.gmra.mrb[0].mxu0 %v2508
        %v2827 = vpop.f32.mrb[0].mxu0
        %v2828 = vadd.f32 %v2683, %v2827
        %v2829 = vpop.f32.mrb[0].mxu0
        %2830 = vmatprep.mubr.f32.mxu0 0.0
        %2831 = vmatmul.mubr.f32.gmra.mrb[0].mxu0 %v2510
        %v2832 = vpop.f32.mrb[0].mxu0
        %v2833 = vadd.f32 %v2688, %v2832
        %v2834 = vpop.f32.mrb[0].mxu0
        %2835 = vmatprep.mubr.f32.mxu0 0.0
        %2836 = vmatmul.mubr.f32.gmra.mrb[0].mxu0 %v2513
        %v2837 = vpop.f32.mrb[0].mxu0
        %v2838 = vadd.f32 %v2693, %v2837
        %v2839 = vpop.f32.mrb[0].mxu0
        %2840 = vmatprep.mubr.f32.mxu0 0.0
        %2841 = vmatmul.mubr.f32.gmra.mrb[0].mxu0 %v2515
        %v2842 = vpop.f32.mrb[0].mxu0
        %v2843 = vadd.f32 %v2698, %v2842
        %v2844 = vpop.f32.mrb[0].mxu0
        %2845 = vmatprep.mubr.f32.mxu0 0.0
        %2846 = vmatmul.mubr.f32.gmra.mrb[0].mxu0 %v2518
        %v2847 = vpop.f32.mrb[0].mxu0
        %v2848 = vadd.f32 %v2703, %v2847
        %v2849 = vpop.f32.mrb[0].mxu0
        %2850 = vmatprep.mubr.f32.mxu0 0.0
        %2851 = vmatmul.mubr.f32.gmra.mrb[0].mxu0 %v2520
        %v2852 = vpop.f32.mrb[0].mxu0
        %v2853 = vadd.f32 %v2708, %v2852
        %v2854 = vpop.f32.mrb[0].mxu0
        %2855 = vmatprep.mubr.f32.mxu0 0.0
        %2856 = vmatmul.mubr.f32.gmra.mrb[0].mxu0 %v2523
        %v2857 = vpop.f32.mrb[0].mxu0
        %v2858 = vadd.f32 %v2713, %v2857
        %v2859 = vpop.f32.mrb[0].mxu0
        %2860 = vmatprep.mubr.f32.mxu0 0.0
        %2861 = vmatmul.mubr.f32.gmra.mrb[0].mxu0 %v2525
        %v2862 = vpop.f32.mrb[0].mxu0
        %v2863 = vadd.f32 %v2718, %v2862
        %v2864 = vpop.f32.mrb[0].mxu0
        %2865 = vmatprep.mubr.f32.mxu0 0.0
        %2866 = vmatmul.mubr.f32.gmra.mrb[0].mxu0 %v2528
        %v2867 = vpop.f32.mrb[0].mxu0
        %v2868 = vadd.f32 %v2723, %v2867
        %v2869 = vpop.f32.mrb[0].mxu0
        %2870 = vmatprep.mubr.f32.mxu0 0.0
        %2871 = vmatmul.mubr.f32.gmra.mrb[0].mxu0 %v2530
        %v2872 = vpop.f32.mrb[0].mxu0
        %v2873 = vadd.f32 %v2728, %v2872
        %v2874 = vpop.f32.mrb[0].mxu0
        %2875 = vmatprep.mubr.f32.mxu0 0.0
        %2876 = vmatmul.mubr.f32.gmra.mrb[0].mxu0 %v2533
        %v2877 = vpop.f32.mrb[0].mxu0
        %v2878 = vadd.f32 %v2733, %v2877
        %v2879 = vpop.f32.mrb[0].mxu0
        %2880 = vmatprep.mubr.f32.mxu0 0.0
        %2881 = vmatmul.mubr.f32.gmra.mrb[0].mxu0 %v2535
        %v2882 = vpop.f32.mrb[0].mxu0
        %v2883 = vadd.f32 %v2738, %v2882
        %v2884 = vpop.f32.mrb[0].mxu0
        %2885 = vmatprep.mubr.f32.mxu0 0.0
        %2886 = vmatmul.mubr.f32.gmra.mrb[0].mxu0 %v2538
        %v2887 = vpop.f32.mrb[0].mxu0
        %v2888 = vadd.f32 %v2743, %v2887
        %v2889 = vpop.f32.mrb[0].mxu0
        %2890 = vmatprep.mubr.f32.mxu0 0.0
        %2891 = vmatmul.mubr.f32.gmra.mrb[0].mxu0 %v2540
        %v2892 = vpop.f32.mrb[0].mxu0
        %v2893 = vadd.f32 %v2748, %v2892
        %v2894 = vpop.f32.mrb[0].mxu0
        %2895 = vdwg.mxu0
        %2896 = vmatprep.subr.mxu0 0.0
        %2897 = vmatpush1.msra.mxu0 %v2348
        %2898 = vmatprep.subr.mxu0 0.0
        %2899 = vmatpush1.msra.mxu0 %v2349
        %2900 = vmatprep.subr.mxu0 0.0
        %2901 = vmatpush1.msra.mxu0 %v2350
        %2902 = vmatprep.subr.mxu0 0.0
        %2903 = vmatpush1.msra.mxu0 %v2351
        %2904 = vmatprep.subr.mxu0 0.0
        %2905 = vmatpush1.msra.mxu0 %v2352
        %2906 = vmatprep.subr.mxu0 0.0
        %2907 = vmatpush1.msra.mxu0 %v2353
        %2908 = vmatprep.subr.mxu0 0.0
        %2909 = vmatpush1.msra.mxu0 %v2354
        %2910 = vmatprep.subr.mxu0 0.0
        %2911 = vmatpush1.msra.mxu0 %v2355
        %2912 = vmatprep.subr.mxu0 0.0
        %2913 = vmatpush1.msra.mxu0 %v2356
        %2914 = vmatprep.subr.mxu0 0.0
        %2915 = vmatpush1.msra.mxu0 %v2357
        %2916 = vmatprep.subr.mxu0 0.0
        %2917 = vmatpush1.msra.mxu0 %v2358
        %2918 = vmatprep.subr.mxu0 0.0
        %2919 = vmatpush1.msra.mxu0 %v2359
        %2920 = vmatprep.subr.mxu0 0.0
        %2921 = vmatpush1.msra.mxu0 %v2360
        %2922 = vmatprep.subr.mxu0 0.0
        %2923 = vmatpush1.msra.mxu0 %v2361
        %2924 = vmatprep.subr.mxu0 0.0
        %2925 = vmatpush1.msra.mxu0 %v2362
        %2926 = vmatprep.subr.mxu0 0.0
        %2927 = vmatpush1.msra.mxu0 %v2363
        %2928 = vmatprep.subr.mxu0 0.0
        %2929 = vmatpush1.msra.mxu0 %v2364
        %2930 = vmatprep.subr.mxu0 0.0
        %2931 = vmatpush1.msra.mxu0 %v2365
        %2932 = vmatprep.subr.mxu0 0.0
        %2933 = vmatpush1.msra.mxu0 %v2366
        %2934 = vmatprep.subr.mxu0 0.0
        %2935 = vmatpush1.msra.mxu0 %v2367
        %2936 = vmatprep.subr.mxu0 0.0
        %2937 = vmatpush1.msra.mxu0 %v2368
        %2938 = vmatprep.subr.mxu0 0.0
        %2939 = vmatpush1.msra.mxu0 %v2369
        %2940 = vmatprep.subr.mxu0 0.0
        %2941 = vmatpush1.msra.mxu0 %v2370
        %2942 = vmatprep.subr.mxu0 0.0
        %2943 = vmatpush1.msra.mxu0 %v2371
        %2944 = vmatprep.subr.mxu0 0.0
        %2945 = vmatpush1.msra.mxu0 %v2372
        %2946 = vmatprep.subr.mxu0 0.0
        %2947 = vmatpush1.msra.mxu0 %v2373
        %2948 = vmatprep.subr.mxu0 0.0
        %2949 = vmatpush1.msra.mxu0 %v2374
        %2950 = vmatprep.subr.mxu0 0.0
        %2951 = vmatpush1.msra.mxu0 %v2375
        %2952 = vmatprep.subr.mxu0 0.0
        %2953 = vmatpush1.msra.mxu0 %v2376
        %2954 = vmatprep.subr.mxu0 0.0
        %2955 = vmatpush1.msra.mxu0 %v2377
        %2956 = vmatprep.subr.mxu0 0.0
        %2957 = vmatpush1.msra.mxu0 %v2378
        %2958 = vmatprep.subr.mxu0 0.0
        %2959 = vmatpush1.msra.mxu0 %v2379
        %2960 = vmatprep.mubr.f32.mxu0 %v2238
        %2961 = vmatmul.mubr.f32.gmra.mrb[0].mxu0 %v2188
        %v2962 = vpop.f32.mrb[0].mxu0
        %v2963 = vadd.f32 %v2818, %v2962
        %v2964 = vpop.f32.mrb[0].mxu0
        %2965 = vmatprep.mubr.f32.mxu0 %v2240
        %2966 = vmatmul.mubr.f32.gmra.mrb[0].mxu0 %v2189
        %v2967 = vpop.f32.mrb[0].mxu0
        %v2968 = vadd.f32 %v2823, %v2967
        %v2969 = vpop.f32.mrb[0].mxu0
        %2970 = vmatprep.mubr.f32.mxu0 %v2243
        %2971 = vmatmul.mubr.f32.gmra.mrb[0].mxu0 %v2191
        %v2972 = vpop.f32.mrb[0].mxu0
        %v2973 = vadd.f32 %v2828, %v2972
        %v2974 = vpop.f32.mrb[0].mxu0
        %2975 = vmatprep.mubr.f32.mxu0 %v2245
        %2976 = vmatmul.mubr.f32.gmra.mrb[0].mxu0 %v2192
        %v2977 = vpop.f32.mrb[0].mxu0
        %v2978 = vadd.f32 %v2833, %v2977
        %v2979 = vpop.f32.mrb[0].mxu0
        %2980 = vmatprep.mubr.f32.mxu0 %v2248
        %2981 = vmatmul.mubr.f32.gmra.mrb[0].mxu0 %v2194
        %v2982 = vpop.f32.mrb[0].mxu0
        %v2983 = vadd.f32 %v2838, %v2982
        %v2984 = vpop.f32.mrb[0].mxu0
        %2985 = vmatprep.mubr.f32.mxu0 %v2250
        %2986 = vmatmul.mubr.f32.gmra.mrb[0].mxu0 %v2195
        %v2987 = vpop.f32.mrb[0].mxu0
        %v2988 = vadd.f32 %v2843, %v2987
        %v2989 = vpop.f32.mrb[0].mxu0
        %2990 = vmatprep.mubr.f32.mxu0 %v2253
        %2991 = vmatmul.mubr.f32.gmra.mrb[0].mxu0 %v2197
        %v2992 = vpop.f32.mrb[0].mxu0
        %v2993 = vadd.f32 %v2848, %v2992
        %v2994 = vpop.f32.mrb[0].mxu0
        %2995 = vmatprep.mubr.f32.mxu0 %v2255
        %2996 = vmatmul.mubr.f32.gmra.mrb[0].mxu0 %v2198
        %v2997 = vpop.f32.mrb[0].mxu0
        %v2998 = vadd.f32 %v2853, %v2997
        %v2999 = vpop.f32.mrb[0].mxu0
        %3000 = vmatprep.mubr.f32.mxu0 %v2258
        %3001 = vmatmul.mubr.f32.gmra.mrb[0].mxu0 %v2200
        %v3002 = vpop.f32.mrb[0].mxu0
        %v3003 = vadd.f32 %v2858, %v3002
        %v3004 = vpop.f32.mrb[0].mxu0
        %3005 = vmatprep.mubr.f32.mxu0 %v2260
        %3006 = vmatmul.mubr.f32.gmra.mrb[0].mxu0 %v2201
        %v3007 = vpop.f32.mrb[0].mxu0
        %v3008 = vadd.f32 %v2863, %v3007
        %v3009 = vpop.f32.mrb[0].mxu0
        %3010 = vmatprep.mubr.f32.mxu0 %v2263
        %3011 = vmatmul.mubr.f32.gmra.mrb[0].mxu0 %v2203
        %v3012 = vpop.f32.mrb[0].mxu0
        %v3013 = vadd.f32 %v2868, %v3012
        %v3014 = vpop.f32.mrb[0].mxu0
        %3015 = vmatprep.mubr.f32.mxu0 %v2265
        %3016 = vmatmul.mubr.f32.gmra.mrb[0].mxu0 %v2204
        %v3017 = vpop.f32.mrb[0].mxu0
        %v3018 = vadd.f32 %v2873, %v3017
        %v3019 = vpop.f32.mrb[0].mxu0
        %3020 = vmatprep.mubr.f32.mxu0 %v2268
        %3021 = vmatmul.mubr.f32.gmra.mrb[0].mxu0 %v2206
        %v3022 = vpop.f32.mrb[0].mxu0
        %v3023 = vadd.f32 %v2878, %v3022
        %v3024 = vpop.f32.mrb[0].mxu0
        %3025 = vmatprep.mubr.f32.mxu0 %v2270
        %3026 = vmatmul.mubr.f32.gmra.mrb[0].mxu0 %v2207
        %v3027 = vpop.f32.mrb[0].mxu0
        %v3028 = vadd.f32 %v2883, %v3027
        %v3029 = vpop.f32.mrb[0].mxu0
        %3030 = vmatprep.mubr.f32.mxu0 %v2273
        %3031 = vmatmul.mubr.f32.gmra.mrb[0].mxu0 %v2209
        %v3032 = vpop.f32.mrb[0].mxu0
        %v3033 = vadd.f32 %v2888, %v3032
        %v3034 = vpop.f32.mrb[0].mxu0
        %3035 = vmatprep.mubr.f32.mxu0 %v2275
        %3036 = vmatmul.mubr.f32.gmra.mrb[0].mxu0 %v2210
        %v3037 = vpop.f32.mrb[0].mxu0
        %v3038 = vadd.f32 %v2893, %v3037
        %v3039 = vpop.f32.mrb[0].mxu0
        %3040 = vdwg.mxu0
        %3041 = vmatprep.subr.mxu0 0.0
        %3042 = vmatpush1.msra.mxu0 %v2380
        %3043 = vmatprep.subr.mxu0 0.0
        %3044 = vmatpush1.msra.mxu0 %v2381
        %3045 = vmatprep.subr.mxu0 0.0
        %3046 = vmatpush1.msra.mxu0 %v2382
        %3047 = vmatprep.subr.mxu0 0.0
        %3048 = vmatpush1.msra.mxu0 %v2383
        %3049 = vmatprep.subr.mxu0 0.0
        %3050 = vmatpush1.msra.mxu0 %v2384
        %3051 = vmatprep.subr.mxu0 0.0
        %3052 = vmatpush1.msra.mxu0 %v2385
        %3053 = vmatprep.subr.mxu0 0.0
        %3054 = vmatpush1.msra.mxu0 %v2386
        %3055 = vmatprep.subr.mxu0 0.0
        %3056 = vmatpush1.msra.mxu0 %v2387
        %3057 = vmatprep.subr.mxu0 0.0
        %3058 = vmatpush1.msra.mxu0 %v2388
        %3059 = vmatprep.subr.mxu0 0.0
        %3060 = vmatpush1.msra.mxu0 %v2389
        %3061 = vmatprep.subr.mxu0 0.0
        %3062 = vmatpush1.msra.mxu0 %v2390
        %3063 = vmatprep.subr.mxu0 0.0
        %3064 = vmatpush1.msra.mxu0 %v2391
        %3065 = vmatprep.subr.mxu0 0.0
        %3066 = vmatpush1.msra.mxu0 %v2392
        %3067 = vmatprep.subr.mxu0 0.0
        %3068 = vmatpush1.msra.mxu0 %v2393
        %3069 = vmatprep.subr.mxu0 0.0
        %3070 = vmatpush1.msra.mxu0 %v2394
        %3071 = vmatprep.subr.mxu0 0.0
        %3072 = vmatpush1.msra.mxu0 %v2395
        %3073 = vmatprep.subr.mxu0 0.0
        %3074 = vmatpush1.msra.mxu0 0.0
        %3075 = vmatprep.subr.mxu0 0.0
        %3076 = vmatpush1.msra.mxu0 0.0
        %3077 = vmatprep.subr.mxu0 0.0
        %3078 = vmatpush1.msra.mxu0 0.0
        %3079 = vmatprep.subr.mxu0 0.0
        %3080 = vmatpush1.msra.mxu0 0.0
        %3081 = vmatprep.subr.mxu0 0.0
        %3082 = vmatpush1.msra.mxu0 0.0
        %3083 = vmatprep.subr.mxu0 0.0
        %3084 = vmatpush1.msra.mxu0 0.0
        %3085 = vmatprep.subr.mxu0 0.0
        %3086 = vmatpush1.msra.mxu0 0.0
        %3087 = vmatprep.subr.mxu0 0.0
        %3088 = vmatpush1.msra.mxu0 0.0
        %3089 = vmatprep.subr.mxu0 0.0
        %3090 = vmatpush1.msra.mxu0 0.0
        %3091 = vmatprep.subr.mxu0 0.0
        %3092 = vmatpush1.msra.mxu0 0.0
        %3093 = vmatprep.subr.mxu0 0.0
        %3094 = vmatpush1.msra.mxu0 0.0
        %3095 = vmatprep.subr.mxu0 0.0
        %3096 = vmatpush1.msra.mxu0 0.0
        %3097 = vmatprep.subr.mxu0 0.0
        %3098 = vmatpush1.msra.mxu0 0.0
        %3099 = vmatprep.subr.mxu0 0.0
        %3100 = vmatpush1.msra.mxu0 0.0
        %3101 = vmatprep.subr.mxu0 0.0
        %3102 = vmatpush1.msra.mxu0 0.0
        %3103 = vmatprep.subr.mxu0 0.0
        %3104 = vmatpush1.msra.mxu0 0.0
        %3105 = vmatprep.mubr.f32.mxu0 0.0
        %3106 = vmatmul.mubr.f32.gmra.mrb[0].mxu0 %v2294
        %v3107 = vpop.f32.mrb[0].mxu0
        %v3108 = vadd.f32 %v2963, %v3107
        %v3109 = vpop.f32.mrb[0].mxu0
        %3110 = vmatprep.mubr.f32.mxu0 0.0
        %3111 = vmatmul.mubr.f32.gmra.mrb[0].mxu0 %v2296
        %v3112 = vpop.f32.mrb[0].mxu0
        %v3113 = vadd.f32 %v2968, %v3112
        %v3114 = vpop.f32.mrb[0].mxu0
        %3115 = vmatprep.mubr.f32.mxu0 0.0
        %3116 = vmatmul.mubr.f32.gmra.mrb[0].mxu0 %v2299
        %v3117 = vpop.f32.mrb[0].mxu0
        %v3118 = vadd.f32 %v2973, %v3117
        %v3119 = vpop.f32.mrb[0].mxu0
        %3120 = vmatprep.mubr.f32.mxu0 0.0
        %3121 = vmatmul.mubr.f32.gmra.mrb[0].mxu0 %v2301
        %v3122 = vpop.f32.mrb[0].mxu0
        %v3123 = vadd.f32 %v2978, %v3122
        %v3124 = vpop.f32.mrb[0].mxu0
        %3125 = vmatprep.mubr.f32.mxu0 0.0
        %3126 = vmatmul.mubr.f32.gmra.mrb[0].mxu0 %v2304
        %v3127 = vpop.f32.mrb[0].mxu0
        %v3128 = vadd.f32 %v2983, %v3127
        %v3129 = vpop.f32.mrb[0].mxu0
        %3130 = vmatprep.mubr.f32.mxu0 0.0
        %3131 = vmatmul.mubr.f32.gmra.mrb[0].mxu0 %v2306
        %v3132 = vpop.f32.mrb[0].mxu0
        %v3133 = vadd.f32 %v2988, %v3132
        %v3134 = vpop.f32.mrb[0].mxu0
        %3135 = vmatprep.mubr.f32.mxu0 0.0
        %3136 = vmatmul.mubr.f32.gmra.mrb[0].mxu0 %v2309
        %v3137 = vpop.f32.mrb[0].mxu0
        %v3138 = vadd.f32 %v2993, %v3137
        %v3139 = vpop.f32.mrb[0].mxu0
        %3140 = vmatprep.mubr.f32.mxu0 0.0
        %3141 = vmatmul.mubr.f32.gmra.mrb[0].mxu0 %v2311
        %v3142 = vpop.f32.mrb[0].mxu0
        %v3143 = vadd.f32 %v2998, %v3142
        %v3144 = vpop.f32.mrb[0].mxu0
        %3145 = vmatprep.mubr.f32.mxu0 0.0
        %3146 = vmatmul.mubr.f32.gmra.mrb[0].mxu0 %v2314
        %v3147 = vpop.f32.mrb[0].mxu0
        %v3148 = vadd.f32 %v3003, %v3147
        %v3149 = vpop.f32.mrb[0].mxu0
        %3150 = vmatprep.mubr.f32.mxu0 0.0
        %3151 = vmatmul.mubr.f32.gmra.mrb[0].mxu0 %v2316
        %v3152 = vpop.f32.mrb[0].mxu0
        %v3153 = vadd.f32 %v3008, %v3152
        %v3154 = vpop.f32.mrb[0].mxu0
        %3155 = vmatprep.mubr.f32.mxu0 0.0
        %3156 = vmatmul.mubr.f32.gmra.mrb[0].mxu0 %v2319
        %v3157 = vpop.f32.mrb[0].mxu0
        %v3158 = vadd.f32 %v3013, %v3157
        %v3159 = vpop.f32.mrb[0].mxu0
        %3160 = vmatprep.mubr.f32.mxu0 0.0
        %3161 = vmatmul.mubr.f32.gmra.mrb[0].mxu0 %v2321
        %v3162 = vpop.f32.mrb[0].mxu0
        %v3163 = vadd.f32 %v3018, %v3162
        %v3164 = vpop.f32.mrb[0].mxu0
        %3165 = vmatprep.mubr.f32.mxu0 0.0
        %3166 = vmatmul.mubr.f32.gmra.mrb[0].mxu0 %v2324
        %v3167 = vpop.f32.mrb[0].mxu0
        %v3168 = vadd.f32 %v3023, %v3167
        %v3169 = vpop.f32.mrb[0].mxu0
        %3170 = vmatprep.mubr.f32.mxu0 0.0
        %3171 = vmatmul.mubr.f32.gmra.mrb[0].mxu0 %v2326
        %v3172 = vpop.f32.mrb[0].mxu0
        %v3173 = vadd.f32 %v3028, %v3172
        %v3174 = vpop.f32.mrb[0].mxu0
        %3175 = vmatprep.mubr.f32.mxu0 0.0
        %3176 = vmatmul.mubr.f32.gmra.mrb[0].mxu0 %v2329
        %v3177 = vpop.f32.mrb[0].mxu0
        %v3178 = vadd.f32 %v3033, %v3177
        %v3179 = vpop.f32.mrb[0].mxu0
        %3180 = vmatprep.mubr.f32.mxu0 0.0
        %3181 = vmatmul.mubr.f32.gmra.mrb[0].mxu0 %v2331
        %v3182 = vpop.f32.mrb[0].mxu0
        %v3183 = vadd.f32 %v3038, %v3182
        %v3184 = vpop.f32.mrb[0].mxu0
        %3185 = vdwg.mxu0
        %s3186 = scalar_lea.vmem [#allocation2], 48
        %v3187 = vld [vmem:[%s3186] sm:$0xff]
        %v3188 = vld [vmem:[%s3186 + $0x8] sm:$0xff]
        %v3189 = vld [vmem:[%s3186 + $0x10] sm:$0x3]
        %v3190 = vld [vmem:[%s3186 + $0x18] sm:$0xff]
        %v3191 = vld [vmem:[%s3186 + $0x20] sm:$0xff]
        %v3192 = vld [vmem:[%s3186 + $0x28] sm:$0x3]
        %v3193 = vld [vmem:[%s3186 + $0x30] sm:$0xff]
        %v3194 = vld [vmem:[%s3186 + $0x38] sm:$0xff]
        %v3195 = vld [vmem:[%s3186 + $0x40] sm:$0x3]
        %v3196 = vld [vmem:[%s3186 + $0x48] sm:$0xff]
        %v3197 = vld [vmem:[%s3186 + $0x50] sm:$0xff]
        %v3198 = vld [vmem:[%s3186 + $0x58] sm:$0x3]
        %v3199 = vld [vmem:[%s3186 + $0x60] sm:$0xff]
        %v3200 = vld [vmem:[%s3186 + $0x68] sm:$0xff]
        %v3201 = vld [vmem:[%s3186 + $0x70] sm:$0x3]
        %v3202 = vld [vmem:[%s3186 + $0x78] sm:$0xff]
        %v3203 = vld [vmem:[%s3186 + $0x80] sm:$0xff]
        %v3204 = vld [vmem:[%s3186 + $0x88] sm:$0x3]
        %v3205 = vld [vmem:[%s3186 + $0x90] sm:$0xff]
        %v3206 = vld [vmem:[%s3186 + $0x98] sm:$0xff]
        %v3207 = vld [vmem:[%s3186 + $0xa0] sm:$0x3]
        %v3208 = vld [vmem:[%s3186 + $0xa8] sm:$0xff]
        %v3209 = vld [vmem:[%s3186 + $0xb0] sm:$0xff]
        %v3210 = vld [vmem:[%s3186 + $0xb8] sm:$0x3]
        %v3235 = vrot.slane %v3187, 1
        %v3236 = vrot.slane %v3188, 1
        %v3237 = vsel %vm382, %v3235, %v3236
        %v3238 = vrot.slane %v3189, 1
        %v3239 = vsel %vm382, %v3236, %v3238
        %v3240 = vrot.slane %v3190, 1
        %v3241 = vrot.slane %v3191, 1
        %v3242 = vsel %vm382, %v3240, %v3241
        %v3243 = vrot.slane %v3192, 1
        %v3244 = vsel %vm382, %v3241, %v3243
        %v3245 = vrot.slane %v3193, 1
        %v3246 = vrot.slane %v3194, 1
        %v3247 = vsel %vm382, %v3245, %v3246
        %v3248 = vrot.slane %v3195, 1
        %v3249 = vsel %vm382, %v3246, %v3248
        %v3250 = vrot.slane %v3196, 1
        %v3251 = vrot.slane %v3197, 1
        %v3252 = vsel %vm382, %v3250, %v3251
        %v3253 = vrot.slane %v3198, 1
        %v3254 = vsel %vm382, %v3251, %v3253
        %v3255 = vrot.slane %v3199, 1
        %v3256 = vrot.slane %v3200, 1
        %v3257 = vsel %vm382, %v3255, %v3256
        %v3258 = vrot.slane %v3201, 1
        %v3259 = vsel %vm382, %v3256, %v3258
        %v3260 = vrot.slane %v3202, 1
        %v3261 = vrot.slane %v3203, 1
        %v3262 = vsel %vm382, %v3260, %v3261
        %v3263 = vrot.slane %v3204, 1
        %v3264 = vsel %vm382, %v3261, %v3263
        %v3265 = vrot.slane %v3205, 1
        %v3266 = vrot.slane %v3206, 1
        %v3267 = vsel %vm382, %v3265, %v3266
        %v3268 = vrot.slane %v3207, 1
        %v3269 = vsel %vm382, %v3266, %v3268
        %v3270 = vrot.slane %v3208, 1
        %v3271 = vrot.slane %v3209, 1
        %v3272 = vsel %vm382, %v3270, %v3271
        %v3273 = vrot.slane %v3210, 1
        %v3274 = vsel %vm382, %v3271, %v3273
        %v3291 = vrot.slane %v3187, 2
        %v3292 = vrot.slane %v3188, 2
        %v3293 = vsel %vm453, %v3291, %v3292
        %v3294 = vrot.slane %v3189, 2
        %v3295 = vsel %vm453, %v3292, %v3294
        %v3296 = vrot.slane %v3190, 2
        %v3297 = vrot.slane %v3191, 2
        %v3298 = vsel %vm453, %v3296, %v3297
        %v3299 = vrot.slane %v3192, 2
        %v3300 = vsel %vm453, %v3297, %v3299
        %v3301 = vrot.slane %v3193, 2
        %v3302 = vrot.slane %v3194, 2
        %v3303 = vsel %vm453, %v3301, %v3302
        %v3304 = vrot.slane %v3195, 2
        %v3305 = vsel %vm453, %v3302, %v3304
        %v3306 = vrot.slane %v3196, 2
        %v3307 = vrot.slane %v3197, 2
        %v3308 = vsel %vm453, %v3306, %v3307
        %v3309 = vrot.slane %v3198, 2
        %v3310 = vsel %vm453, %v3307, %v3309
        %v3311 = vrot.slane %v3199, 2
        %v3312 = vrot.slane %v3200, 2
        %v3313 = vsel %vm453, %v3311, %v3312
        %v3314 = vrot.slane %v3201, 2
        %v3315 = vsel %vm453, %v3312, %v3314
        %v3316 = vrot.slane %v3202, 2
        %v3317 = vrot.slane %v3203, 2
        %v3318 = vsel %vm453, %v3316, %v3317
        %v3319 = vrot.slane %v3204, 2
        %v3320 = vsel %vm453, %v3317, %v3319
        %v3321 = vrot.slane %v3205, 2
        %v3322 = vrot.slane %v3206, 2
        %v3323 = vsel %vm453, %v3321, %v3322
        %v3324 = vrot.slane %v3207, 2
        %v3325 = vsel %vm453, %v3322, %v3324
        %v3326 = vrot.slane %v3208, 2
        %v3327 = vrot.slane %v3209, 2
        %v3328 = vsel %vm453, %v3326, %v3327
        %v3329 = vrot.slane %v3210, 2
        %v3330 = vsel %vm453, %v3327, %v3329
        %s3347 = scalar_lea.vmem [#allocation3], 768
        %v3348 = vld [vmem:[%s3347] sm:$0xff]
        %v3349 = vld [vmem:[%s3347 + $0x8] sm:$0xff]
        %v3350 = vld [vmem:[%s3347 + $0x10] sm:$0xff]
        %v3351 = vld [vmem:[%s3347 + $0x18] sm:$0xff]
        %v3352 = vld [vmem:[%s3347 + $0x20] sm:$0xff]
        %v3353 = vld [vmem:[%s3347 + $0x28] sm:$0xff]
        %v3354 = vld [vmem:[%s3347 + $0x30] sm:$0xff]
        %v3355 = vld [vmem:[%s3347 + $0x38] sm:$0xff]
        %v3356 = vld [vmem:[%s3347 + $0x40] sm:$0xff]
        %v3357 = vld [vmem:[%s3347 + $0x48] sm:$0xff]
        %v3358 = vld [vmem:[%s3347 + $0x50] sm:$0xff]
        %v3359 = vld [vmem:[%s3347 + $0x58] sm:$0xff]
        %v3360 = vld [vmem:[%s3347 + $0x60] sm:$0xff]
        %v3361 = vld [vmem:[%s3347 + $0x68] sm:$0xff]
        %v3362 = vld [vmem:[%s3347 + $0x70] sm:$0xff]
        %v3363 = vld [vmem:[%s3347 + $0x78] sm:$0xff]
        %v3364 = vld [vmem:[%s3347 + $0x80] sm:$0xff]
        %v3365 = vld [vmem:[%s3347 + $0x88] sm:$0xff]
        %v3366 = vld [vmem:[%s3347 + $0x90] sm:$0xff]
        %v3367 = vld [vmem:[%s3347 + $0x98] sm:$0xff]
        %v3368 = vld [vmem:[%s3347 + $0xa0] sm:$0xff]
        %v3369 = vld [vmem:[%s3347 + $0xa8] sm:$0xff]
        %v3370 = vld [vmem:[%s3347 + $0xb0] sm:$0xff]
        %v3371 = vld [vmem:[%s3347 + $0xb8] sm:$0xff]
        %v3372 = vld [vmem:[%s3347 + $0xc0] sm:$0xff]
        %v3373 = vld [vmem:[%s3347 + $0xc8] sm:$0xff]
        %v3374 = vld [vmem:[%s3347 + $0xd0] sm:$0xff]
        %v3375 = vld [vmem:[%s3347 + $0xd8] sm:$0xff]
        %v3376 = vld [vmem:[%s3347 + $0xe0] sm:$0xff]
        %v3377 = vld [vmem:[%s3347 + $0xe8] sm:$0xff]
        %v3378 = vld [vmem:[%s3347 + $0xf0] sm:$0xff]
        %v3379 = vld [vmem:[%s3347 + $0xf8] sm:$0xff]
        %v3380 = vld [vmem:[%s3347 + $0x100] sm:$0xff]
        %v3381 = vld [vmem:[%s3347 + $0x108] sm:$0xff]
        %v3382 = vld [vmem:[%s3347 + $0x110] sm:$0xff]
        %v3383 = vld [vmem:[%s3347 + $0x118] sm:$0xff]
        %v3384 = vld [vmem:[%s3347 + $0x120] sm:$0xff]
        %v3385 = vld [vmem:[%s3347 + $0x128] sm:$0xff]
        %v3386 = vld [vmem:[%s3347 + $0x130] sm:$0xff]
        %v3387 = vld [vmem:[%s3347 + $0x138] sm:$0xff]
        %v3388 = vld [vmem:[%s3347 + $0x140] sm:$0xff]
        %v3389 = vld [vmem:[%s3347 + $0x148] sm:$0xff]
        %v3390 = vld [vmem:[%s3347 + $0x150] sm:$0xff]
        %v3391 = vld [vmem:[%s3347 + $0x158] sm:$0xff]
        %v3392 = vld [vmem:[%s3347 + $0x160] sm:$0xff]
        %v3393 = vld [vmem:[%s3347 + $0x168] sm:$0xff]
        %v3394 = vld [vmem:[%s3347 + $0x170] sm:$0xff]
        %v3395 = vld [vmem:[%s3347 + $0x178] sm:$0xff]
        %3396 = vmatprep.subr.mxu0 0.0
        %3397 = vmatpush1.msra.mxu0 %v3348
        %3398 = vmatprep.subr.mxu0 0.0
        %3399 = vmatpush1.msra.mxu0 %v3349
        %3400 = vmatprep.subr.mxu0 0.0
        %3401 = vmatpush1.msra.mxu0 %v3350
        %3402 = vmatprep.subr.mxu0 0.0
        %3403 = vmatpush1.msra.mxu0 %v3351
        %3404 = vmatprep.subr.mxu0 0.0
        %3405 = vmatpush1.msra.mxu0 %v3352
        %3406 = vmatprep.subr.mxu0 0.0
        %3407 = vmatpush1.msra.mxu0 %v3353
        %3408 = vmatprep.subr.mxu0 0.0
        %3409 = vmatpush1.msra.mxu0 %v3354
        %3410 = vmatprep.subr.mxu0 0.0
        %3411 = vmatpush1.msra.mxu0 %v3355
        %3412 = vmatprep.subr.mxu0 0.0
        %3413 = vmatpush1.msra.mxu0 %v3356
        %3414 = vmatprep.subr.mxu0 0.0
        %3415 = vmatpush1.msra.mxu0 %v3357
        %3416 = vmatprep.subr.mxu0 0.0
        %3417 = vmatpush1.msra.mxu0 %v3358
        %3418 = vmatprep.subr.mxu0 0.0
        %3419 = vmatpush1.msra.mxu0 %v3359
        %3420 = vmatprep.subr.mxu0 0.0
        %3421 = vmatpush1.msra.mxu0 %v3360
        %3422 = vmatprep.subr.mxu0 0.0
        %3423 = vmatpush1.msra.mxu0 %v3361
        %3424 = vmatprep.subr.mxu0 0.0
        %3425 = vmatpush1.msra.mxu0 %v3362
        %3426 = vmatprep.subr.mxu0 0.0
        %3427 = vmatpush1.msra.mxu0 %v3363
        %3428 = vmatprep.subr.mxu0 0.0
        %3429 = vmatpush1.msra.mxu0 %v3364
        %3430 = vmatprep.subr.mxu0 0.0
        %3431 = vmatpush1.msra.mxu0 %v3365
        %3432 = vmatprep.subr.mxu0 0.0
        %3433 = vmatpush1.msra.mxu0 %v3366
        %3434 = vmatprep.subr.mxu0 0.0
        %3435 = vmatpush1.msra.mxu0 %v3367
        %3436 = vmatprep.subr.mxu0 0.0
        %3437 = vmatpush1.msra.mxu0 %v3368
        %3438 = vmatprep.subr.mxu0 0.0
        %3439 = vmatpush1.msra.mxu0 %v3369
        %3440 = vmatprep.subr.mxu0 0.0
        %3441 = vmatpush1.msra.mxu0 %v3370
        %3442 = vmatprep.subr.mxu0 0.0
        %3443 = vmatpush1.msra.mxu0 %v3371
        %3444 = vmatprep.subr.mxu0 0.0
        %3445 = vmatpush1.msra.mxu0 %v3372
        %3446 = vmatprep.subr.mxu0 0.0
        %3447 = vmatpush1.msra.mxu0 %v3373
        %3448 = vmatprep.subr.mxu0 0.0
        %3449 = vmatpush1.msra.mxu0 %v3374
        %3450 = vmatprep.subr.mxu0 0.0
        %3451 = vmatpush1.msra.mxu0 %v3375
        %3452 = vmatprep.subr.mxu0 0.0
        %3453 = vmatpush1.msra.mxu0 %v3376
        %3454 = vmatprep.subr.mxu0 0.0
        %3455 = vmatpush1.msra.mxu0 %v3377
        %3456 = vmatprep.subr.mxu0 0.0
        %3457 = vmatpush1.msra.mxu0 %v3378
        %3458 = vmatprep.subr.mxu0 0.0
        %3459 = vmatpush1.msra.mxu0 %v3379
        %3460 = vmatprep.mubr.f32.mxu0 %v3237
        %3461 = vmatmul.mubr.f32.gmra.mrb[0].mxu0 %v3187
        %v3462 = vpop.f32.mrb[0].mxu0
        %v3463 = vadd.f32 0.0, %v3462
        %v3464 = vpop.f32.mrb[0].mxu0
        %3465 = vmatprep.mubr.f32.mxu0 %v3239
        %3466 = vmatmul.mubr.f32.gmra.mrb[0].mxu0 %v3188
        %v3467 = vpop.f32.mrb[0].mxu0
        %v3468 = vadd.f32 0.0, %v3467
        %v3469 = vpop.f32.mrb[0].mxu0
        %3470 = vmatprep.mubr.f32.mxu0 %v3242
        %3471 = vmatmul.mubr.f32.gmra.mrb[0].mxu0 %v3190
        %v3472 = vpop.f32.mrb[0].mxu0
        %v3473 = vadd.f32 0.0, %v3472
        %v3474 = vpop.f32.mrb[0].mxu0
        %3475 = vmatprep.mubr.f32.mxu0 %v3244
        %3476 = vmatmul.mubr.f32.gmra.mrb[0].mxu0 %v3191
        %v3477 = vpop.f32.mrb[0].mxu0
        %v3478 = vadd.f32 0.0, %v3477
        %v3479 = vpop.f32.mrb[0].mxu0
        %3480 = vmatprep.mubr.f32.mxu0 %v3247
        %3481 = vmatmul.mubr.f32.gmra.mrb[0].mxu0 %v3193
        %v3482 = vpop.f32.mrb[0].mxu0
        %v3483 = vadd.f32 0.0, %v3482
        %v3484 = vpop.f32.mrb[0].mxu0
        %3485 = vmatprep.mubr.f32.mxu0 %v3249
        %3486 = vmatmul.mubr.f32.gmra.mrb[0].mxu0 %v3194
        %v3487 = vpop.f32.mrb[0].mxu0
        %v3488 = vadd.f32 0.0, %v3487
        %v3489 = vpop.f32.mrb[0].mxu0
        %3490 = vmatprep.mubr.f32.mxu0 %v3252
        %3491 = vmatmul.mubr.f32.gmra.mrb[0].mxu0 %v3196
        %v3492 = vpop.f32.mrb[0].mxu0
        %v3493 = vadd.f32 0.0, %v3492
        %v3494 = vpop.f32.mrb[0].mxu0
        %3495 = vmatprep.mubr.f32.mxu0 %v3254
        %3496 = vmatmul.mubr.f32.gmra.mrb[0].mxu0 %v3197
        %v3497 = vpop.f32.mrb[0].mxu0
        %v3498 = vadd.f32 0.0, %v3497
        %v3499 = vpop.f32.mrb[0].mxu0
        %3500 = vmatprep.mubr.f32.mxu0 %v3257
        %3501 = vmatmul.mubr.f32.gmra.mrb[0].mxu0 %v3199
        %v3502 = vpop.f32.mrb[0].mxu0
        %v3503 = vadd.f32 0.0, %v3502
        %v3504 = vpop.f32.mrb[0].mxu0
        %3505 = vmatprep.mubr.f32.mxu0 %v3259
        %3506 = vmatmul.mubr.f32.gmra.mrb[0].mxu0 %v3200
        %v3507 = vpop.f32.mrb[0].mxu0
        %v3508 = vadd.f32 0.0, %v3507
        %v3509 = vpop.f32.mrb[0].mxu0
        %3510 = vmatprep.mubr.f32.mxu0 %v3262
        %3511 = vmatmul.mubr.f32.gmra.mrb[0].mxu0 %v3202
        %v3512 = vpop.f32.mrb[0].mxu0
        %v3513 = vadd.f32 0.0, %v3512
        %v3514 = vpop.f32.mrb[0].mxu0
        %3515 = vmatprep.mubr.f32.mxu0 %v3264
        %3516 = vmatmul.mubr.f32.gmra.mrb[0].mxu0 %v3203
        %v3517 = vpop.f32.mrb[0].mxu0
        %v3518 = vadd.f32 0.0, %v3517
        %v3519 = vpop.f32.mrb[0].mxu0
        %3520 = vmatprep.mubr.f32.mxu0 %v3267
        %3521 = vmatmul.mubr.f32.gmra.mrb[0].mxu0 %v3205
        %v3522 = vpop.f32.mrb[0].mxu0
        %v3523 = vadd.f32 0.0, %v3522
        %v3524 = vpop.f32.mrb[0].mxu0
        %3525 = vmatprep.mubr.f32.mxu0 %v3269
        %3526 = vmatmul.mubr.f32.gmra.mrb[0].mxu0 %v3206
        %v3527 = vpop.f32.mrb[0].mxu0
        %v3528 = vadd.f32 0.0, %v3527
        %v3529 = vpop.f32.mrb[0].mxu0
        %3530 = vmatprep.mubr.f32.mxu0 %v3272
        %3531 = vmatmul.mubr.f32.gmra.mrb[0].mxu0 %v3208
        %v3532 = vpop.f32.mrb[0].mxu0
        %v3533 = vadd.f32 0.0, %v3532
        %v3534 = vpop.f32.mrb[0].mxu0
        %3535 = vmatprep.mubr.f32.mxu0 %v3274
        %3536 = vmatmul.mubr.f32.gmra.mrb[0].mxu0 %v3209
        %v3537 = vpop.f32.mrb[0].mxu0
        %v3538 = vadd.f32 0.0, %v3537
        %v3539 = vpop.f32.mrb[0].mxu0
        %3540 = vdwg.mxu0
        %3541 = vmatprep.subr.mxu0 0.0
        %3542 = vmatpush1.msra.mxu0 %v3380
        %3543 = vmatprep.subr.mxu0 0.0
        %3544 = vmatpush1.msra.mxu0 %v3381
        %3545 = vmatprep.subr.mxu0 0.0
        %3546 = vmatpush1.msra.mxu0 %v3382
        %3547 = vmatprep.subr.mxu0 0.0
        %3548 = vmatpush1.msra.mxu0 %v3383
        %3549 = vmatprep.subr.mxu0 0.0
        %3550 = vmatpush1.msra.mxu0 %v3384
        %3551 = vmatprep.subr.mxu0 0.0
        %3552 = vmatpush1.msra.mxu0 %v3385
        %3553 = vmatprep.subr.mxu0 0.0
        %3554 = vmatpush1.msra.mxu0 %v3386
        %3555 = vmatprep.subr.mxu0 0.0
        %3556 = vmatpush1.msra.mxu0 %v3387
        %3557 = vmatprep.subr.mxu0 0.0
        %3558 = vmatpush1.msra.mxu0 %v3388
        %3559 = vmatprep.subr.mxu0 0.0
        %3560 = vmatpush1.msra.mxu0 %v3389
        %3561 = vmatprep.subr.mxu0 0.0
        %3562 = vmatpush1.msra.mxu0 %v3390
        %3563 = vmatprep.subr.mxu0 0.0
        %3564 = vmatpush1.msra.mxu0 %v3391
        %3565 = vmatprep.subr.mxu0 0.0
        %3566 = vmatpush1.msra.mxu0 %v3392
        %3567 = vmatprep.subr.mxu0 0.0
        %3568 = vmatpush1.msra.mxu0 %v3393
        %3569 = vmatprep.subr.mxu0 0.0
        %3570 = vmatpush1.msra.mxu0 %v3394
        %3571 = vmatprep.subr.mxu0 0.0
        %3572 = vmatpush1.msra.mxu0 %v3395
        %3573 = vmatprep.subr.mxu0 0.0
        %3574 = vmatpush1.msra.mxu0 0.0
        %3575 = vmatprep.subr.mxu0 0.0
        %3576 = vmatpush1.msra.mxu0 0.0
        %3577 = vmatprep.subr.mxu0 0.0
        %3578 = vmatpush1.msra.mxu0 0.0
        %3579 = vmatprep.subr.mxu0 0.0
        %3580 = vmatpush1.msra.mxu0 0.0
        %3581 = vmatprep.subr.mxu0 0.0
        %3582 = vmatpush1.msra.mxu0 0.0
        %3583 = vmatprep.subr.mxu0 0.0
        %3584 = vmatpush1.msra.mxu0 0.0
        %3585 = vmatprep.subr.mxu0 0.0
        %3586 = vmatpush1.msra.mxu0 0.0
        %3587 = vmatprep.subr.mxu0 0.0
        %3588 = vmatpush1.msra.mxu0 0.0
        %3589 = vmatprep.subr.mxu0 0.0
        %3590 = vmatpush1.msra.mxu0 0.0
        %3591 = vmatprep.subr.mxu0 0.0
        %3592 = vmatpush1.msra.mxu0 0.0
        %3593 = vmatprep.subr.mxu0 0.0
        %3594 = vmatpush1.msra.mxu0 0.0
        %3595 = vmatprep.subr.mxu0 0.0
        %3596 = vmatpush1.msra.mxu0 0.0
        %3597 = vmatprep.subr.mxu0 0.0
        %3598 = vmatpush1.msra.mxu0 0.0
        %3599 = vmatprep.subr.mxu0 0.0
        %3600 = vmatpush1.msra.mxu0 0.0
        %3601 = vmatprep.subr.mxu0 0.0
        %3602 = vmatpush1.msra.mxu0 0.0
        %3603 = vmatprep.subr.mxu0 0.0
        %3604 = vmatpush1.msra.mxu0 0.0
        %3605 = vmatprep.mubr.f32.mxu0 0.0
        %3606 = vmatmul.mubr.f32.gmra.mrb[0].mxu0 %v3293
        %v3607 = vpop.f32.mrb[0].mxu0
        %v3608 = vadd.f32 %v3463, %v3607
        %v3609 = vpop.f32.mrb[0].mxu0
        %3610 = vmatprep.mubr.f32.mxu0 0.0
        %3611 = vmatmul.mubr.f32.gmra.mrb[0].mxu0 %v3295
        %v3612 = vpop.f32.mrb[0].mxu0
        %v3613 = vadd.f32 %v3468, %v3612
        %v3614 = vpop.f32.mrb[0].mxu0
        %3615 = vmatprep.mubr.f32.mxu0 0.0
        %3616 = vmatmul.mubr.f32.gmra.mrb[0].mxu0 %v3298
        %v3617 = vpop.f32.mrb[0].mxu0
        %v3618 = vadd.f32 %v3473, %v3617
        %v3619 = vpop.f32.mrb[0].mxu0
        %3620 = vmatprep.mubr.f32.mxu0 0.0
        %3621 = vmatmul.mubr.f32.gmra.mrb[0].mxu0 %v3300
        %v3622 = vpop.f32.mrb[0].mxu0
        %v3623 = vadd.f32 %v3478, %v3622
        %v3624 = vpop.f32.mrb[0].mxu0
        %3625 = vmatprep.mubr.f32.mxu0 0.0
        %3626 = vmatmul.mubr.f32.gmra.mrb[0].mxu0 %v3303
        %v3627 = vpop.f32.mrb[0].mxu0
        %v3628 = vadd.f32 %v3483, %v3627
        %v3629 = vpop.f32.mrb[0].mxu0
        %3630 = vmatprep.mubr.f32.mxu0 0.0
        %3631 = vmatmul.mubr.f32.gmra.mrb[0].mxu0 %v3305
        %v3632 = vpop.f32.mrb[0].mxu0
        %v3633 = vadd.f32 %v3488, %v3632
        %v3634 = vpop.f32.mrb[0].mxu0
        %3635 = vmatprep.mubr.f32.mxu0 0.0
        %3636 = vmatmul.mubr.f32.gmra.mrb[0].mxu0 %v3308
        %v3637 = vpop.f32.mrb[0].mxu0
        %v3638 = vadd.f32 %v3493, %v3637
        %v3639 = vpop.f32.mrb[0].mxu0
        %3640 = vmatprep.mubr.f32.mxu0 0.0
        %3641 = vmatmul.mubr.f32.gmra.mrb[0].mxu0 %v3310
        %v3642 = vpop.f32.mrb[0].mxu0
        %v3643 = vadd.f32 %v3498, %v3642
        %v3644 = vpop.f32.mrb[0].mxu0
        %3645 = vmatprep.mubr.f32.mxu0 0.0
        %3646 = vmatmul.mubr.f32.gmra.mrb[0].mxu0 %v3313
        %v3647 = vpop.f32.mrb[0].mxu0
        %v3648 = vadd.f32 %v3503, %v3647
        %v3649 = vpop.f32.mrb[0].mxu0
        %3650 = vmatprep.mubr.f32.mxu0 0.0
        %3651 = vmatmul.mubr.f32.gmra.mrb[0].mxu0 %v3315
        %v3652 = vpop.f32.mrb[0].mxu0
        %v3653 = vadd.f32 %v3508, %v3652
        %v3654 = vpop.f32.mrb[0].mxu0
        %3655 = vmatprep.mubr.f32.mxu0 0.0
        %3656 = vmatmul.mubr.f32.gmra.mrb[0].mxu0 %v3318
        %v3657 = vpop.f32.mrb[0].mxu0
        %v3658 = vadd.f32 %v3513, %v3657
        %v3659 = vpop.f32.mrb[0].mxu0
        %3660 = vmatprep.mubr.f32.mxu0 0.0
        %3661 = vmatmul.mubr.f32.gmra.mrb[0].mxu0 %v3320
        %v3662 = vpop.f32.mrb[0].mxu0
        %v3663 = vadd.f32 %v3518, %v3662
        %v3664 = vpop.f32.mrb[0].mxu0
        %3665 = vmatprep.mubr.f32.mxu0 0.0
        %3666 = vmatmul.mubr.f32.gmra.mrb[0].mxu0 %v3323
        %v3667 = vpop.f32.mrb[0].mxu0
        %v3668 = vadd.f32 %v3523, %v3667
        %v3669 = vpop.f32.mrb[0].mxu0
        %3670 = vmatprep.mubr.f32.mxu0 0.0
        %3671 = vmatmul.mubr.f32.gmra.mrb[0].mxu0 %v3325
        %v3672 = vpop.f32.mrb[0].mxu0
        %v3673 = vadd.f32 %v3528, %v3672
        %v3674 = vpop.f32.mrb[0].mxu0
        %3675 = vmatprep.mubr.f32.mxu0 0.0
        %3676 = vmatmul.mubr.f32.gmra.mrb[0].mxu0 %v3328
        %v3677 = vpop.f32.mrb[0].mxu0
        %v3678 = vadd.f32 %v3533, %v3677
        %v3679 = vpop.f32.mrb[0].mxu0
        %3680 = vmatprep.mubr.f32.mxu0 0.0
        %3681 = vmatmul.mubr.f32.gmra.mrb[0].mxu0 %v3330
        %v3682 = vpop.f32.mrb[0].mxu0
        %v3683 = vadd.f32 %v3538, %v3682
        %v3684 = vpop.f32.mrb[0].mxu0
        %3685 = vdwg.mxu0
        %v3686 = vadd.f32 %v3108, %v3608
        %v3687 = vadd.f32 %v3113, %v3613
        %v3688 = vadd.f32 %v3118, %v3618
        %v3689 = vadd.f32 %v3123, %v3623
        %v3690 = vadd.f32 %v3128, %v3628
        %v3691 = vadd.f32 %v3133, %v3633
        %v3692 = vadd.f32 %v3138, %v3638
        %v3693 = vadd.f32 %v3143, %v3643
        %v3694 = vadd.f32 %v3148, %v3648
        %v3695 = vadd.f32 %v3153, %v3653
        %v3696 = vadd.f32 %v3158, %v3658
        %v3697 = vadd.f32 %v3163, %v3663
        %v3698 = vadd.f32 %v3168, %v3668
        %v3699 = vadd.f32 %v3173, %v3673
        %v3700 = vadd.f32 %v3178, %v3678
        %v3701 = vadd.f32 %v3183, %v3683
        %v3702 = vld [vmem:[%s5] sm:$0x1]
        %v3704 = vlaneseq
        %v3705 = vshrl.u32 %v3704, 7
        %v3706 = vsub.s32 0, %v3705
        %v3707 = vrot.slane %v3702, %v3706
        %v3709 = vadd.f32 %v3686, %v3707
        %v3710 = vadd.f32 %v3687, %v3707
        %v3711 = vadd.f32 %v3688, %v3707
        %v3712 = vadd.f32 %v3689, %v3707
        %v3713 = vadd.f32 %v3690, %v3707
        %v3714 = vadd.f32 %v3691, %v3707
        %v3715 = vadd.f32 %v3692, %v3707
        %v3716 = vadd.f32 %v3693, %v3707
        %v3717 = vadd.f32 %v3694, %v3707
        %v3718 = vadd.f32 %v3695, %v3707
        %v3719 = vadd.f32 %v3696, %v3707
        %v3720 = vadd.f32 %v3697, %v3707
        %v3721 = vadd.f32 %v3698, %v3707
        %v3722 = vadd.f32 %v3699, %v3707
        %v3723 = vadd.f32 %v3700, %v3707
        %v3724 = vadd.f32 %v3701, %v3707
        %v3725 = vmax.f32 %v3709, 0.0
        %v3726 = vmax.f32 %v3710, 0.0
        %v3727 = vmax.f32 %v3711, 0.0
        %v3728 = vmax.f32 %v3712, 0.0
        %v3729 = vmax.f32 %v3713, 0.0
        %v3730 = vmax.f32 %v3714, 0.0
        %v3731 = vmax.f32 %v3715, 0.0
        %v3732 = vmax.f32 %v3716, 0.0
        %v3733 = vmax.f32 %v3717, 0.0
        %v3734 = vmax.f32 %v3718, 0.0
        %v3735 = vmax.f32 %v3719, 0.0
        %v3736 = vmax.f32 %v3720, 0.0
        %v3737 = vmax.f32 %v3721, 0.0
        %v3738 = vmax.f32 %v3722, 0.0
        %v3739 = vmax.f32 %v3723, 0.0
        %v3740 = vmax.f32 %v3724, 0.0
        %v3741 = vld [vmem:[%s316] sm:$0xff]
        %v3742 = vld [vmem:[%s316 + $0x8] sm:$0xff]
        %v3743 = vld [vmem:[%s316 + $0x10] sm:$0xff]
        %v3744 = vld [vmem:[%s316 + $0x18] sm:$0xff]
        %v3745 = vld [vmem:[%s316 + $0x20] sm:$0xff]
        %v3746 = vld [vmem:[%s316 + $0x28] sm:$0xff]
        %v3747 = vld [vmem:[%s316 + $0x30] sm:$0xff]
        %v3748 = vld [vmem:[%s316 + $0x38] sm:$0xff]
        %v3749 = vld [vmem:[%s316 + $0x40] sm:$0xff]
        %v3750 = vld [vmem:[%s316 + $0x48] sm:$0xff]
        %v3751 = vld [vmem:[%s316 + $0x50] sm:$0xff]
        %v3752 = vld [vmem:[%s316 + $0x58] sm:$0xff]
        %v3753 = vld [vmem:[%s316 + $0x60] sm:$0xff]
        %v3754 = vld [vmem:[%s316 + $0x68] sm:$0xff]
        %v3755 = vld [vmem:[%s316 + $0x70] sm:$0xff]
        %v3756 = vld [vmem:[%s316 + $0x78] sm:$0xff]
        %v3757 = vadd.f32 %v3725, %v3741
        %v3758 = vadd.f32 %v3726, %v3742
        %v3759 = vadd.f32 %v3727, %v3743
        %v3760 = vadd.f32 %v3728, %v3744
        %v3761 = vadd.f32 %v3729, %v3745
        %v3762 = vadd.f32 %v3730, %v3746
        %v3763 = vadd.f32 %v3731, %v3747
        %v3764 = vadd.f32 %v3732, %v3748
        %v3765 = vadd.f32 %v3733, %v3749
        %v3766 = vadd.f32 %v3734, %v3750
        %v3767 = vadd.f32 %v3735, %v3751
        %v3768 = vadd.f32 %v3736, %v3752
        %v3769 = vadd.f32 %v3737, %v3753
        %v3770 = vadd.f32 %v3738, %v3754
        %v3771 = vadd.f32 %v3739, %v3755
        %v3772 = vadd.f32 %v3740, %v3756
        %3773 = vst [vmem:[%s301] sm:$0xff] %v3757
        %3774 = vst [vmem:[%s301 + $0x8] sm:$0xff] %v3758
        %3775 = vst [vmem:[%s301 + $0x10] sm:$0xff] %v3759
        %3776 = vst [vmem:[%s301 + $0x18] sm:$0xff] %v3760
        %3777 = vst [vmem:[%s301 + $0x20] sm:$0xff] %v3761
        %3778 = vst [vmem:[%s301 + $0x28] sm:$0xff] %v3762
        %3779 = vst [vmem:[%s301 + $0x30] sm:$0xff] %v3763
        %3780 = vst [vmem:[%s301 + $0x38] sm:$0xff] %v3764
        %3781 = vst [vmem:[%s301 + $0x40] sm:$0xff] %v3765
        %3782 = vst [vmem:[%s301 + $0x48] sm:$0xff] %v3766
        %3783 = vst [vmem:[%s301 + $0x50] sm:$0xff] %v3767
        %3784 = vst [vmem:[%s301 + $0x58] sm:$0xff] %v3768
        %3785 = vst [vmem:[%s301 + $0x60] sm:$0xff] %v3769
        %3786 = vst [vmem:[%s301 + $0x68] sm:$0xff] %v3770
        %3787 = vst [vmem:[%s301 + $0x70] sm:$0xff] %v3771
        %3788 = vst [vmem:[%s301 + $0x78] sm:$0xff] %v3772
        %s3789 = sand.u32 %s181, 1
        %s3790 = scalar_lea.sflag [#allocation5], %s3789
        %s3791 = sand.u32 %s181, 1
        %s3792 = smul.addr %s3791, 128
        %s3793 = scalar_lea.vmem [#allocation6], %s3792
        // Predicated region
        $region57: #{tpu_custom_call.1} parent=43 // pred_check
          %p3794 = pneg %p191
        $region58: #{tpu_custom_call.1} parent=43 // pred_check_branch
          %3796 = sbr.rel (%p3794) target = $region60
        $region59: #{tpu_custom_call.1} parent=43 // pred_region
          %s3797 = smul.u32 8, %s26
          %s3799 = ssub.s32 2048, 2048
          %3800 = vsyncadd %s3790, %s3799
          %s3801 = smul.addr %s3797, 2
          %s3802 = smul.addr %s25, 32
          %s3803 = sadd.s32 %s3801, %s3802
          %s3804 = smul.addr %s3803, 128
          %s3805 = scalar_lea.hbm %s6, %s3804
          %s3806 = sshll.u32 %s3793, 4
          %s3807 = int_to_ptr.vmem [resolvable:$true] %s3806
          %3812 = dma.vmem_to_hbm [thread:$0]  %s3807, 2048, %s3805, %s3790, 128, 128, 8
        $region60: #{tpu_custom_call.1} parent=43 // pred_fallthru
          _
      $region44: #{tpu_custom_call.1} parent=5 // pred_fallthru
        _
      %p3813 = scmp.le.s32.totalorder 2, %s16
      // Predicated region
      $region61: #{tpu_custom_call.1} parent=5 // pred_check
        %p3814 = pneg %p3813
      $region62: #{tpu_custom_call.1} parent=5 // pred_check_branch
        %3816 = sbr.rel (%p3814) target = $region64
      $region63: #{tpu_custom_call.1} parent=5 // pred_region
        %s3817 = ssub.s32 %s16, 2
        // Predicated region
        $region65: #{tpu_custom_call.1} parent=63 // pred_check
          %p3818 = pneg %p197
        $region66: #{tpu_custom_call.1} parent=63 // pred_check_branch
          %3820 = sbr.rel (%p3818) target = $region68
        $region67: #{tpu_custom_call.1} parent=63 // pred_region
          %s3821 = sand.u32 %s182, 1
          %s3822 = scalar_lea.sflag [#allocation5], %s3821
          %s3823 = sand.u32 %s182, 1
          %s3824 = smul.addr %s3823, 128
          %s3825 = scalar_lea.vmem [#allocation6], %s3824
          %3826 = dma.done %s3822, 2048
        $region68: #{tpu_custom_call.1} parent=63 // pred_fallthru
          _
      $region64: #{tpu_custom_call.1} parent=5 // pred_fallthru
        _
    $region6: #{tpu_custom_call.1} parent=1 // loop_footer
      %s20 = sadd.s32 1, %s16
    $region7: #{tpu_custom_call.1} parent=1 // loop_footer_branch
      %15 = sbr.rel target = $region3
    $region8: #{tpu_custom_call.1} parent=1 // loop_exit
      _
    %3827 = vsyncpa [#allocation4], 1
    %s3828 = scalar_lea.sflag [#allocation4], 1
    %3829 = vsyncpa %s3828, 1
    %3830 = vsyncpa [#allocation5], 1
    %s3831 = scalar_lea.sflag [#allocation5], 1
    %3832 = vsyncpa %s3831, 1

</llo_original>
